<compile_context>
chip_gen: v7x
topology: tpu7x:2x2x1
jax: 0.10.0
libtpu: 0.0.40
codegen_flags: <defaults>
</compile_context>

<pallas_src>
import math

import jax
import jax.numpy as jnp
import numpy as np
from jax.experimental import pallas as pl
from jax.experimental.pallas import tpu as pltpu

MXU_DTYPE = jnp.bfloat16      # MXU operand dtype; accumulation is always f32


# ----------------------------------------------------------------------------- kernel helpers
def _conv3_rows(x, a_ref, b_ref):
    """3x3 'SAME' conv of one image in row layout, as 3 accumulated MXU dots.

    x     : (H, W*Cin)            f32 activations
    a_ref : (3, W*Cin, W*Cout)    bf16 banded weights, one matrix per vertical tap ky
    b_ref : (1, W*Cout)           f32 per-channel bias tiled over W
    returns (H, W*Cout) f32

    Horizontal taps, channel mixing and horizontal zero padding are folded into the
    banded matrices; the vertical taps are handled by dotting the centre row and its
    +/-1 row-shifted copies (top/bottom rows zero) against the per-ky bands and
    accumulating in f32.  No 3x-wide K-concatenation is materialised.
    """
    wc = x.shape[1]
    zero_row = jnp.zeros((1, wc), x.dtype)
    x_prev = jnp.concatenate([zero_row, x[:-1, :]], axis=0)   # row h -> x[h-1]  (ky=0)
    x_next = jnp.concatenate([x[1:, :], zero_row], axis=0)    # row h -> x[h+1]  (ky=2)
    acc = jnp.dot(x_prev.astype(MXU_DTYPE), a_ref[0],
                  preferred_element_type=jnp.float32)
    acc += jnp.dot(x.astype(MXU_DTYPE), a_ref[1],
                   preferred_element_type=jnp.float32)
    acc += jnp.dot(x_next.astype(MXU_DTYPE), a_ref[2],
                   preferred_element_type=jnp.float32)
    return acc + b_ref[...]


def _upconv_kernel(x_ref, a_ref, b_ref, o_ref):
    """Upsampler conv (3x3, C -> 4C) with PixelShuffle(2) pre-folded into the
    output column order: output row h = [shuffled row 2h | shuffled row 2h+1],
    so a free contiguous reshape in the wrapper yields the pixel-shuffled image.

    x_ref: (1, H, W*C) bf16   a_ref: (3, W*C, 4*W*C) bf16   b_ref: (1, 4*W*C) f32
    o_ref: (1, H, 4*W*C) bf16
    """
    x = x_ref[0].astype(jnp.float32)
    o_ref[0] = _conv3_rows(x, a_ref, b_ref).astype(o_ref.dtype)


def _tail_kernel(x2_ref, u_ref, wdx_ref, wdu_ref, bd_ref,
                 a1_ref, c1_ref, a2_ref, c2_ref,
                 a3_ref, c3_ref, a4_ref, c4_ref, o_ref):
    """Fused 1x1 'downshannel' + double_conv + double_conv for one image.

    torch.cat([x2, up(x1)]) is folded into the 1x1 conv by splitting its
    block-diagonal weight into an x2 half and a u half, so neither the concat nor
    the shuffled tensor is ever materialised.

    x2_ref, u_ref : (1, H2, W2*C)  bf16     wdx/wdu : (W2*C, W2*C)     bf16
    a*_ref        : (3, W2*C, W2*C) bf16    bd/c*   : (1, W2*C)        f32
    o_ref         : (1, H2, W2*C)  f32
    """
    s = jnp.dot(x2_ref[0], wdx_ref[...], preferred_element_type=jnp.float32)
    s += jnp.dot(u_ref[0], wdu_ref[...], preferred_element_type=jnp.float32)
    s += bd_ref[...]
    # double_conv #1:  s = s + conv_b(relu(conv_a(s)))
    t = jnp.maximum(_conv3_rows(s, a1_ref, c1_ref), 0.0)
    s = s + _conv3_rows(t, a2_ref, c2_ref)
    # double_conv #2
    t = jnp.maximum(_conv3_rows(s, a3_ref, c3_ref), 0.0)
    s = s + _conv3_rows(t, a4_ref, c4_ref)
    o_ref[0] = s.astype(o_ref.dtype)


# ----------------------------------------------------------------------------- weight packing (one-time)
def _banded_conv_matrix(w_hwio, width):
    """Fold a (kh, kw, Cin, Cout) conv kernel into per-ky banded matrices.

    Returns (kh, width*Cin, width*Cout) with
      A[ky, win*Cin+ci, wout*Cout+co] = w[ky, win-wout+kw//2, ci, co]  (0 outside band)
    so that sum_ky row(h+ky-1) @ A[ky] is the 'SAME'-padded conv: horizontal taps,
    channel mixing and horizontal zero padding all live in the K dimension.
    """
    kh, kw, cin, cout = w_hwio.shape
    half = kw // 2
    win = jnp.arange(width)[:, None]
    wout = jnp.arange(width)[None, :]
    dx = win - wout + half
    valid = (dx >= 0) & (dx < kw)
    taps = w_hwio[:, jnp.clip(dx, 0, kw - 1), :, :]                       # (kh, W, W, Cin, Cout)
    taps = taps * valid[None, :, :, None, None].astype(w_hwio.dtype)
    taps = taps.transpose(0, 1, 3, 2, 4)                                  # (kh, W_in, Cin, W_out, Cout)
    return taps.reshape(kh, width * cin, width * cout)


def _row_bias(b, width):
    return jnp.tile(b, (width,)).reshape(1, width * b.shape[0])


def _pixel_shuffle_cols(w, c):
    """Column permutation folding PixelShuffle(2) into the Upsampler-conv output.

    new column  i*(2*w*c) + w2*c + ch   takes   old column (w2//2)*(4*c) + ch*4 + i*2 + (w2%2)
    (torch PixelShuffle channel ordering c4 = ch*4 + i*2 + j), i.e. output row h
    becomes [shuffled row 2h | shuffled row 2h+1] in (w2, ch) lane order.
    """
    w2 = 2 * w
    i = np.arange(2)[:, None, None]
    w2i = np.arange(w2)[None, :, None]
    ch = np.arange(c)[None, None, :]
    old = (w2i // 2) * (4 * c) + ch * 4 + i * 2 + (w2i % 2)
    return old.reshape(-1)                                                # (4*w*c,)


def pack_up_params(params, width):
    """One-time packing of HWIO weights into MXU-ready banded bf16 matrices."""
    (wu, bu, wd, bd, w1a, b1a, w1b, b1b, w2a, b2a, w2b, b2b) = params
    c = wu.shape[2]
    w2 = 2 * width

    # Upsampler conv, PixelShuffle folded into the output column permutation.
    perm = _pixel_shuffle_cols(width, c)
    a_up = _banded_conv_matrix(wu, width)[:, :, perm].astype(MXU_DTYPE)   # (3, WC, 4WC)
    b_up = _row_bias(bu, width)[:, perm]                                  # (1, 4WC) f32

    # downshannel 1x1, split into x2 / u halves (channel concat folded away).
    wd_x2 = _banded_conv_matrix(wd[:, :, :c, :], w2)[0].astype(MXU_DTYPE)  # (W2C, W2C)
    wd_u = _banded_conv_matrix(wd[:, :, c:, :], w2)[0].astype(MXU_DTYPE)
    bd_r = _row_bias(bd, w2)

    a1 = _banded_conv_matrix(w1a, w2).astype(MXU_DTYPE)                   # (3, W2C, W2C)
    a2 = _banded_conv_matrix(w1b, w2).astype(MXU_DTYPE)
    a3 = _banded_conv_matrix(w2a, w2).astype(MXU_DTYPE)
    a4 = _banded_conv_matrix(w2b, w2).astype(MXU_DTYPE)
    c1, c2, c3, c4 = (_row_bias(b, w2) for b in (b1a, b1b, b2a, b2b))
    return (a_up, b_up, wd_x2, wd_u, bd_r, a1, c1, a2, c2, a3, c3, a4, c4)


# ----------------------------------------------------------------------------- forward
def up_forward(x1, x2, packed):
    """Forward of `up` (subpixel branch). x1:(N,H,W,C), x2:(N,2H,2W,C) -> (N,2H,2W,C)."""
    (a_up, b_up, wd_x2, wd_u, bd_r, a1, c1, a2, c2, a3, c3, a4, c4) = packed
    n, h, w, c = x1.shape
    h2, w2 = 2 * h, 2 * w
    wc, w2c = w * c, w2 * c

    # ---- stage 1: Upsampler conv (3x3, C -> 4C), bf16 in / bf16 out ----
    x1_row = x1.astype(MXU_DTYPE).reshape(n, h, wc)
    u_pair = pl.pallas_call(
        _upconv_kernel,
        out_shape=jax.ShapeDtypeStruct((n, h, 4 * wc), MXU_DTYPE),
        grid_spec=pltpu.PrefetchScalarGridSpec(
            num_scalar_prefetch=0,
            grid=(n,),
            in_specs=[
                pl.BlockSpec((1, h, wc), lambda i: (i, 0, 0)),
                pl.BlockSpec((3, wc, 4 * wc), lambda i: (0, 0, 0)),
                pl.BlockSpec((1, 4 * wc), lambda i: (0, 0)),
            ],
            out_specs=pl.BlockSpec((1, h, 4 * wc), lambda i: (i, 0, 0)),
        ),
        compiler_params=pltpu.CompilerParams(dimension_semantics=("parallel",)),
    )(x1_row, a_up, b_up)

    # PixelShuffle(2): a FREE contiguous reshape (the shuffle already happened in
    # the weight-column permutation).  No transpose / concat kernels, no extra HBM.
    u_rows = u_pair.reshape(n, h2, w2c)                                   # (N, 2H, W2*C) bf16
    x2_row = x2.astype(MXU_DTYPE).reshape(n, h2, w2c)                     # (N, 2H, W2*C) bf16

    # ---- stage 2: fused downshannel (1x1) + double_conv + double_conv ----
    def w_spec(shape):
        return pl.BlockSpec(shape, lambda i: (0,) * len(shape))

    out_row = pl.pallas_call(
        _tail_kernel,
        out_shape=jax.ShapeDtypeStruct((n, h2, w2c), jnp.float32),
        grid_spec=pltpu.PrefetchScalarGridSpec(
            num_scalar_prefetch=0,
            grid=(n,),
            in_specs=[
                pl.BlockSpec((1, h2, w2c), lambda i: (i, 0, 0)),          # x2 rows
                pl.BlockSpec((1, h2, w2c), lambda i: (i, 0, 0)),          # shuffled u rows
                w_spec((w2c, w2c)), w_spec((w2c, w2c)), w_spec((1, w2c)),
                w_spec((3, w2c, w2c)), w_spec((1, w2c)),
                w_spec((3, w2c, w2c)), w_spec((1, w2c)),
                w_spec((3, w2c, w2c)), w_spec((1, w2c)),
                w_spec((3, w2c, w2c)), w_spec((1, w2c)),
            ],
            out_specs=pl.BlockSpec((1, h2, w2c), lambda i: (i, 0, 0)),
        ),
        compiler_params=pltpu.CompilerParams(dimension_semantics=("parallel",)),
    )(x2_row, u_rows, wd_x2, wd_u, bd_r, a1, c1, a2, c2, a3, c3, a4, c4)

    return out_row.reshape(n, h2, w2, c)


# ----------------------------------------------------------------------------- pure-JAX reference
def _conv_nhwc_ref(x, w_hwio, b, mxu_dtype):
    dn = jax.lax.conv_dimension_numbers(x.shape, w_hwio.shape, ("NHWC", "HWIO", "NHWC"))
    y = jax.lax.conv_general_dilated(
        x.astype(mxu_dtype), w_hwio.astype(mxu_dtype), (1, 1), "SAME",
        dimension_numbers=dn, precision=jax.lax.Precision.HIGHEST,
        preferred_element_type=jnp.float32)
    return y + b


def _pixel_shuffle_nhwc(x, r):
    """NHWC PixelShuffle, channel index ordered (c, i, j) like torch.nn.PixelShuffle."""
    n, h, w, c4 = x.shape
    c = c4 // (r * r)
    x = x.reshape(n, h, w, c, r, r)
    x = x.transpose(0, 1, 4, 2, 5, 3)
    return x.reshape(n, h * r, w * r, c)


def ref_forward(x1, x2, params, mxu_dtype=jnp.float32):
    """Reference with the exact `up.forward` dataflow (mxu_dtype = conv operand dtype)."""
    (wu, bu, wd, bd, w1a, b1a, w1b, b1b, w2a, b2a, w2b, b2b) = params
    u = _conv_nhwc_ref(x1, wu, bu, mxu_dtype)                 # Upsampler conv
    u = _pixel_shuffle_nhwc(u, 2)                             # PixelShuffle(2)
    x = jnp.concatenate([x2, u], axis=-1)                     # torch.cat([x2, x1], dim=1)
    x = _conv_nhwc_ref(x, wd, bd, mxu_dtype)                  # downshannel 1x1
    for wa, ba, wb, bb in ((w1a, b1a, w1b, b1b), (w2a, b2a, w2b, b2b)):
        t = jnp.maximum(_conv_nhwc_ref(x, wa, ba, mxu_dtype), 0.0)
        x = x + _conv_nhwc_ref(t, wb, bb, mxu_dtype)          # double_conv residual
    return x


def init_conv_params(key, kh, kw, cin, cout):
    """Deterministic init mimicking nn.Conv2d defaults (kaiming_uniform, a=sqrt(5))."""
    fan_in = cin * kh * kw
    bound = 1.0 / math.sqrt(fan_in)
    k_w, k_b = jax.random.split(key)
    wgt = jax.random.uniform(k_w, (kh, kw, cin, cout), jnp.float32, -bound, bound)
    b = jax.random.uniform(k_b, (cout,), jnp.float32, -bound, bound)
    return wgt, b


if __name__ == "__main__":
    # in_ch == out_ch == C: required by the residual in double_conv and by the
    # channel bookkeeping of `up` (downshannel expects 2*in_ch channels after cat).
    N, H, W, C = 2, 16, 16, 4

    key = jax.random.PRNGKey(0)
    keys = jax.random.split(key, 8)
    x1 = jax.random.normal(keys[0], (N, H, W, C), jnp.float32)            # pre-upsample features
    x2 = jax.random.normal(keys[1], (N, 2 * H, 2 * W, C), jnp.float32)    # skip connection
    wu, bu = init_conv_params(keys[2], 3, 3, C, 4 * C)                    # Upsampler conv
    wd, bd = init_conv_params(keys[3], 1, 1, 2 * C, C)                    # downshannel 1x1
    w1a, b1a = init_conv_params(keys[4], 3, 3, C, C)                      # double_conv #1
    w1b, b1b = init_conv_params(keys[5], 3, 3, C, C)
    w2a, b2a = init_conv_params(keys[6], 3, 3, C, C)                      # double_conv #2
    w2b, b2b = init_conv_params(keys[7], 3, 3, C, C)
    params = (wu, bu, wd, bd, w1a, b1a, w1b, b1b, w2a, b2a, w2b, b2b)

    # One-time weight packing (hoisted out of the forward pass / jit).
    packed = jax.tree_util.tree_map(jax.block_until_ready, pack_up_params(params, W))

    fwd = jax.jit(up_forward)
    out = jax.block_until_ready(fwd(x1, x2, packed))

    # Tight check vs a reference using the same MXU precision policy
    # (bf16 operands, f32 accumulation); loose sanity check vs pure f32.
    ref_mx = ref_forward(x1, x2, params, MXU_DTYPE)
    ref_f32 = ref_forward(x1, x2, params, jnp.float32)
    np.testing.assert_allclose(np.asarray(out), np.asarray(ref_mx), rtol=3e-3, atol=3e-3)
    np.testing.assert_allclose(np.asarray(out), np.asarray(ref_f32), rtol=1e-1, atol=1e-1)
    print("KERNEL_OK")
</pallas_src>

<mosaic_0001>
module attributes {stable_mosaic.version = 11 : i64} {
  func.func @_upconv_kernel(%arg0: i32, %arg1: memref<1x16x64xbf16, #tpu.memory_space<vmem>>, %arg2: memref<3x64x256xbf16, #tpu.memory_space<vmem>>, %arg3: memref<1x256xf32, #tpu.memory_space<vmem>>, %arg4: memref<1x16x256xbf16, #tpu.memory_space<vmem>>) attributes {dimension_semantics = [#tpu.dimension_semantics<parallel>], iteration_bounds = array<i64: 2>, scalar_prefetch = 0 : i64, scratch_operands = 0 : i64, tpu.core_type = #tpu.core_type<tc>, window_params = [{transform_indices = @transform_0, window_bounds = array<i64: 1, 16, 64>}, {pipeline_mode = #tpu.pipeline_mode<synchronous>, transform_indices = @transform_1, window_bounds = array<i64: 3, 64, 256>}, {pipeline_mode = #tpu.pipeline_mode<synchronous>, transform_indices = @transform_2, window_bounds = array<i64: 1, 256>}, {transform_indices = @transform_3, window_bounds = array<i64: 1, 16, 256>}]} {
    %c0 = arith.constant 0 : index
    %c0_0 = arith.constant 0 : index
    %c0_1 = arith.constant 0 : index
    %0 = vector.load %arg1[%c0, %c0_0, %c0_1] : memref<1x16x64xbf16, #tpu.memory_space<vmem>>, vector<1x16x64xbf16>
    %1 = vector.shape_cast %0 : vector<1x16x64xbf16> to vector<16x64xbf16>
    %2 = arith.extf %1 : vector<16x64xbf16> to vector<16x64xf32>
    %cst = arith.constant 0.000000e+00 : f32
    %3 = vector.broadcast %cst : f32 to vector<1x64xf32>
    %4 = vector.extract_strided_slice %2 {offsets = [0, 0], sizes = [15, 64], strides = [1, 1]} : vector<16x64xf32> to vector<15x64xf32>
    %5 = tpu.concatenate %3, %4 in 0 : vector<1x64xf32>, vector<15x64xf32> -> vector<16x64xf32>
    %6 = vector.extract_strided_slice %2 {offsets = [1, 0], sizes = [15, 64], strides = [1, 1]} : vector<16x64xf32> to vector<15x64xf32>
    %7 = tpu.concatenate %6, %3 in 0 : vector<15x64xf32>, vector<1x64xf32> -> vector<16x64xf32>
    %8 = arith.truncf %5 : vector<16x64xf32> to vector<16x64xbf16>
    %c0_2 = arith.constant 0 : index
    %c0_3 = arith.constant 0 : index
    %c0_4 = arith.constant 0 : index
    %9 = vector.load %arg2[%c0_2, %c0_3, %c0_4] : memref<3x64x256xbf16, #tpu.memory_space<vmem>>, vector<1x64x256xbf16>
    %10 = vector.shape_cast %9 : vector<1x64x256xbf16> to vector<64x256xbf16>
    %cst_5 = arith.constant dense<0.000000e+00> : vector<16x256xf32>
    %11 = tpu.matmul %8, %10, %cst_5 {dimension_numbers = #tpu.dot_dimension_numbers<[1], [0], [0], [1], [0, 0, 1, 1], [], []>} : vector<16x64xbf16>, vector<64x256xbf16>, vector<16x256xf32> -> vector<16x256xf32>
    %12 = arith.truncf %2 : vector<16x64xf32> to vector<16x64xbf16>
    %c1 = arith.constant 1 : index
    %c0_6 = arith.constant 0 : index
    %c0_7 = arith.constant 0 : index
    %13 = vector.load %arg2[%c1, %c0_6, %c0_7] : memref<3x64x256xbf16, #tpu.memory_space<vmem>>, vector<1x64x256xbf16>
    %14 = vector.shape_cast %13 : vector<1x64x256xbf16> to vector<64x256xbf16>
    %cst_8 = arith.constant dense<0.000000e+00> : vector<16x256xf32>
    %15 = tpu.matmul %12, %14, %cst_8 {dimension_numbers = #tpu.dot_dimension_numbers<[1], [0], [0], [1], [0, 0, 1, 1], [], []>} : vector<16x64xbf16>, vector<64x256xbf16>, vector<16x256xf32> -> vector<16x256xf32>
    %16 = arith.addf %11, %15 : vector<16x256xf32>
    %17 = arith.truncf %7 : vector<16x64xf32> to vector<16x64xbf16>
    %c2 = arith.constant 2 : index
    %c0_9 = arith.constant 0 : index
    %c0_10 = arith.constant 0 : index
    %18 = vector.load %arg2[%c2, %c0_9, %c0_10] : memref<3x64x256xbf16, #tpu.memory_space<vmem>>, vector<1x64x256xbf16>
    %19 = vector.shape_cast %18 : vector<1x64x256xbf16> to vector<64x256xbf16>
    %cst_11 = arith.constant dense<0.000000e+00> : vector<16x256xf32>
    %20 = tpu.matmul %17, %19, %cst_11 {dimension_numbers = #tpu.dot_dimension_numbers<[1], [0], [0], [1], [0, 0, 1, 1], [], []>} : vector<16x64xbf16>, vector<64x256xbf16>, vector<16x256xf32> -> vector<16x256xf32>
    %21 = arith.addf %16, %20 : vector<16x256xf32>
    %c0_12 = arith.constant 0 : index
    %c0_13 = arith.constant 0 : index
    %22 = vector.load %arg3[%c0_12, %c0_13] : memref<1x256xf32, #tpu.memory_space<vmem>>, vector<1x256xf32>
    %23 = vector.broadcast %22 : vector<1x256xf32> to vector<16x256xf32>
    %24 = arith.addf %21, %23 : vector<16x256xf32>
    %25 = arith.truncf %24 : vector<16x256xf32> to vector<16x256xbf16>
    %c0_14 = arith.constant 0 : index
    %c0_15 = arith.constant 0 : index
    %c0_16 = arith.constant 0 : index
    %26 = vector.load %arg4[%c0_14, %c0_15, %c0_16] : memref<1x16x256xbf16, #tpu.memory_space<vmem>>, vector<1x16x256xbf16>
    %27 = vector.shape_cast %26 : vector<1x16x256xbf16> to vector<16x256xbf16>
    %28 = vector.shape_cast %25 : vector<16x256xbf16> to vector<1x16x256xbf16>
    tpu.vector_store %arg4[%c0_14, %c0_15, %c0_16], %28 {strides = array<i32>} : memref<1x16x256xbf16, #tpu.memory_space<vmem>>, vector<1x16x256xbf16>,
    return
  }
  func.func @transform_0(%arg0: i32) -> (i32, i32, i32) {
    %c0_i32 = arith.constant 0 : i32
    %c0_i32_0 = arith.constant 0 : i32
    %c0_i32_1 = arith.constant 0 : i32
    return %arg0, %c0_i32, %c0_i32_0 : i32, i32, i32
  }
  func.func @transform_1(%arg0: i32) -> (i32, i32, i32) {
    %c0_i32 = arith.constant 0 : i32
    %c0_i32_0 = arith.constant 0 : i32
    %c0_i32_1 = arith.constant 0 : i32
    %c0_i32_2 = arith.constant 0 : i32
    return %c0_i32, %c0_i32_0, %c0_i32_1 : i32, i32, i32
  }
  func.func @transform_2(%arg0: i32) -> (i32, i32) {
    %c0_i32 = arith.constant 0 : i32
    %c0_i32_0 = arith.constant 0 : i32
    %c0_i32_1 = arith.constant 0 : i32
    return %c0_i32, %c0_i32_0 : i32, i32
  }
  func.func @transform_3(%arg0: i32) -> (i32, i32, i32) {
    %c0_i32 = arith.constant 0 : i32
    %c0_i32_0 = arith.constant 0 : i32
    %c0_i32_1 = arith.constant 0 : i32
    return %arg0, %c0_i32, %c0_i32_0 : i32, i32, i32
  }
}

module attributes {stable_mosaic.version = 11 : i64} {
  func.func @_tail_kernel(%arg0: i32, %arg1: memref<1x32x128xbf16, #tpu.memory_space<vmem>>, %arg2: memref<1x32x128xbf16, #tpu.memory_space<vmem>>, %arg3: memref<128x128xbf16, #tpu.memory_space<vmem>>, %arg4: memref<128x128xbf16, #tpu.memory_space<vmem>>, %arg5: memref<1x128xf32, #tpu.memory_space<vmem>>, %arg6: memref<3x128x128xbf16, #tpu.memory_space<vmem>>, %arg7: memref<1x128xf32, #tpu.memory_space<vmem>>, %arg8: memref<3x128x128xbf16, #tpu.memory_space<vmem>>, %arg9: memref<1x128xf32, #tpu.memory_space<vmem>>, %arg10: memref<3x128x128xbf16, #tpu.memory_space<vmem>>, %arg11: memref<1x128xf32, #tpu.memory_space<vmem>>, %arg12: memref<3x128x128xbf16, #tpu.memory_space<vmem>>, %arg13: memref<1x128xf32, #tpu.memory_space<vmem>>, %arg14: memref<1x32x128xf32, #tpu.memory_space<vmem>>) attributes {dimension_semantics = [#tpu.dimension_semantics<parallel>], iteration_bounds = array<i64: 2>, scalar_prefetch = 0 : i64, scratch_operands = 0 : i64, tpu.core_type = #tpu.core_type<tc>, window_params = [{transform_indices = @transform_0, window_bounds = array<i64: 1, 32, 128>}, {transform_indices = @transform_1, window_bounds = array<i64: 1, 32, 128>}, {pipeline_mode = #tpu.pipeline_mode<synchronous>, transform_indices = @transform_2, window_bounds = array<i64: 128, 128>}, {pipeline_mode = #tpu.pipeline_mode<synchronous>, transform_indices = @transform_3, window_bounds = array<i64: 128, 128>}, {pipeline_mode = #tpu.pipeline_mode<synchronous>, transform_indices = @transform_4, window_bounds = array<i64: 1, 128>}, {pipeline_mode = #tpu.pipeline_mode<synchronous>, transform_indices = @transform_5, window_bounds = array<i64: 3, 128, 128>}, {pipeline_mode = #tpu.pipeline_mode<synchronous>, transform_indices = @transform_6, window_bounds = array<i64: 1, 128>}, {pipeline_mode = #tpu.pipeline_mode<synchronous>, transform_indices = @transform_7, window_bounds = array<i64: 3, 128, 128>}, {pipeline_mode = #tpu.pipeline_mode<synchronous>, transform_indices = @transform_8, window_bounds = array<i64: 1, 128>}, {pipeline_mode = #tpu.pipeline_mode<synchronous>, transform_indices = @transform_9, window_bounds = array<i64: 3, 128, 128>}, {pipeline_mode = #tpu.pipeline_mode<synchronous>, transform_indices = @transform_10, window_bounds = array<i64: 1, 128>}, {pipeline_mode = #tpu.pipeline_mode<synchronous>, transform_indices = @transform_11, window_bounds = array<i64: 3, 128, 128>}, {pipeline_mode = #tpu.pipeline_mode<synchronous>, transform_indices = @transform_12, window_bounds = array<i64: 1, 128>}, {transform_indices = @transform_13, window_bounds = array<i64: 1, 32, 128>}]} {
    %c0 = arith.constant 0 : index
    %c0_0 = arith.constant 0 : index
    %c0_1 = arith.constant 0 : index
    %0 = vector.load %arg1[%c0, %c0_0, %c0_1] : memref<1x32x128xbf16, #tpu.memory_space<vmem>>, vector<1x32x128xbf16>
    %1 = vector.shape_cast %0 : vector<1x32x128xbf16> to vector<32x128xbf16>
    %c0_2 = arith.constant 0 : index
    %c0_3 = arith.constant 0 : index
    %2 = vector.load %arg3[%c0_2, %c0_3] : memref<128x128xbf16, #tpu.memory_space<vmem>>, vector<128x128xbf16>
    %cst = arith.constant dense<0.000000e+00> : vector<32x128xf32>
    %3 = tpu.matmul %1, %2, %cst {dimension_numbers = #tpu.dot_dimension_numbers<[1], [0], [0], [1], [0, 0, 1, 1], [], []>} : vector<32x128xbf16>, vector<128x128xbf16>, vector<32x128xf32> -> vector<32x128xf32>
    %c0_4 = arith.constant 0 : index
    %c0_5 = arith.constant 0 : index
    %c0_6 = arith.constant 0 : index
    %4 = vector.load %arg2[%c0_4, %c0_5, %c0_6] : memref<1x32x128xbf16, #tpu.memory_space<vmem>>, vector<1x32x128xbf16>
    %5 = vector.shape_cast %4 : vector<1x32x128xbf16> to vector<32x128xbf16>
    %c0_7 = arith.constant 0 : index
    %c0_8 = arith.constant 0 : index
    %6 = vector.load %arg4[%c0_7, %c0_8] : memref<128x128xbf16, #tpu.memory_space<vmem>>, vector<128x128xbf16>
    %cst_9 = arith.constant dense<0.000000e+00> : vector<32x128xf32>
    %7 = tpu.matmul %5, %6, %cst_9 {dimension_numbers = #tpu.dot_dimension_numbers<[1], [0], [0], [1], [0, 0, 1, 1], [], []>} : vector<32x128xbf16>, vector<128x128xbf16>, vector<32x128xf32> -> vector<32x128xf32>
    %8 = arith.addf %3, %7 : vector<32x128xf32>
    %c0_10 = arith.constant 0 : index
    %c0_11 = arith.constant 0 : index
    %9 = vector.load %arg5[%c0_10, %c0_11] : memref<1x128xf32, #tpu.memory_space<vmem>>, vector<1x128xf32>
    %10 = vector.broadcast %9 : vector<1x128xf32> to vector<32x128xf32>
    %11 = arith.addf %8, %10 : vector<32x128xf32>
    %cst_12 = arith.constant 0.000000e+00 : f32
    %12 = vector.broadcast %cst_12 : f32 to vector<1x128xf32>
    %13 = vector.extract_strided_slice %11 {offsets = [0, 0], sizes = [31, 128], strides = [1, 1]} : vector<32x128xf32> to vector<31x128xf32>
    %14 = tpu.concatenate %12, %13 in 0 : vector<1x128xf32>, vector<31x128xf32> -> vector<32x128xf32>
    %15 = vector.extract_strided_slice %11 {offsets = [1, 0], sizes = [31, 128], strides = [1, 1]} : vector<32x128xf32> to vector<31x128xf32>
    %16 = tpu.concatenate %15, %12 in 0 : vector<31x128xf32>, vector<1x128xf32> -> vector<32x128xf32>
    %17 = arith.truncf %14 : vector<32x128xf32> to vector<32x128xbf16>
    %c0_13 = arith.constant 0 : index
    %c0_14 = arith.constant 0 : index
    %c0_15 = arith.constant 0 : index
    %18 = vector.load %arg6[%c0_13, %c0_14, %c0_15] : memref<3x128x128xbf16, #tpu.memory_space<vmem>>, vector<1x128x128xbf16>
    %19 = vector.shape_cast %18 : vector<1x128x128xbf16> to vector<128x128xbf16>
    %cst_16 = arith.constant dense<0.000000e+00> : vector<32x128xf32>
    %20 = tpu.matmul %17, %19, %cst_16 {dimension_numbers = #tpu.dot_dimension_numbers<[1], [0], [0], [1], [0, 0, 1, 1], [], []>} : vector<32x128xbf16>, vector<128x128xbf16>, vector<32x128xf32> -> vector<32x128xf32>
    %21 = arith.truncf %11 : vector<32x128xf32> to vector<32x128xbf16>
    %c1 = arith.constant 1 : index
    %c0_17 = arith.constant 0 : index
    %c0_18 = arith.constant 0 : index
    %22 = vector.load %arg6[%c1, %c0_17, %c0_18] : memref<3x128x128xbf16, #tpu.memory_space<vmem>>, vector<1x128x128xbf16>
    %23 = vector.shape_cast %22 : vector<1x128x128xbf16> to vector<128x128xbf16>
    %cst_19 = arith.constant dense<0.000000e+00> : vector<32x128xf32>
    %24 = tpu.matmul %21, %23, %cst_19 {dimension_numbers = #tpu.dot_dimension_numbers<[1], [0], [0], [1], [0, 0, 1, 1], [], []>} : vector<32x128xbf16>, vector<128x128xbf16>, vector<32x128xf32> -> vector<32x128xf32>
    %25 = arith.addf %20, %24 : vector<32x128xf32>
    %26 = arith.truncf %16 : vector<32x128xf32> to vector<32x128xbf16>
    %c2 = arith.constant 2 : index
    %c0_20 = arith.constant 0 : index
    %c0_21 = arith.constant 0 : index
    %27 = vector.load %arg6[%c2, %c0_20, %c0_21] : memref<3x128x128xbf16, #tpu.memory_space<vmem>>, vector<1x128x128xbf16>
    %28 = vector.shape_cast %27 : vector<1x128x128xbf16> to vector<128x128xbf16>
    %cst_22 = arith.constant dense<0.000000e+00> : vector<32x128xf32>
    %29 = tpu.matmul %26, %28, %cst_22 {dimension_numbers = #tpu.dot_dimension_numbers<[1], [0], [0], [1], [0, 0, 1, 1], [], []>} : vector<32x128xbf16>, vector<128x128xbf16>, vector<32x128xf32> -> vector<32x128xf32>
    %30 = arith.addf %25, %29 : vector<32x128xf32>
    %c0_23 = arith.constant 0 : index
    %c0_24 = arith.constant 0 : index
    %31 = vector.load %arg7[%c0_23, %c0_24] : memref<1x128xf32, #tpu.memory_space<vmem>>, vector<1x128xf32>
    %32 = vector.broadcast %31 : vector<1x128xf32> to vector<32x128xf32>
    %33 = arith.addf %30, %32 : vector<32x128xf32>
    %cst_25 = arith.constant 0.000000e+00 : f32
    %34 = vector.broadcast %cst_25 : f32 to vector<32x128xf32>
    %35 = arith.maximumf %33, %34 : vector<32x128xf32>
    %cst_26 = arith.constant 0.000000e+00 : f32
    %36 = vector.broadcast %cst_26 : f32 to vector<1x128xf32>
    %37 = vector.extract_strided_slice %35 {offsets = [0, 0], sizes = [31, 128], strides = [1, 1]} : vector<32x128xf32> to vector<31x128xf32>
    %38 = tpu.concatenate %36, %37 in 0 : vector<1x128xf32>, vector<31x128xf32> -> vector<32x128xf32>
    %39 = vector.extract_strided_slice %35 {offsets = [1, 0], sizes = [31, 128], strides = [1, 1]} : vector<32x128xf32> to vector<31x128xf32>
    %40 = tpu.concatenate %39, %36 in 0 : vector<31x128xf32>, vector<1x128xf32> -> vector<32x128xf32>
    %41 = arith.truncf %38 : vector<32x128xf32> to vector<32x128xbf16>
    %c0_27 = arith.constant 0 : index
    %c0_28 = arith.constant 0 : index
    %c0_29 = arith.constant 0 : index
    %42 = vector.load %arg8[%c0_27, %c0_28, %c0_29] : memref<3x128x128xbf16, #tpu.memory_space<vmem>>, vector<1x128x128xbf16>
    %43 = vector.shape_cast %42 : vector<1x128x128xbf16> to vector<128x128xbf16>
    %cst_30 = arith.constant dense<0.000000e+00> : vector<32x128xf32>
    %44 = tpu.matmul %41, %43, %cst_30 {dimension_numbers = #tpu.dot_dimension_numbers<[1], [0], [0], [1], [0, 0, 1, 1], [], []>} : vector<32x128xbf16>, vector<128x128xbf16>, vector<32x128xf32> -> vector<32x128xf32>
    %45 = arith.truncf %35 : vector<32x128xf32> to vector<32x128xbf16>
    %c1_31 = arith.constant 1 : index
    %c0_32 = arith.constant 0 : index
    %c0_33 = arith.constant 0 : index
    %46 = vector.load %arg8[%c1_31, %c0_32, %c0_33] : memref<3x128x128xbf16, #tpu.memory_space<vmem>>, vector<1x128x128xbf16>
    %47 = vector.shape_cast %46 : vector<1x128x128xbf16> to vector<128x128xbf16>
    %cst_34 = arith.constant dense<0.000000e+00> : vector<32x128xf32>
    %48 = tpu.matmul %45, %47, %cst_34 {dimension_numbers = #tpu.dot_dimension_numbers<[1], [0], [0], [1], [0, 0, 1, 1], [], []>} : vector<32x128xbf16>, vector<128x128xbf16>, vector<32x128xf32> -> vector<32x128xf32>
    %49 = arith.addf %44, %48 : vector<32x128xf32>
    %50 = arith.truncf %40 : vector<32x128xf32> to vector<32x128xbf16>
    %c2_35 = arith.constant 2 : index
    %c0_36 = arith.constant 0 : index
    %c0_37 = arith.constant 0 : index
    %51 = vector.load %arg8[%c2_35, %c0_36, %c0_37] : memref<3x128x128xbf16, #tpu.memory_space<vmem>>, vector<1x128x128xbf16>
    %52 = vector.shape_cast %51 : vector<1x128x128xbf16> to vector<128x128xbf16>
    %cst_38 = arith.constant dense<0.000000e+00> : vector<32x128xf32>
    %53 = tpu.matmul %50, %52, %cst_38 {dimension_numbers = #tpu.dot_dimension_numbers<[1], [0], [0], [1], [0, 0, 1, 1], [], []>} : vector<32x128xbf16>, vector<128x128xbf16>, vector<32x128xf32> -> vector<32x128xf32>
    %54 = arith.addf %49, %53 : vector<32x128xf32>
    %c0_39 = arith.constant 0 : index
    %c0_40 = arith.constant 0 : index
    %55 = vector.load %arg9[%c0_39, %c0_40] : memref<1x128xf32, #tpu.memory_space<vmem>>, vector<1x128xf32>
    %56 = vector.broadcast %55 : vector<1x128xf32> to vector<32x128xf32>
    %57 = arith.addf %54, %56 : vector<32x128xf32>
    %58 = arith.addf %11, %57 : vector<32x128xf32>
    %cst_41 = arith.constant 0.000000e+00 : f32
    %59 = vector.broadcast %cst_41 : f32 to vector<1x128xf32>
    %60 = vector.extract_strided_slice %58 {offsets = [0, 0], sizes = [31, 128], strides = [1, 1]} : vector<32x128xf32> to vector<31x128xf32>
    %61 = tpu.concatenate %59, %60 in 0 : vector<1x128xf32>, vector<31x128xf32> -> vector<32x128xf32>
    %62 = vector.extract_strided_slice %58 {offsets = [1, 0], sizes = [31, 128], strides = [1, 1]} : vector<32x128xf32> to vector<31x128xf32>
    %63 = tpu.concatenate %62, %59 in 0 : vector<31x128xf32>, vector<1x128xf32> -> vector<32x128xf32>
    %64 = arith.truncf %61 : vector<32x128xf32> to vector<32x128xbf16>
    %c0_42 = arith.constant 0 : index
    %c0_43 = arith.constant 0 : index
    %c0_44 = arith.constant 0 : index
    %65 = vector.load %arg10[%c0_42, %c0_43, %c0_44] : memref<3x128x128xbf16, #tpu.memory_space<vmem>>, vector<1x128x128xbf16>
    %66 = vector.shape_cast %65 : vector<1x128x128xbf16> to vector<128x128xbf16>
    %cst_45 = arith.constant dense<0.000000e+00> : vector<32x128xf32>
    %67 = tpu.matmul %64, %66, %cst_45 {dimension_numbers = #tpu.dot_dimension_numbers<[1], [0], [0], [1], [0, 0, 1, 1], [], []>} : vector<32x128xbf16>, vector<128x128xbf16>, vector<32x128xf32> -> vector<32x128xf32>
    %68 = arith.truncf %58 : vector<32x128xf32> to vector<32x128xbf16>
    %c1_46 = arith.constant 1 : index
    %c0_47 = arith.constant 0 : index
    %c0_48 = arith.constant 0 : index
    %69 = vector.load %arg10[%c1_46, %c0_47, %c0_48] : memref<3x128x128xbf16, #tpu.memory_space<vmem>>, vector<1x128x128xbf16>
    %70 = vector.shape_cast %69 : vector<1x128x128xbf16> to vector<128x128xbf16>
    %cst_49 = arith.constant dense<0.000000e+00> : vector<32x128xf32>
    %71 = tpu.matmul %68, %70, %cst_49 {dimension_numbers = #tpu.dot_dimension_numbers<[1], [0], [0], [1], [0, 0, 1, 1], [], []>} : vector<32x128xbf16>, vector<128x128xbf16>, vector<32x128xf32> -> vector<32x128xf32>
    %72 = arith.addf %67, %71 : vector<32x128xf32>
    %73 = arith.truncf %63 : vector<32x128xf32> to vector<32x128xbf16>
    %c2_50 = arith.constant 2 : index
    %c0_51 = arith.constant 0 : index
    %c0_52 = arith.constant 0 : index
    %74 = vector.load %arg10[%c2_50, %c0_51, %c0_52] : memref<3x128x128xbf16, #tpu.memory_space<vmem>>, vector<1x128x128xbf16>
    %75 = vector.shape_cast %74 : vector<1x128x128xbf16> to vector<128x128xbf16>
    %cst_53 = arith.constant dense<0.000000e+00> : vector<32x128xf32>
    %76 = tpu.matmul %73, %75, %cst_53 {dimension_numbers = #tpu.dot_dimension_numbers<[1], [0], [0], [1], [0, 0, 1, 1], [], []>} : vector<32x128xbf16>, vector<128x128xbf16>, vector<32x128xf32> -> vector<32x128xf32>
    %77 = arith.addf %72, %76 : vector<32x128xf32>
    %c0_54 = arith.constant 0 : index
    %c0_55 = arith.constant 0 : index
    %78 = vector.load %arg11[%c0_54, %c0_55] : memref<1x128xf32, #tpu.memory_space<vmem>>, vector<1x128xf32>
    %79 = vector.broadcast %78 : vector<1x128xf32> to vector<32x128xf32>
    %80 = arith.addf %77, %79 : vector<32x128xf32>
    %cst_56 = arith.constant 0.000000e+00 : f32
    %81 = vector.broadcast %cst_56 : f32 to vector<32x128xf32>
    %82 = arith.maximumf %80, %81 : vector<32x128xf32>
    %cst_57 = arith.constant 0.000000e+00 : f32
    %83 = vector.broadcast %cst_57 : f32 to vector<1x128xf32>
    %84 = vector.extract_strided_slice %82 {offsets = [0, 0], sizes = [31, 128], strides = [1, 1]} : vector<32x128xf32> to vector<31x128xf32>
    %85 = tpu.concatenate %83, %84 in 0 : vector<1x128xf32>, vector<31x128xf32> -> vector<32x128xf32>
    %86 = vector.extract_strided_slice %82 {offsets = [1, 0], sizes = [31, 128], strides = [1, 1]} : vector<32x128xf32> to vector<31x128xf32>
    %87 = tpu.concatenate %86, %83 in 0 : vector<31x128xf32>, vector<1x128xf32> -> vector<32x128xf32>
    %88 = arith.truncf %85 : vector<32x128xf32> to vector<32x128xbf16>
    %c0_58 = arith.constant 0 : index
    %c0_59 = arith.constant 0 : index
    %c0_60 = arith.constant 0 : index
    %89 = vector.load %arg12[%c0_58, %c0_59, %c0_60] : memref<3x128x128xbf16, #tpu.memory_space<vmem>>, vector<1x128x128xbf16>
    %90 = vector.shape_cast %89 : vector<1x128x128xbf16> to vector<128x128xbf16>
    %cst_61 = arith.constant dense<0.000000e+00> : vector<32x128xf32>
    %91 = tpu.matmul %88, %90, %cst_61 {dimension_numbers = #tpu.dot_dimension_numbers<[1], [0], [0], [1], [0, 0, 1, 1], [], []>} : vector<32x128xbf16>, vector<128x128xbf16>, vector<32x128xf32> -> vector<32x128xf32>
    %92 = arith.truncf %82 : vector<32x128xf32> to vector<32x128xbf16>
    %c1_62 = arith.constant 1 : index
    %c0_63 = arith.constant 0 : index
    %c0_64 = arith.constant 0 : index
    %93 = vector.load %arg12[%c1_62, %c0_63, %c0_64] : memref<3x128x128xbf16, #tpu.memory_space<vmem>>, vector<1x128x128xbf16>
    %94 = vector.shape_cast %93 : vector<1x128x128xbf16> to vector<128x128xbf16>
    %cst_65 = arith.constant dense<0.000000e+00> : vector<32x128xf32>
    %95 = tpu.matmul %92, %94, %cst_65 {dimension_numbers = #tpu.dot_dimension_numbers<[1], [0], [0], [1], [0, 0, 1, 1], [], []>} : vector<32x128xbf16>, vector<128x128xbf16>, vector<32x128xf32> -> vector<32x128xf32>
    %96 = arith.addf %91, %95 : vector<32x128xf32>
    %97 = arith.truncf %87 : vector<32x128xf32> to vector<32x128xbf16>
    %c2_66 = arith.constant 2 : index
    %c0_67 = arith.constant 0 : index
    %c0_68 = arith.constant 0 : index
    %98 = vector.load %arg12[%c2_66, %c0_67, %c0_68] : memref<3x128x128xbf16, #tpu.memory_space<vmem>>, vector<1x128x128xbf16>
    %99 = vector.shape_cast %98 : vector<1x128x128xbf16> to vector<128x128xbf16>
    %cst_69 = arith.constant dense<0.000000e+00> : vector<32x128xf32>
    %100 = tpu.matmul %97, %99, %cst_69 {dimension_numbers = #tpu.dot_dimension_numbers<[1], [0], [0], [1], [0, 0, 1, 1], [], []>} : vector<32x128xbf16>, vector<128x128xbf16>, vector<32x128xf32> -> vector<32x128xf32>
    %101 = arith.addf %96, %100 : vector<32x128xf32>
    %c0_70 = arith.constant 0 : index
    %c0_71 = arith.constant 0 : index
    %102 = vector.load %arg13[%c0_70, %c0_71] : memref<1x128xf32, #tpu.memory_space<vmem>>, vector<1x128xf32>
    %103 = vector.broadcast %102 : vector<1x128xf32> to vector<32x128xf32>
    %104 = arith.addf %101, %103 : vector<32x128xf32>
    %105 = arith.addf %58, %104 : vector<32x128xf32>
    %c0_72 = arith.constant 0 : index
    %c0_73 = arith.constant 0 : index
    %c0_74 = arith.constant 0 : index
    %106 = vector.load %arg14[%c0_72, %c0_73, %c0_74] : memref<1x32x128xf32, #tpu.memory_space<vmem>>, vector<1x32x128xf32>
    %107 = vector.shape_cast %106 : vector<1x32x128xf32> to vector<32x128xf32>
    %108 = vector.shape_cast %105 : vector<32x128xf32> to vector<1x32x128xf32>
    tpu.vector_store %arg14[%c0_72, %c0_73, %c0_74], %108 {strides = array<i32>} : memref<1x32x128xf32, #tpu.memory_space<vmem>>, vector<1x32x128xf32>,
    return
  }
  func.func @transform_0(%arg0: i32) -> (i32, i32, i32) {
    %c0_i32 = arith.constant 0 : i32
    %c0_i32_0 = arith.constant 0 : i32
    %c0_i32_1 = arith.constant 0 : i32
    return %arg0, %c0_i32, %c0_i32_0 : i32, i32, i32
  }
  func.func @transform_1(%arg0: i32) -> (i32, i32, i32) {
    %c0_i32 = arith.constant 0 : i32
    %c0_i32_0 = arith.constant 0 : i32
    %c0_i32_1 = arith.constant 0 : i32
    return %arg0, %c0_i32, %c0_i32_0 : i32, i32, i32
  }
  func.func @transform_2(%arg0: i32) -> (i32, i32) {
    %c0_i32 = arith.constant 0 : i32
    %c0_i32_0 = arith.constant 0 : i32
    %c0_i32_1 = arith.constant 0 : i32
    return %c0_i32, %c0_i32_0 : i32, i32
  }
  func.func @transform_3(%arg0: i32) -> (i32, i32) {
    %c0_i32 = arith.constant 0 : i32
    %c0_i32_0 = arith.constant 0 : i32
    %c0_i32_1 = arith.constant 0 : i32
    return %c0_i32, %c0_i32_0 : i32, i32
  }
  func.func @transform_4(%arg0: i32) -> (i32, i32) {
    %c0_i32 = arith.constant 0 : i32
    %c0_i32_0 = arith.constant 0 : i32
    %c0_i32_1 = arith.constant 0 : i32
    return %c0_i32, %c0_i32_0 : i32, i32
  }
  func.func @transform_5(%arg0: i32) -> (i32, i32, i32) {
    %c0_i32 = arith.constant 0 : i32
    %c0_i32_0 = arith.constant 0 : i32
    %c0_i32_1 = arith.constant 0 : i32
    %c0_i32_2 = arith.constant 0 : i32
    return %c0_i32, %c0_i32_0, %c0_i32_1 : i32, i32, i32
  }
  func.func @transform_6(%arg0: i32) -> (i32, i32) {
    %c0_i32 = arith.constant 0 : i32
    %c0_i32_0 = arith.constant 0 : i32
    %c0_i32_1 = arith.constant 0 : i32
    return %c0_i32, %c0_i32_0 : i32, i32
  }
  func.func @transform_7(%arg0: i32) -> (i32, i32, i32) {
    %c0_i32 = arith.constant 0 : i32
    %c0_i32_0 = arith.constant 0 : i32
    %c0_i32_1 = arith.constant 0 : i32
    %c0_i32_2 = arith.constant 0 : i32
    return %c0_i32, %c0_i32_0, %c0_i32_1 : i32, i32, i32
  }
  func.func @transform_8(%arg0: i32) -> (i32, i32) {
    %c0_i32 = arith.constant 0 : i32
    %c0_i32_0 = arith.constant 0 : i32
    %c0_i32_1 = arith.constant 0 : i32
    return %c0_i32, %c0_i32_0 : i32, i32
  }
  func.func @transform_9(%arg0: i32) -> (i32, i32, i32) {
    %c0_i32 = arith.constant 0 : i32
    %c0_i32_0 = arith.constant 0 : i32
    %c0_i32_1 = arith.constant 0 : i32
    %c0_i32_2 = arith.constant 0 : i32
    return %c0_i32, %c0_i32_0, %c0_i32_1 : i32, i32, i32
  }
  func.func @transform_10(%arg0: i32) -> (i32, i32) {
    %c0_i32 = arith.constant 0 : i32
    %c0_i32_0 = arith.constant 0 : i32
    %c0_i32_1 = arith.constant 0 : i32
    return %c0_i32, %c0_i32_0 : i32, i32
  }
  func.func @transform_11(%arg0: i32) -> (i32, i32, i32) {
    %c0_i32 = arith.constant 0 : i32
    %c0_i32_0 = arith.constant 0 : i32
    %c0_i32_1 = arith.constant 0 : i32
    %c0_i32_2 = arith.constant 0 : i32
    return %c0_i32, %c0_i32_0, %c0_i32_1 : i32, i32, i32
  }
  func.func @transform_12(%arg0: i32) -> (i32, i32) {
    %c0_i32 = arith.constant 0 : i32
    %c0_i32_0 = arith.constant 0 : i32
    %c0_i32_1 = arith.constant 0 : i32
    return %c0_i32, %c0_i32_0 : i32, i32
  }
  func.func @transform_13(%arg0: i32) -> (i32, i32, i32) {
    %c0_i32 = arith.constant 0 : i32
    %c0_i32_0 = arith.constant 0 : i32
    %c0_i32_1 = arith.constant 0 : i32
    return %arg0, %c0_i32, %c0_i32_0 : i32, i32, i32
  }
}

</mosaic_0001>

<llo_original>
// kernel: up_forward.2
$region0: #{up_forward.2}
  #allocation0 [shape = 'u32[]', space=smem, size = 0x4, offset = 0x4, fixed_abs, tag = 'smem constant byte address 0x4 - core index']
  #allocation1 [shape = 'u32[144,128]{1,0:T(1,128)}', space=vmem, size = 0x12000, scoped, tag = 'internal scratch']
  %s0 = inlined_call_operand.vmem [shape: bf16[2,16,64], index: 0, kind: input, shape index: {}]
  %s1 = inlined_call_operand.vmem [shape: bf16[3,64,256], index: 1, kind: input, shape index: {}]
  %s2 = inlined_call_operand.vmem [shape: f32[1,256], index: 2, kind: input, shape index: {}]
  %s3 = inlined_call_operand.vmem [shape: bf16[2,16,256], index: 3, kind: output, shape index: {}]
  %s4 = sld [smem:[#allocation0]]
  $region45: #{up_forward.2} parent=0
    _
  %s6 = ssub.s32 1, %s4
  %s7 = scalar_select 0, %s6, %s4
  loop: start=0, step=1, limit=4
  $region2: #{up_forward.2} parent=0 // loop_pre_header
    _
  $region3: #{up_forward.2} parent=0 // loop_header
    %s9 = sphi 0, %s13
    %p10 = scmp.ge.s32.totalorder %s9, 4
    %s19 = sphi 0, %s21
    %s22 = sphi 0, %s19
    %s23 = sphi 0, %s22
    %s39 = sphi 0, %s23
    %s43 = sphi 0, %s43
    %s45 = sphi 0, %s43
    %s46 = sphi 0, %s45
    %s60 = sphi 0, %s46
    %s64 = sphi 0, %s64
    %s66 = sphi 0, %s64
    %s67 = sphi 0, %s66
    %s81 = sphi 0, %s67
    %s87 = sphi 0, %s89
    %s90 = sphi 0, %s87
    %s91 = sphi 0, %s90
    %s107 = sphi 0, %s91
  $region4: #{up_forward.2} parent=0 // loop_header_branch
    %12 = sbr.rel (%p10) target = $region8
  $region5: #{up_forward.2} parent=0 // loop_body
    %s14 = ssub.s32 %s9, 1
    %s15 = ssub.s32 %s9, 2
    %s16 = sadd.s32 %s9, 1
    %s17 = ssub.s32 %s9, %s16
    %p18 = scmp.eq.s32.totalorder %s17, 0
    %s20 = sadd.s32 %s19, 1
    %s21 = scalar_select %p18, %s19, %s20
    %p24 = pneg %p18
    %p25 = scmp.eq.s32.totalorder %s9, 1
    %p26 = por %p24, %p25
    %p27 = scmp.ne.s32.totalorder %s19, %s22
    %p28 = scmp.eq.s32.totalorder %s9, 0
    %p29 = por %p27, %p28
    %p30 = scmp.ne.s32.totalorder %s19, %s22
    %p31 = scmp.eq.s32.totalorder %s14, 1
    %p32 = por %p30, %p31
    %p33 = scmp.ne.s32.totalorder %s22, %s23
    %p34 = scmp.eq.s32.totalorder %s14, 0
    %p35 = por %p33, %p34
    %p36 = scmp.ne.s32.totalorder %s22, %s23
    %p37 = scmp.eq.s32.totalorder %s15, 1
    %p38 = por %p36, %p37
    %p40 = scmp.ne.s32.totalorder %s23, %s39
    %p41 = scmp.eq.s32.totalorder %s15, 0
    %p42 = por %p40, %p41
    %s44 = sadd.s32 %s43, 1
    %p47 = scmp.eq.s32.totalorder %s9, 1
    %p48 = scmp.ne.s32.totalorder %s43, %s45
    %p49 = scmp.eq.s32.totalorder %s9, 0
    %p50 = por %p48, %p49
    %p51 = scmp.ne.s32.totalorder %s43, %s45
    %p52 = scmp.eq.s32.totalorder %s14, 1
    %p53 = por %p51, %p52
    %p54 = scmp.ne.s32.totalorder %s45, %s46
    %p55 = scmp.eq.s32.totalorder %s14, 0
    %p56 = por %p54, %p55
    %p57 = scmp.ne.s32.totalorder %s45, %s46
    %p58 = scmp.eq.s32.totalorder %s15, 1
    %p59 = por %p57, %p58
    %p61 = scmp.ne.s32.totalorder %s46, %s60
    %p62 = scmp.eq.s32.totalorder %s15, 0
    %p63 = por %p61, %p62
    %s65 = sadd.s32 %s64, 1
    %p68 = scmp.eq.s32.totalorder %s9, 1
    %p69 = scmp.ne.s32.totalorder %s64, %s66
    %p70 = scmp.eq.s32.totalorder %s9, 0
    %p71 = por %p69, %p70
    %p72 = scmp.ne.s32.totalorder %s64, %s66
    %p73 = scmp.eq.s32.totalorder %s14, 1
    %p74 = por %p72, %p73
    %p75 = scmp.ne.s32.totalorder %s66, %s67
    %p76 = scmp.eq.s32.totalorder %s14, 0
    %p77 = por %p75, %p76
    %p78 = scmp.ne.s32.totalorder %s66, %s67
    %p79 = scmp.eq.s32.totalorder %s15, 1
    %p80 = por %p78, %p79
    %p82 = scmp.ne.s32.totalorder %s67, %s81
    %p83 = scmp.eq.s32.totalorder %s15, 0
    %p84 = por %p82, %p83
    %s85 = ssub.s32 %s9, %s16
    %p86 = scmp.eq.s32.totalorder %s85, 0
    %s88 = sadd.s32 %s87, 1
    %s89 = scalar_select %p86, %s87, %s88
    %p92 = pneg %p86
    %p93 = scmp.eq.s32.totalorder %s9, 1
    %p94 = por %p92, %p93
    %p95 = scmp.ne.s32.totalorder %s87, %s90
    %p96 = scmp.eq.s32.totalorder %s9, 0
    %p97 = por %p95, %p96
    %p98 = scmp.ne.s32.totalorder %s87, %s90
    %p99 = scmp.eq.s32.totalorder %s14, 1
    %p100 = por %p98, %p99
    %p101 = scmp.ne.s32.totalorder %s90, %s91
    %p102 = scmp.eq.s32.totalorder %s14, 0
    %p103 = por %p101, %p102
    %p104 = scmp.ne.s32.totalorder %s90, %s91
    %p105 = scmp.eq.s32.totalorder %s15, 1
    %p106 = por %p104, %p105
    %p108 = scmp.ne.s32.totalorder %s91, %s107
    %p109 = scmp.eq.s32.totalorder %s15, 0
    %p110 = por %p108, %p109
    %p111 = scmp.le.s32.totalorder 1, %s9
    %p112 = scmp.lt.s32.totalorder %s9, 3
    %p113 = pnand %p111, %p112
    %p114 = pneg %p113
    // Predicated region
    $region9: #{up_forward.2} parent=5 // pred_check
      _
    $region10: #{up_forward.2} parent=5 // pred_check_branch
      %116 = sbr.rel (%p113) target = $region12
    $region11: #{up_forward.2} parent=5 // pred_region
      %s117 = ssub.s32 %s9, 1
      // Predicated region
      $region13: #{up_forward.2} parent=11 // pred_check
        %p118 = pneg %p56
      $region14: #{up_forward.2} parent=11 // pred_check_branch
        %120 = sbr.rel (%p118) target = $region16
      $region15: #{up_forward.2} parent=11 // pred_region
        _
      $region16: #{up_forward.2} parent=11 // pred_fallthru
        _
      // Predicated region
      $region17: #{up_forward.2} parent=11 // pred_check
        %p121 = pneg %p77
      $region18: #{up_forward.2} parent=11 // pred_check_branch
        %123 = sbr.rel (%p121) target = $region20
      $region19: #{up_forward.2} parent=11 // pred_region
        _
      $region20: #{up_forward.2} parent=11 // pred_fallthru
        _
    $region12: #{up_forward.2} parent=5 // pred_fallthru
      _
    %p124 = scmp.lt.s32.totalorder %s9, 2
    // Predicated region
    $region21: #{up_forward.2} parent=5 // pred_check
      %p125 = pneg %p124
    $region22: #{up_forward.2} parent=5 // pred_check_branch
      %127 = sbr.rel (%p125) target = $region24
    $region23: #{up_forward.2} parent=5 // pred_region
      // Predicated region
      $region25: #{up_forward.2} parent=23 // pred_check
        %p128 = pneg %p29
      $region26: #{up_forward.2} parent=23 // pred_check_branch
        %130 = sbr.rel (%p128) target = $region28
      $region27: #{up_forward.2} parent=23 // pred_region
        %p131 = scmp.lt.s32.totalorder %s9, 1
        %s132 = scalar_select %p131, %s9, 1
        %s133 = smul.addr %s132, 2
        %s134 = smul.addr %s133, 4
        %s135 = scalar_lea.vmem %s0, %s134
      $region28: #{up_forward.2} parent=23 // pred_fallthru
        _
    $region24: #{up_forward.2} parent=5 // pred_fallthru
      _
    %p136 = scmp.le.s32.totalorder 1, %s9
    %p137 = scmp.lt.s32.totalorder %s9, 3
    %p138 = pnand %p136, %p137
    %p139 = pneg %p138
    // Predicated region
    $region29: #{up_forward.2} parent=5 // pred_check
      _
    $region30: #{up_forward.2} parent=5 // pred_check_branch
      %141 = sbr.rel (%p138) target = $region32
    $region31: #{up_forward.2} parent=5 // pred_region
      %s142 = ssub.s32 %s9, 1
      %p143 = scmp.lt.s32.totalorder %s14, 1
      %s144 = scalar_select %p143, %s14, 1
      %s145 = smul.addr %s144, 2
      %s146 = smul.addr %s145, 4
      %s147 = scalar_lea.vmem %s0, %s146
      %p148 = pneg %p35
      %p149 = pneg %p32
      %p150 = pneg %p56
      %p151 = pneg %p53
      %p152 = pneg %p77
      %p153 = pneg %p74
      %p154 = pneg %p103
      %p155 = pneg %p100
      %p156 = scmp.lt.s32.totalorder %s14, 1
      %s157 = scalar_select %p156, %s14, 1
      %s158 = smul.addr %s157, 4
      %s159 = smul.addr %s158, 4
      %s160 = scalar_lea.vmem %s3, %s159
      %p161 = scmp.lt.s32.totalorder %s14, 1
      %s162 = scalar_select %p161, %s14, 1
      %s163 = smul.addr %s162, 2
      %s164 = smul.addr %s163, 4
      %s165 = scalar_lea.vmem %s0, %s164
      %p166 = scmp.lt.s32.totalorder %s14, 1
      %s167 = scalar_select %p166, %s14, 1
      %s168 = smul.addr %s167, 4
      %s169 = smul.addr %s168, 4
      %s170 = scalar_lea.vmem %s3, %s169
      %v172 = vld [vmem:[%s165] sm:$0xf]
      %v173 = vld [vmem:[%s165 + $0x4] sm:$0xf]
      %v174 = vunpack.c.l.bf16 %v172
      %v175 = vunpack.c.l.bf16 %v173
      %vm178 = vcmask 1040384
      %v179 = vrot.slane %v174, 7
      %v180 = vrot.slane %v175, 7
      %v181 = vsel %vm178, %v179, %v180
      %v184 = vsel %vm178, 0.0, %v179
      %vm185 = vcmask 1046528
      %v186 = vrot.slane %v174, 1
      %v187 = vrot.slane %v175, 1
      %v188 = vsel %vm185, %v186, %v187
      %v191 = vsel %vm185, %v187, 0.0
      %v192 = vpack.c.bf16 %v181, %v184
      %v193 = vld [vmem:[%s1] sm:$0xff]
      %v194 = vld [vmem:[%s1 + $0x8] sm:$0xff]
      %v195 = vld [vmem:[%s1 + $0x10] sm:$0xff]
      %v196 = vld [vmem:[%s1 + $0x18] sm:$0xff]
      %v197 = vld [vmem:[%s1 + $0x20] sm:$0xff]
      %v198 = vld [vmem:[%s1 + $0x28] sm:$0xff]
      %v199 = vld [vmem:[%s1 + $0x30] sm:$0xff]
      %v200 = vld [vmem:[%s1 + $0x38] sm:$0xff]
      %s201 = scalar_lea.vmem %s1, 64
      %v202 = vld [vmem:[%s201] sm:$0xff]
      %v203 = vld [vmem:[%s201 + $0x8] sm:$0xff]
      %v204 = vld [vmem:[%s201 + $0x10] sm:$0xff]
      %v205 = vld [vmem:[%s201 + $0x18] sm:$0xff]
      %v206 = vld [vmem:[%s201 + $0x20] sm:$0xff]
      %v207 = vld [vmem:[%s201 + $0x28] sm:$0xff]
      %v208 = vld [vmem:[%s201 + $0x30] sm:$0xff]
      %v209 = vld [vmem:[%s201 + $0x38] sm:$0xff]
      %v212 = vunpack.c.l.b16 %v172
      %v213 = vunpack.c.l.b16 %v173
      %v214 = vpack.c.b16 %v213, %v212
      %v223 = vunpack.c.l.b16 %v202
      %v224 = vunpack.c.h.b16 %v202
      %v225 = vunpack.c.l.b16 %v203
      %v226 = vunpack.c.h.b16 %v203
      %v227 = vunpack.c.l.b16 %v204
      %v228 = vunpack.c.h.b16 %v204
      %v229 = vunpack.c.l.b16 %v205
      %v230 = vunpack.c.h.b16 %v205
      %v231 = vunpack.c.l.b16 %v206
      %v232 = vunpack.c.h.b16 %v206
      %v233 = vunpack.c.l.b16 %v207
      %v234 = vunpack.c.h.b16 %v207
      %v235 = vunpack.c.l.b16 %v208
      %v236 = vunpack.c.h.b16 %v208
      %v237 = vunpack.c.l.b16 %v209
      %v238 = vunpack.c.h.b16 %v209
      %v239 = vpack.c.b16 %v225, %v223
      %v240 = vpack.c.b16 %v226, %v224
      %v241 = vpack.c.b16 %v229, %v227
      %v242 = vpack.c.b16 %v230, %v228
      %v243 = vpack.c.b16 %v233, %v231
      %v244 = vpack.c.b16 %v234, %v232
      %v245 = vpack.c.b16 %v237, %v235
      %v246 = vpack.c.b16 %v238, %v236
      %vm255 = vcmask 523264
      %v257 = vsel %vm255, %v214, 0
      %259 = vmatprep.subr.bf16.mxu0 %v240
      %260 = vmatpush1.bf16.msra.mxu0 %v239
      %261 = vmatprep.subr.bf16.mxu0 %v242
      %262 = vmatpush1.bf16.msra.mxu0 %v241
      %263 = vmatprep.subr.bf16.mxu0 %v244
      %264 = vmatpush1.bf16.msra.mxu0 %v243
      %265 = vmatprep.subr.bf16.mxu0 %v246
      %266 = vmatpush1.bf16.msra.mxu0 %v245
      %267 = vmatprep.subr.bf16.mxu0 0
      %268 = vmatpush1.bf16.msra.mxu0 0
      %269 = vmatprep.subr.bf16.mxu0 0
      %270 = vmatpush1.bf16.msra.mxu0 0
      %271 = vmatprep.subr.bf16.mxu0 0
      %272 = vmatpush1.bf16.msra.mxu0 0
      %273 = vmatprep.subr.bf16.mxu0 0
      %274 = vmatpush1.bf16.msra.mxu0 0
      %275 = vmatprep.subr.bf16.mxu0 0
      %276 = vmatpush1.bf16.msra.mxu0 0
      %277 = vmatprep.subr.bf16.mxu0 0
      %278 = vmatpush1.bf16.msra.mxu0 0
      %279 = vmatprep.subr.bf16.mxu0 0
      %280 = vmatpush1.bf16.msra.mxu0 0
      %281 = vmatprep.subr.bf16.mxu0 0
      %282 = vmatpush1.bf16.msra.mxu0 0
      %283 = vmatprep.subr.bf16.mxu0 0
      %284 = vmatpush1.bf16.msra.mxu0 0
      %285 = vmatprep.subr.bf16.mxu0 0
      %286 = vmatpush1.bf16.msra.mxu0 0
      %287 = vmatprep.subr.bf16.mxu0 0
      %288 = vmatpush1.bf16.msra.mxu0 0
      %289 = vmatprep.subr.bf16.mxu0 0
      %290 = vmatpush1.bf16.msra.mxu0 0
      %291 = vmatprep.mubr.bf16.mxu0 0
      %292 = vmatmul.mubr.bf16.gmra.mrb[0].mxu0 %v257
      %v293 = vpop.f32.mrb[0].mxu0
      %v294 = vadd.f32 0.0, %v293
      %v295 = vpop.f32.mrb[0].mxu0
      %v296 = vadd.f32 0.0, %v295
      %v297 = vpop.f32.mrb[0].mxu0
      %v298 = vadd.f32 0.0, %v297
      %v299 = vpop.f32.mrb[0].mxu0
      %v300 = vadd.f32 0.0, %v299
      %301 = vdwg.mxu0
      %v310 = vunpack.c.l.b16 %v193
      %v311 = vunpack.c.h.b16 %v193
      %v312 = vunpack.c.l.b16 %v194
      %v313 = vunpack.c.h.b16 %v194
      %v314 = vunpack.c.l.b16 %v195
      %v315 = vunpack.c.h.b16 %v195
      %v316 = vunpack.c.l.b16 %v196
      %v317 = vunpack.c.h.b16 %v196
      %v318 = vunpack.c.l.b16 %v197
      %v319 = vunpack.c.h.b16 %v197
      %v320 = vunpack.c.l.b16 %v198
      %v321 = vunpack.c.h.b16 %v198
      %v322 = vunpack.c.l.b16 %v199
      %v323 = vunpack.c.h.b16 %v199
      %v324 = vunpack.c.l.b16 %v200
      %v325 = vunpack.c.h.b16 %v200
      %v326 = vpack.c.b16 %v312, %v310
      %v327 = vpack.c.b16 %v313, %v311
      %v328 = vpack.c.b16 %v316, %v314
      %v329 = vpack.c.b16 %v317, %v315
      %v330 = vpack.c.b16 %v320, %v318
      %v331 = vpack.c.b16 %v321, %v319
      %v332 = vpack.c.b16 %v324, %v322
      %v333 = vpack.c.b16 %v325, %v323
      %v343 = vsel %vm255, %v192, 0
      %345 = vmatprep.subr.bf16.mxu0 %v327
      %346 = vmatpush1.bf16.msra.mxu0 %v326
      %347 = vmatprep.subr.bf16.mxu0 %v329
      %348 = vmatpush1.bf16.msra.mxu0 %v328
      %349 = vmatprep.subr.bf16.mxu0 %v331
      %350 = vmatpush1.bf16.msra.mxu0 %v330
      %351 = vmatprep.subr.bf16.mxu0 %v333
      %352 = vmatpush1.bf16.msra.mxu0 %v332
      %353 = vmatprep.subr.bf16.mxu0 0
      %354 = vmatpush1.bf16.msra.mxu0 0
      %355 = vmatprep.subr.bf16.mxu0 0
      %356 = vmatpush1.bf16.msra.mxu0 0
      %357 = vmatprep.subr.bf16.mxu0 0
      %358 = vmatpush1.bf16.msra.mxu0 0
      %359 = vmatprep.subr.bf16.mxu0 0
      %360 = vmatpush1.bf16.msra.mxu0 0
      %361 = vmatprep.subr.bf16.mxu0 0
      %362 = vmatpush1.bf16.msra.mxu0 0
      %363 = vmatprep.subr.bf16.mxu0 0
      %364 = vmatpush1.bf16.msra.mxu0 0
      %365 = vmatprep.subr.bf16.mxu0 0
      %366 = vmatpush1.bf16.msra.mxu0 0
      %367 = vmatprep.subr.bf16.mxu0 0
      %368 = vmatpush1.bf16.msra.mxu0 0
      %369 = vmatprep.subr.bf16.mxu0 0
      %370 = vmatpush1.bf16.msra.mxu0 0
      %371 = vmatprep.subr.bf16.mxu0 0
      %372 = vmatpush1.bf16.msra.mxu0 0
      %373 = vmatprep.subr.bf16.mxu0 0
      %374 = vmatpush1.bf16.msra.mxu0 0
      %375 = vmatprep.subr.bf16.mxu0 0
      %376 = vmatpush1.bf16.msra.mxu0 0
      %377 = vmatprep.mubr.bf16.mxu0 0
      %378 = vmatmul.mubr.bf16.gmra.mrb[0].mxu0 %v343
      %v379 = vpop.f32.mrb[0].mxu0
      %v380 = vadd.f32 %v294, %v379
      %v381 = vpop.f32.mrb[0].mxu0
      %v382 = vadd.f32 %v296, %v381
      %v383 = vpop.f32.mrb[0].mxu0
      %v384 = vadd.f32 %v298, %v383
      %v385 = vpop.f32.mrb[0].mxu0
      %v386 = vadd.f32 %v300, %v385
      %387 = vdwg.mxu0
      %v388 = vpack.c.bf16 %v191, %v188
      %s389 = scalar_lea.vmem %s1, 128
      %v390 = vld [vmem:[%s389] sm:$0xff]
      %v391 = vld [vmem:[%s389 + $0x8] sm:$0xff]
      %v392 = vld [vmem:[%s389 + $0x10] sm:$0xff]
      %v393 = vld [vmem:[%s389 + $0x18] sm:$0xff]
      %v394 = vld [vmem:[%s389 + $0x20] sm:$0xff]
      %v395 = vld [vmem:[%s389 + $0x28] sm:$0xff]
      %v396 = vld [vmem:[%s389 + $0x30] sm:$0xff]
      %v397 = vld [vmem:[%s389 + $0x38] sm:$0xff]
      %v406 = vunpack.c.l.b16 %v390
      %v407 = vunpack.c.h.b16 %v390
      %v408 = vunpack.c.l.b16 %v391
      %v409 = vunpack.c.h.b16 %v391
      %v410 = vunpack.c.l.b16 %v392
      %v411 = vunpack.c.h.b16 %v392
      %v412 = vunpack.c.l.b16 %v393
      %v413 = vunpack.c.h.b16 %v393
      %v414 = vunpack.c.l.b16 %v394
      %v415 = vunpack.c.h.b16 %v394
      %v416 = vunpack.c.l.b16 %v395
      %v417 = vunpack.c.h.b16 %v395
      %v418 = vunpack.c.l.b16 %v396
      %v419 = vunpack.c.h.b16 %v396
      %v420 = vunpack.c.l.b16 %v397
      %v421 = vunpack.c.h.b16 %v397
      %v422 = vpack.c.b16 %v408, %v406
      %v423 = vpack.c.b16 %v409, %v407
      %v424 = vpack.c.b16 %v412, %v410
      %v425 = vpack.c.b16 %v413, %v411
      %v426 = vpack.c.b16 %v416, %v414
      %v427 = vpack.c.b16 %v417, %v415
      %v428 = vpack.c.b16 %v420, %v418
      %v429 = vpack.c.b16 %v421, %v419
      %v439 = vsel %vm255, %v388, 0
      %441 = vmatprep.subr.bf16.mxu0 %v423
      %442 = vmatpush1.bf16.msra.mxu0 %v422
      %443 = vmatprep.subr.bf16.mxu0 %v425
      %444 = vmatpush1.bf16.msra.mxu0 %v424
      %445 = vmatprep.subr.bf16.mxu0 %v427
      %446 = vmatpush1.bf16.msra.mxu0 %v426
      %447 = vmatprep.subr.bf16.mxu0 %v429
      %448 = vmatpush1.bf16.msra.mxu0 %v428
      %449 = vmatprep.subr.bf16.mxu0 0
      %450 = vmatpush1.bf16.msra.mxu0 0
      %451 = vmatprep.subr.bf16.mxu0 0
      %452 = vmatpush1.bf16.msra.mxu0 0
      %453 = vmatprep.subr.bf16.mxu0 0
      %454 = vmatpush1.bf16.msra.mxu0 0
      %455 = vmatprep.subr.bf16.mxu0 0
      %456 = vmatpush1.bf16.msra.mxu0 0
      %457 = vmatprep.subr.bf16.mxu0 0
      %458 = vmatpush1.bf16.msra.mxu0 0
      %459 = vmatprep.subr.bf16.mxu0 0
      %460 = vmatpush1.bf16.msra.mxu0 0
      %461 = vmatprep.subr.bf16.mxu0 0
      %462 = vmatpush1.bf16.msra.mxu0 0
      %463 = vmatprep.subr.bf16.mxu0 0
      %464 = vmatpush1.bf16.msra.mxu0 0
      %465 = vmatprep.subr.bf16.mxu0 0
      %466 = vmatpush1.bf16.msra.mxu0 0
      %467 = vmatprep.subr.bf16.mxu0 0
      %468 = vmatpush1.bf16.msra.mxu0 0
      %469 = vmatprep.subr.bf16.mxu0 0
      %470 = vmatpush1.bf16.msra.mxu0 0
      %471 = vmatprep.subr.bf16.mxu0 0
      %472 = vmatpush1.bf16.msra.mxu0 0
      %473 = vmatprep.mubr.bf16.mxu0 0
      %474 = vmatmul.mubr.bf16.gmra.mrb[0].mxu0 %v439
      %v475 = vpop.f32.mrb[0].mxu0
      %v476 = vadd.f32 0.0, %v475
      %v477 = vpop.f32.mrb[0].mxu0
      %v478 = vadd.f32 0.0, %v477
      %v479 = vpop.f32.mrb[0].mxu0
      %v480 = vadd.f32 0.0, %v479
      %v481 = vpop.f32.mrb[0].mxu0
      %v482 = vadd.f32 0.0, %v481
      %483 = vdwg.mxu0
      %v484 = vadd.f32 %v380, %v476
      %v485 = vadd.f32 %v382, %v478
      %v486 = vadd.f32 %v384, %v480
      %v487 = vadd.f32 %v386, %v482
      %v488 = vld [vmem:[%s2] sm:$0x3]
      %v490 = vlaneseq
      %v491 = vshrl.u32 %v490, 7
      %v492 = vsub.s32 0, %v491
      %v493 = vrot.slane %v488, %v492
      %v494 = vlaneseq
      %v495 = vshrl.u32 %v494, 7
      %v496 = vsub.s32 1, %v495
      %v497 = vrot.slane %v488, %v496
      %v500 = vadd.f32 %v484, %v493
      %v501 = vadd.f32 %v485, %v497
      %v502 = vadd.f32 %v486, %v493
      %v503 = vadd.f32 %v487, %v497
      %v504 = vpack.c.bf16 %v502, %v500
      %v505 = vpack.c.bf16 %v503, %v501
      %v508 = vunpack.c.l.b16 %v504
      %v509 = vunpack.c.l.b16 %v505
      %v510 = vunpack.c.h.b16 %v504
      %v511 = vunpack.c.h.b16 %v505
      %v512 = vpack.c.b16 %v509, %v508
      %v513 = vpack.c.b16 %v511, %v510
      %516 = vst [vmem:[%s170] sm:$0xff] %v512
      %517 = vst [vmem:[%s170 + $0x8] sm:$0xff] %v513
      %p518 = scmp.lt.s32.totalorder %s14, 1
      %s519 = scalar_select %p518, %s14, 1
      %s520 = smul.addr %s519, 4
      %s521 = smul.addr %s520, 4
      %s522 = scalar_lea.vmem %s3, %s521
      // Predicated region
      $region33: #{up_forward.2} parent=31 // pred_check
        %p523 = pneg %p100
      $region34: #{up_forward.2} parent=31 // pred_check_branch
        %525 = sbr.rel (%p523) target = $region36
      $region35: #{up_forward.2} parent=31 // pred_region
        _
      $region36: #{up_forward.2} parent=31 // pred_fallthru
        _
    $region32: #{up_forward.2} parent=5 // pred_fallthru
      _
    %p526 = scmp.le.s32.totalorder 2, %s9
    // Predicated region
    $region37: #{up_forward.2} parent=5 // pred_check
      %p527 = pneg %p526
    $region38: #{up_forward.2} parent=5 // pred_check_branch
      %529 = sbr.rel (%p527) target = $region40
    $region39: #{up_forward.2} parent=5 // pred_region
      %s530 = ssub.s32 %s9, 2
      // Predicated region
      $region41: #{up_forward.2} parent=39 // pred_check
        %p531 = pneg %p106
      $region42: #{up_forward.2} parent=39 // pred_check_branch
        %533 = sbr.rel (%p531) target = $region44
      $region43: #{up_forward.2} parent=39 // pred_region
        %p534 = scmp.lt.s32.totalorder %s15, 1
        %s535 = scalar_select %p534, %s15, 1
        %s536 = smul.addr %s535, 4
        %s537 = smul.addr %s536, 4
        %s538 = scalar_lea.vmem %s3, %s537
      $region44: #{up_forward.2} parent=39 // pred_fallthru
        _
    $region40: #{up_forward.2} parent=5 // pred_fallthru
      _
  $region6: #{up_forward.2} parent=0 // loop_footer
    %s13 = sadd.s32 1, %s9
  $region7: #{up_forward.2} parent=0 // loop_footer_branch
    %8 = sbr.rel target = $region3
  $region8: #{up_forward.2} parent=0 // loop_exit
    _

// kernel: up_forward.3
$region0: #{up_forward.3}
  #allocation0 [shape = 'u32[]', space=smem, size = 0x4, offset = 0x4, fixed_abs, tag = 'smem constant byte address 0x4 - core index']
  #allocation1 [shape = 'u32[144,128]{1,0:T(1,128)}', space=vmem, size = 0x12000, scoped, tag = 'internal scratch']
  %s0 = inlined_call_operand.vmem [shape: bf16[2,32,128], index: 0, kind: input, shape index: {}]
  %s1 = inlined_call_operand.vmem [shape: bf16[2,32,128], index: 1, kind: input, shape index: {}]
  %s2 = inlined_call_operand.vmem [shape: bf16[128,128], index: 2, kind: input, shape index: {}]
  %s3 = inlined_call_operand.vmem [shape: bf16[128,128], index: 3, kind: input, shape index: {}]
  %s4 = inlined_call_operand.vmem [shape: f32[1,128], index: 4, kind: input, shape index: {}]
  %s5 = inlined_call_operand.vmem [shape: bf16[3,128,128], index: 5, kind: input, shape index: {}]
  %s6 = inlined_call_operand.vmem [shape: f32[1,128], index: 6, kind: input, shape index: {}]
  %s7 = inlined_call_operand.vmem [shape: bf16[3,128,128], index: 7, kind: input, shape index: {}]
  %s8 = inlined_call_operand.vmem [shape: f32[1,128], index: 8, kind: input, shape index: {}]
  %s9 = inlined_call_operand.vmem [shape: bf16[3,128,128], index: 9, kind: input, shape index: {}]
  %s10 = inlined_call_operand.vmem [shape: f32[1,128], index: 10, kind: input, shape index: {}]
  %s11 = inlined_call_operand.vmem [shape: bf16[3,128,128], index: 11, kind: input, shape index: {}]
  %s12 = inlined_call_operand.vmem [shape: f32[1,128], index: 12, kind: input, shape index: {}]
  %s13 = inlined_call_operand.vmem [shape: f32[2,32,128], index: 13, kind: output, shape index: {}]
  %s14 = sld [smem:[#allocation0]]
  $region85: #{up_forward.3} parent=0
    _
  %s16 = ssub.s32 1, %s14
  %s17 = scalar_select 0, %s16, %s14
  loop: start=0, step=1, limit=4
  $region2: #{up_forward.3} parent=0 // loop_pre_header
    _
  $region3: #{up_forward.3} parent=0 // loop_header
    %s19 = sphi 0, %s23
    %p20 = scmp.ge.s32.totalorder %s19, 4
    %s29 = sphi 0, %s31
    %s32 = sphi 0, %s29
    %s33 = sphi 0, %s32
    %s49 = sphi 0, %s33
    %s55 = sphi 0, %s57
    %s58 = sphi 0, %s55
    %s59 = sphi 0, %s58
    %s75 = sphi 0, %s59
    %s79 = sphi 0, %s79
    %s81 = sphi 0, %s79
    %s82 = sphi 0, %s81
    %s96 = sphi 0, %s82
    %s100 = sphi 0, %s100
    %s102 = sphi 0, %s100
    %s103 = sphi 0, %s102
    %s117 = sphi 0, %s103
    %s121 = sphi 0, %s121
    %s123 = sphi 0, %s121
    %s124 = sphi 0, %s123
    %s138 = sphi 0, %s124
    %s142 = sphi 0, %s142
    %s144 = sphi 0, %s142
    %s145 = sphi 0, %s144
    %s159 = sphi 0, %s145
    %s163 = sphi 0, %s163
    %s165 = sphi 0, %s163
    %s166 = sphi 0, %s165
    %s180 = sphi 0, %s166
    %s184 = sphi 0, %s184
    %s186 = sphi 0, %s184
    %s187 = sphi 0, %s186
    %s201 = sphi 0, %s187
    %s205 = sphi 0, %s205
    %s207 = sphi 0, %s205
    %s208 = sphi 0, %s207
    %s222 = sphi 0, %s208
    %s226 = sphi 0, %s226
    %s228 = sphi 0, %s226
    %s229 = sphi 0, %s228
    %s243 = sphi 0, %s229
    %s247 = sphi 0, %s247
    %s249 = sphi 0, %s247
    %s250 = sphi 0, %s249
    %s264 = sphi 0, %s250
    %s268 = sphi 0, %s268
    %s270 = sphi 0, %s268
    %s271 = sphi 0, %s270
    %s285 = sphi 0, %s271
    %s289 = sphi 0, %s289
    %s291 = sphi 0, %s289
    %s292 = sphi 0, %s291
    %s306 = sphi 0, %s292
    %s312 = sphi 0, %s314
    %s315 = sphi 0, %s312
    %s316 = sphi 0, %s315
    %s332 = sphi 0, %s316
  $region4: #{up_forward.3} parent=0 // loop_header_branch
    %22 = sbr.rel (%p20) target = $region8
  $region5: #{up_forward.3} parent=0 // loop_body
    %s24 = ssub.s32 %s19, 1
    %s25 = ssub.s32 %s19, 2
    %s26 = sadd.s32 %s19, 1
    %s27 = ssub.s32 %s19, %s26
    %p28 = scmp.eq.s32.totalorder %s27, 0
    %s30 = sadd.s32 %s29, 1
    %s31 = scalar_select %p28, %s29, %s30
    %p34 = pneg %p28
    %p35 = scmp.eq.s32.totalorder %s19, 1
    %p36 = por %p34, %p35
    %p37 = scmp.ne.s32.totalorder %s29, %s32
    %p38 = scmp.eq.s32.totalorder %s19, 0
    %p39 = por %p37, %p38
    %p40 = scmp.ne.s32.totalorder %s29, %s32
    %p41 = scmp.eq.s32.totalorder %s24, 1
    %p42 = por %p40, %p41
    %p43 = scmp.ne.s32.totalorder %s32, %s33
    %p44 = scmp.eq.s32.totalorder %s24, 0
    %p45 = por %p43, %p44
    %p46 = scmp.ne.s32.totalorder %s32, %s33
    %p47 = scmp.eq.s32.totalorder %s25, 1
    %p48 = por %p46, %p47
    %p50 = scmp.ne.s32.totalorder %s33, %s49
    %p51 = scmp.eq.s32.totalorder %s25, 0
    %p52 = por %p50, %p51
    %s53 = ssub.s32 %s19, %s26
    %p54 = scmp.eq.s32.totalorder %s53, 0
    %s56 = sadd.s32 %s55, 1
    %s57 = scalar_select %p54, %s55, %s56
    %p60 = pneg %p54
    %p61 = scmp.eq.s32.totalorder %s19, 1
    %p62 = por %p60, %p61
    %p63 = scmp.ne.s32.totalorder %s55, %s58
    %p64 = scmp.eq.s32.totalorder %s19, 0
    %p65 = por %p63, %p64
    %p66 = scmp.ne.s32.totalorder %s55, %s58
    %p67 = scmp.eq.s32.totalorder %s24, 1
    %p68 = por %p66, %p67
    %p69 = scmp.ne.s32.totalorder %s58, %s59
    %p70 = scmp.eq.s32.totalorder %s24, 0
    %p71 = por %p69, %p70
    %p72 = scmp.ne.s32.totalorder %s58, %s59
    %p73 = scmp.eq.s32.totalorder %s25, 1
    %p74 = por %p72, %p73
    %p76 = scmp.ne.s32.totalorder %s59, %s75
    %p77 = scmp.eq.s32.totalorder %s25, 0
    %p78 = por %p76, %p77
    %s80 = sadd.s32 %s79, 1
    %p83 = scmp.eq.s32.totalorder %s19, 1
    %p84 = scmp.ne.s32.totalorder %s79, %s81
    %p85 = scmp.eq.s32.totalorder %s19, 0
    %p86 = por %p84, %p85
    %p87 = scmp.ne.s32.totalorder %s79, %s81
    %p88 = scmp.eq.s32.totalorder %s24, 1
    %p89 = por %p87, %p88
    %p90 = scmp.ne.s32.totalorder %s81, %s82
    %p91 = scmp.eq.s32.totalorder %s24, 0
    %p92 = por %p90, %p91
    %p93 = scmp.ne.s32.totalorder %s81, %s82
    %p94 = scmp.eq.s32.totalorder %s25, 1
    %p95 = por %p93, %p94
    %p97 = scmp.ne.s32.totalorder %s82, %s96
    %p98 = scmp.eq.s32.totalorder %s25, 0
    %p99 = por %p97, %p98
    %s101 = sadd.s32 %s100, 1
    %p104 = scmp.eq.s32.totalorder %s19, 1
    %p105 = scmp.ne.s32.totalorder %s100, %s102
    %p106 = scmp.eq.s32.totalorder %s19, 0
    %p107 = por %p105, %p106
    %p108 = scmp.ne.s32.totalorder %s100, %s102
    %p109 = scmp.eq.s32.totalorder %s24, 1
    %p110 = por %p108, %p109
    %p111 = scmp.ne.s32.totalorder %s102, %s103
    %p112 = scmp.eq.s32.totalorder %s24, 0
    %p113 = por %p111, %p112
    %p114 = scmp.ne.s32.totalorder %s102, %s103
    %p115 = scmp.eq.s32.totalorder %s25, 1
    %p116 = por %p114, %p115
    %p118 = scmp.ne.s32.totalorder %s103, %s117
    %p119 = scmp.eq.s32.totalorder %s25, 0
    %p120 = por %p118, %p119
    %s122 = sadd.s32 %s121, 1
    %p125 = scmp.eq.s32.totalorder %s19, 1
    %p126 = scmp.ne.s32.totalorder %s121, %s123
    %p127 = scmp.eq.s32.totalorder %s19, 0
    %p128 = por %p126, %p127
    %p129 = scmp.ne.s32.totalorder %s121, %s123
    %p130 = scmp.eq.s32.totalorder %s24, 1
    %p131 = por %p129, %p130
    %p132 = scmp.ne.s32.totalorder %s123, %s124
    %p133 = scmp.eq.s32.totalorder %s24, 0
    %p134 = por %p132, %p133
    %p135 = scmp.ne.s32.totalorder %s123, %s124
    %p136 = scmp.eq.s32.totalorder %s25, 1
    %p137 = por %p135, %p136
    %p139 = scmp.ne.s32.totalorder %s124, %s138
    %p140 = scmp.eq.s32.totalorder %s25, 0
    %p141 = por %p139, %p140
    %s143 = sadd.s32 %s142, 1
    %p146 = scmp.eq.s32.totalorder %s19, 1
    %p147 = scmp.ne.s32.totalorder %s142, %s144
    %p148 = scmp.eq.s32.totalorder %s19, 0
    %p149 = por %p147, %p148
    %p150 = scmp.ne.s32.totalorder %s142, %s144
    %p151 = scmp.eq.s32.totalorder %s24, 1
    %p152 = por %p150, %p151
    %p153 = scmp.ne.s32.totalorder %s144, %s145
    %p154 = scmp.eq.s32.totalorder %s24, 0
    %p155 = por %p153, %p154
    %p156 = scmp.ne.s32.totalorder %s144, %s145
    %p157 = scmp.eq.s32.totalorder %s25, 1
    %p158 = por %p156, %p157
    %p160 = scmp.ne.s32.totalorder %s145, %s159
    %p161 = scmp.eq.s32.totalorder %s25, 0
    %p162 = por %p160, %p161
    %s164 = sadd.s32 %s163, 1
    %p167 = scmp.eq.s32.totalorder %s19, 1
    %p168 = scmp.ne.s32.totalorder %s163, %s165
    %p169 = scmp.eq.s32.totalorder %s19, 0
    %p170 = por %p168, %p169
    %p171 = scmp.ne.s32.totalorder %s163, %s165
    %p172 = scmp.eq.s32.totalorder %s24, 1
    %p173 = por %p171, %p172
    %p174 = scmp.ne.s32.totalorder %s165, %s166
    %p175 = scmp.eq.s32.totalorder %s24, 0
    %p176 = por %p174, %p175
    %p177 = scmp.ne.s32.totalorder %s165, %s166
    %p178 = scmp.eq.s32.totalorder %s25, 1
    %p179 = por %p177, %p178
    %p181 = scmp.ne.s32.totalorder %s166, %s180
    %p182 = scmp.eq.s32.totalorder %s25, 0
    %p183 = por %p181, %p182
    %s185 = sadd.s32 %s184, 1
    %p188 = scmp.eq.s32.totalorder %s19, 1
    %p189 = scmp.ne.s32.totalorder %s184, %s186
    %p190 = scmp.eq.s32.totalorder %s19, 0
    %p191 = por %p189, %p190
    %p192 = scmp.ne.s32.totalorder %s184, %s186
    %p193 = scmp.eq.s32.totalorder %s24, 1
    %p194 = por %p192, %p193
    %p195 = scmp.ne.s32.totalorder %s186, %s187
    %p196 = scmp.eq.s32.totalorder %s24, 0
    %p197 = por %p195, %p196
    %p198 = scmp.ne.s32.totalorder %s186, %s187
    %p199 = scmp.eq.s32.totalorder %s25, 1
    %p200 = por %p198, %p199
    %p202 = scmp.ne.s32.totalorder %s187, %s201
    %p203 = scmp.eq.s32.totalorder %s25, 0
    %p204 = por %p202, %p203
    %s206 = sadd.s32 %s205, 1
    %p209 = scmp.eq.s32.totalorder %s19, 1
    %p210 = scmp.ne.s32.totalorder %s205, %s207
    %p211 = scmp.eq.s32.totalorder %s19, 0
    %p212 = por %p210, %p211
    %p213 = scmp.ne.s32.totalorder %s205, %s207
    %p214 = scmp.eq.s32.totalorder %s24, 1
    %p215 = por %p213, %p214
    %p216 = scmp.ne.s32.totalorder %s207, %s208
    %p217 = scmp.eq.s32.totalorder %s24, 0
    %p218 = por %p216, %p217
    %p219 = scmp.ne.s32.totalorder %s207, %s208
    %p220 = scmp.eq.s32.totalorder %s25, 1
    %p221 = por %p219, %p220
    %p223 = scmp.ne.s32.totalorder %s208, %s222
    %p224 = scmp.eq.s32.totalorder %s25, 0
    %p225 = por %p223, %p224
    %s227 = sadd.s32 %s226, 1
    %p230 = scmp.eq.s32.totalorder %s19, 1
    %p231 = scmp.ne.s32.totalorder %s226, %s228
    %p232 = scmp.eq.s32.totalorder %s19, 0
    %p233 = por %p231, %p232
    %p234 = scmp.ne.s32.totalorder %s226, %s228
    %p235 = scmp.eq.s32.totalorder %s24, 1
    %p236 = por %p234, %p235
    %p237 = scmp.ne.s32.totalorder %s228, %s229
    %p238 = scmp.eq.s32.totalorder %s24, 0
    %p239 = por %p237, %p238
    %p240 = scmp.ne.s32.totalorder %s228, %s229
    %p241 = scmp.eq.s32.totalorder %s25, 1
    %p242 = por %p240, %p241
    %p244 = scmp.ne.s32.totalorder %s229, %s243
    %p245 = scmp.eq.s32.totalorder %s25, 0
    %p246 = por %p244, %p245
    %s248 = sadd.s32 %s247, 1
    %p251 = scmp.eq.s32.totalorder %s19, 1
    %p252 = scmp.ne.s32.totalorder %s247, %s249
    %p253 = scmp.eq.s32.totalorder %s19, 0
    %p254 = por %p252, %p253
    %p255 = scmp.ne.s32.totalorder %s247, %s249
    %p256 = scmp.eq.s32.totalorder %s24, 1
    %p257 = por %p255, %p256
    %p258 = scmp.ne.s32.totalorder %s249, %s250
    %p259 = scmp.eq.s32.totalorder %s24, 0
    %p260 = por %p258, %p259
    %p261 = scmp.ne.s32.totalorder %s249, %s250
    %p262 = scmp.eq.s32.totalorder %s25, 1
    %p263 = por %p261, %p262
    %p265 = scmp.ne.s32.totalorder %s250, %s264
    %p266 = scmp.eq.s32.totalorder %s25, 0
    %p267 = por %p265, %p266
    %s269 = sadd.s32 %s268, 1
    %p272 = scmp.eq.s32.totalorder %s19, 1
    %p273 = scmp.ne.s32.totalorder %s268, %s270
    %p274 = scmp.eq.s32.totalorder %s19, 0
    %p275 = por %p273, %p274
    %p276 = scmp.ne.s32.totalorder %s268, %s270
    %p277 = scmp.eq.s32.totalorder %s24, 1
    %p278 = por %p276, %p277
    %p279 = scmp.ne.s32.totalorder %s270, %s271
    %p280 = scmp.eq.s32.totalorder %s24, 0
    %p281 = por %p279, %p280
    %p282 = scmp.ne.s32.totalorder %s270, %s271
    %p283 = scmp.eq.s32.totalorder %s25, 1
    %p284 = por %p282, %p283
    %p286 = scmp.ne.s32.totalorder %s271, %s285
    %p287 = scmp.eq.s32.totalorder %s25, 0
    %p288 = por %p286, %p287
    %s290 = sadd.s32 %s289, 1
    %p293 = scmp.eq.s32.totalorder %s19, 1
    %p294 = scmp.ne.s32.totalorder %s289, %s291
    %p295 = scmp.eq.s32.totalorder %s19, 0
    %p296 = por %p294, %p295
    %p297 = scmp.ne.s32.totalorder %s289, %s291
    %p298 = scmp.eq.s32.totalorder %s24, 1
    %p299 = por %p297, %p298
    %p300 = scmp.ne.s32.totalorder %s291, %s292
    %p301 = scmp.eq.s32.totalorder %s24, 0
    %p302 = por %p300, %p301
    %p303 = scmp.ne.s32.totalorder %s291, %s292
    %p304 = scmp.eq.s32.totalorder %s25, 1
    %p305 = por %p303, %p304
    %p307 = scmp.ne.s32.totalorder %s292, %s306
    %p308 = scmp.eq.s32.totalorder %s25, 0
    %p309 = por %p307, %p308
    %s310 = ssub.s32 %s19, %s26
    %p311 = scmp.eq.s32.totalorder %s310, 0
    %s313 = sadd.s32 %s312, 1
    %s314 = scalar_select %p311, %s312, %s313
    %p317 = pneg %p311
    %p318 = scmp.eq.s32.totalorder %s19, 1
    %p319 = por %p317, %p318
    %p320 = scmp.ne.s32.totalorder %s312, %s315
    %p321 = scmp.eq.s32.totalorder %s19, 0
    %p322 = por %p320, %p321
    %p323 = scmp.ne.s32.totalorder %s312, %s315
    %p324 = scmp.eq.s32.totalorder %s24, 1
    %p325 = por %p323, %p324
    %p326 = scmp.ne.s32.totalorder %s315, %s316
    %p327 = scmp.eq.s32.totalorder %s24, 0
    %p328 = por %p326, %p327
    %p329 = scmp.ne.s32.totalorder %s315, %s316
    %p330 = scmp.eq.s32.totalorder %s25, 1
    %p331 = por %p329, %p330
    %p333 = scmp.ne.s32.totalorder %s316, %s332
    %p334 = scmp.eq.s32.totalorder %s25, 0
    %p335 = por %p333, %p334
    %p336 = scmp.le.s32.totalorder 1, %s19
    %p337 = scmp.lt.s32.totalorder %s19, 3
    %p338 = pnand %p336, %p337
    %p339 = pneg %p338
    // Predicated region
    $region9: #{up_forward.3} parent=5 // pred_check
      _
    $region10: #{up_forward.3} parent=5 // pred_check_branch
      %341 = sbr.rel (%p338) target = $region12
    $region11: #{up_forward.3} parent=5 // pred_region
      %s342 = ssub.s32 %s19, 1
      // Predicated region
      $region13: #{up_forward.3} parent=11 // pred_check
        %p343 = pneg %p92
      $region14: #{up_forward.3} parent=11 // pred_check_branch
        %345 = sbr.rel (%p343) target = $region16
      $region15: #{up_forward.3} parent=11 // pred_region
        _
      $region16: #{up_forward.3} parent=11 // pred_fallthru
        _
      // Predicated region
      $region17: #{up_forward.3} parent=11 // pred_check
        %p346 = pneg %p113
      $region18: #{up_forward.3} parent=11 // pred_check_branch
        %348 = sbr.rel (%p346) target = $region20
      $region19: #{up_forward.3} parent=11 // pred_region
        _
      $region20: #{up_forward.3} parent=11 // pred_fallthru
        _
      // Predicated region
      $region21: #{up_forward.3} parent=11 // pred_check
        %p349 = pneg %p134
      $region22: #{up_forward.3} parent=11 // pred_check_branch
        %351 = sbr.rel (%p349) target = $region24
      $region23: #{up_forward.3} parent=11 // pred_region
        _
      $region24: #{up_forward.3} parent=11 // pred_fallthru
        _
      // Predicated region
      $region25: #{up_forward.3} parent=11 // pred_check
        %p352 = pneg %p155
      $region26: #{up_forward.3} parent=11 // pred_check_branch
        %354 = sbr.rel (%p352) target = $region28
      $region27: #{up_forward.3} parent=11 // pred_region
        _
      $region28: #{up_forward.3} parent=11 // pred_fallthru
        _
      // Predicated region
      $region29: #{up_forward.3} parent=11 // pred_check
        %p355 = pneg %p176
      $region30: #{up_forward.3} parent=11 // pred_check_branch
        %357 = sbr.rel (%p355) target = $region32
      $region31: #{up_forward.3} parent=11 // pred_region
        _
      $region32: #{up_forward.3} parent=11 // pred_fallthru
        _
      // Predicated region
      $region33: #{up_forward.3} parent=11 // pred_check
        %p358 = pneg %p197
      $region34: #{up_forward.3} parent=11 // pred_check_branch
        %360 = sbr.rel (%p358) target = $region36
      $region35: #{up_forward.3} parent=11 // pred_region
        _
      $region36: #{up_forward.3} parent=11 // pred_fallthru
        _
      // Predicated region
      $region37: #{up_forward.3} parent=11 // pred_check
        %p361 = pneg %p218
      $region38: #{up_forward.3} parent=11 // pred_check_branch
        %363 = sbr.rel (%p361) target = $region40
      $region39: #{up_forward.3} parent=11 // pred_region
        _
      $region40: #{up_forward.3} parent=11 // pred_fallthru
        _
      // Predicated region
      $region41: #{up_forward.3} parent=11 // pred_check
        %p364 = pneg %p239
      $region42: #{up_forward.3} parent=11 // pred_check_branch
        %366 = sbr.rel (%p364) target = $region44
      $region43: #{up_forward.3} parent=11 // pred_region
        _
      $region44: #{up_forward.3} parent=11 // pred_fallthru
        _
      // Predicated region
      $region45: #{up_forward.3} parent=11 // pred_check
        %p367 = pneg %p260
      $region46: #{up_forward.3} parent=11 // pred_check_branch
        %369 = sbr.rel (%p367) target = $region48
      $region47: #{up_forward.3} parent=11 // pred_region
        _
      $region48: #{up_forward.3} parent=11 // pred_fallthru
        _
      // Predicated region
      $region49: #{up_forward.3} parent=11 // pred_check
        %p370 = pneg %p281
      $region50: #{up_forward.3} parent=11 // pred_check_branch
        %372 = sbr.rel (%p370) target = $region52
      $region51: #{up_forward.3} parent=11 // pred_region
        _
      $region52: #{up_forward.3} parent=11 // pred_fallthru
        _
      // Predicated region
      $region53: #{up_forward.3} parent=11 // pred_check
        %p373 = pneg %p302
      $region54: #{up_forward.3} parent=11 // pred_check_branch
        %375 = sbr.rel (%p373) target = $region56
      $region55: #{up_forward.3} parent=11 // pred_region
        _
      $region56: #{up_forward.3} parent=11 // pred_fallthru
        _
    $region12: #{up_forward.3} parent=5 // pred_fallthru
      _
    %p376 = scmp.lt.s32.totalorder %s19, 2
    // Predicated region
    $region57: #{up_forward.3} parent=5 // pred_check
      %p377 = pneg %p376
    $region58: #{up_forward.3} parent=5 // pred_check_branch
      %379 = sbr.rel (%p377) target = $region60
    $region59: #{up_forward.3} parent=5 // pred_region
      // Predicated region
      $region61: #{up_forward.3} parent=59 // pred_check
        %p380 = pneg %p39
      $region62: #{up_forward.3} parent=59 // pred_check_branch
        %382 = sbr.rel (%p380) target = $region64
      $region63: #{up_forward.3} parent=59 // pred_region
        %p383 = scmp.lt.s32.totalorder %s19, 1
        %s384 = scalar_select %p383, %s19, 1
        %s385 = smul.addr %s384, 4
        %s386 = smul.addr %s385, 4
        %s387 = scalar_lea.vmem %s0, %s386
      $region64: #{up_forward.3} parent=59 // pred_fallthru
        _
      // Predicated region
      $region65: #{up_forward.3} parent=59 // pred_check
        %p388 = pneg %p65
      $region66: #{up_forward.3} parent=59 // pred_check_branch
        %390 = sbr.rel (%p388) target = $region68
      $region67: #{up_forward.3} parent=59 // pred_region
        %p391 = scmp.lt.s32.totalorder %s19, 1
        %s392 = scalar_select %p391, %s19, 1
        %s393 = smul.addr %s392, 4
        %s394 = smul.addr %s393, 4
        %s395 = scalar_lea.vmem %s1, %s394
      $region68: #{up_forward.3} parent=59 // pred_fallthru
        _
    $region60: #{up_forward.3} parent=5 // pred_fallthru
      _
    %p396 = scmp.le.s32.totalorder 1, %s19
    %p397 = scmp.lt.s32.totalorder %s19, 3
    %p398 = pnand %p396, %p397
    %p399 = pneg %p398
    // Predicated region
    $region69: #{up_forward.3} parent=5 // pred_check
      _
    $region70: #{up_forward.3} parent=5 // pred_check_branch
      %401 = sbr.rel (%p398) target = $region72
    $region71: #{up_forward.3} parent=5 // pred_region
      %s402 = ssub.s32 %s19, 1
      %p403 = scmp.lt.s32.totalorder %s24, 1
      %s404 = scalar_select %p403, %s24, 1
      %s405 = smul.addr %s404, 4
      %s406 = smul.addr %s405, 4
      %s407 = scalar_lea.vmem %s0, %s406
      %p408 = pneg %p45
      %p409 = pneg %p42
      %p410 = scmp.lt.s32.totalorder %s24, 1
      %s411 = scalar_select %p410, %s24, 1
      %s412 = smul.addr %s411, 4
      %s413 = smul.addr %s412, 4
      %s414 = scalar_lea.vmem %s1, %s413
      %p415 = pneg %p71
      %p416 = pneg %p68
      %p417 = pneg %p92
      %p418 = pneg %p89
      %p419 = pneg %p113
      %p420 = pneg %p110
      %p421 = pneg %p134
      %p422 = pneg %p131
      %p423 = pneg %p155
      %p424 = pneg %p152
      %p425 = pneg %p176
      %p426 = pneg %p173
      %p427 = pneg %p197
      %p428 = pneg %p194
      %p429 = pneg %p218
      %p430 = pneg %p215
      %p431 = pneg %p239
      %p432 = pneg %p236
      %p433 = pneg %p260
      %p434 = pneg %p257
      %p435 = pneg %p281
      %p436 = pneg %p278
      %p437 = pneg %p302
      %p438 = pneg %p299
      %p439 = pneg %p328
      %p440 = pneg %p325
      %p441 = scmp.lt.s32.totalorder %s24, 1
      %s442 = scalar_select %p441, %s24, 1
      %s443 = smul.addr %s442, 4
      %s444 = smul.addr %s443, 8
      %s445 = scalar_lea.vmem %s13, %s444
      %p446 = scmp.lt.s32.totalorder %s24, 1
      %s447 = scalar_select %p446, %s24, 1
      %s448 = smul.addr %s447, 4
      %s449 = smul.addr %s448, 4
      %s450 = scalar_lea.vmem %s0, %s449
      %p451 = scmp.lt.s32.totalorder %s24, 1
      %s452 = scalar_select %p451, %s24, 1
      %s453 = smul.addr %s452, 4
      %s454 = smul.addr %s453, 4
      %s455 = scalar_lea.vmem %s1, %s454
      %p456 = scmp.lt.s32.totalorder %s24, 1
      %s457 = scalar_select %p456, %s24, 1
      %s458 = smul.addr %s457, 4
      %s459 = smul.addr %s458, 8
      %s460 = scalar_lea.vmem %s13, %s459
      %v462 = vld [vmem:[%s450] sm:$0xf]
      %v463 = vld [vmem:[%s450 + $0x4] sm:$0xf]
      %v464 = vld [vmem:[%s450 + $0x8] sm:$0xf]
      %v465 = vld [vmem:[%s450 + $0xc] sm:$0xf]
      %v466 = vld [vmem:[%s2] sm:$0xf]
      %v467 = vld [vmem:[%s2 + $0x4] sm:$0xf]
      %v468 = vld [vmem:[%s2 + $0x8] sm:$0xf]
      %v469 = vld [vmem:[%s2 + $0xc] sm:$0xf]
      %v470 = vld [vmem:[%s2 + $0x10] sm:$0xf]
      %v471 = vld [vmem:[%s2 + $0x14] sm:$0xf]
      %v472 = vld [vmem:[%s2 + $0x18] sm:$0xf]
      %v473 = vld [vmem:[%s2 + $0x1c] sm:$0xf]
      %v474 = vld [vmem:[%s2 + $0x20] sm:$0xf]
      %v475 = vld [vmem:[%s2 + $0x24] sm:$0xf]
      %v476 = vld [vmem:[%s2 + $0x28] sm:$0xf]
      %v477 = vld [vmem:[%s2 + $0x2c] sm:$0xf]
      %v478 = vld [vmem:[%s2 + $0x30] sm:$0xf]
      %v479 = vld [vmem:[%s2 + $0x34] sm:$0xf]
      %v480 = vld [vmem:[%s2 + $0x38] sm:$0xf]
      %v481 = vld [vmem:[%s2 + $0x3c] sm:$0xf]
      %v482 = vld [vmem:[%s455] sm:$0xf]
      %v483 = vld [vmem:[%s455 + $0x4] sm:$0xf]
      %v484 = vld [vmem:[%s455 + $0x8] sm:$0xf]
      %v485 = vld [vmem:[%s455 + $0xc] sm:$0xf]
      %v486 = vld [vmem:[%s3] sm:$0xf]
      %v487 = vld [vmem:[%s3 + $0x4] sm:$0xf]
      %v488 = vld [vmem:[%s3 + $0x8] sm:$0xf]
      %v489 = vld [vmem:[%s3 + $0xc] sm:$0xf]
      %v490 = vld [vmem:[%s3 + $0x10] sm:$0xf]
      %v491 = vld [vmem:[%s3 + $0x14] sm:$0xf]
      %v492 = vld [vmem:[%s3 + $0x18] sm:$0xf]
      %v493 = vld [vmem:[%s3 + $0x1c] sm:$0xf]
      %v494 = vld [vmem:[%s3 + $0x20] sm:$0xf]
      %v495 = vld [vmem:[%s3 + $0x24] sm:$0xf]
      %v496 = vld [vmem:[%s3 + $0x28] sm:$0xf]
      %v497 = vld [vmem:[%s3 + $0x2c] sm:$0xf]
      %v498 = vld [vmem:[%s3 + $0x30] sm:$0xf]
      %v499 = vld [vmem:[%s3 + $0x34] sm:$0xf]
      %v500 = vld [vmem:[%s3 + $0x38] sm:$0xf]
      %v501 = vld [vmem:[%s3 + $0x3c] sm:$0xf]
      %v506 = vunpack.c.l.b16 %v482
      %v507 = vunpack.c.l.b16 %v483
      %v508 = vunpack.c.l.b16 %v484
      %v509 = vunpack.c.l.b16 %v485
      %v510 = vpack.c.b16 %v507, %v506
      %v511 = vpack.c.b16 %v509, %v508
      %v530 = vunpack.c.l.b16 %v486
      %v531 = vunpack.c.l.b16 %v487
      %v532 = vunpack.c.l.b16 %v488
      %v533 = vunpack.c.l.b16 %v489
      %v534 = vunpack.c.l.b16 %v490
      %v535 = vunpack.c.l.b16 %v491
      %v536 = vunpack.c.l.b16 %v492
      %v537 = vunpack.c.l.b16 %v493
      %v538 = vunpack.c.l.b16 %v494
      %v539 = vunpack.c.l.b16 %v495
      %v540 = vunpack.c.l.b16 %v496
      %v541 = vunpack.c.l.b16 %v497
      %v542 = vunpack.c.l.b16 %v498
      %v543 = vunpack.c.l.b16 %v499
      %v544 = vunpack.c.l.b16 %v500
      %v545 = vunpack.c.l.b16 %v501
      %v546 = vpack.c.b16 %v531, %v530
      %v547 = vpack.c.b16 %v533, %v532
      %v548 = vpack.c.b16 %v535, %v534
      %v549 = vpack.c.b16 %v537, %v536
      %v550 = vpack.c.b16 %v539, %v538
      %v551 = vpack.c.b16 %v541, %v540
      %v552 = vpack.c.b16 %v543, %v542
      %v553 = vpack.c.b16 %v545, %v544
      %562 = vmatprep.subr.bf16.mxu0 0
      %563 = vmatpush1.bf16.msra.mxu0 %v546
      %564 = vmatprep.subr.bf16.mxu0 0
      %565 = vmatpush1.bf16.msra.mxu0 %v547
      %566 = vmatprep.subr.bf16.mxu0 0
      %567 = vmatpush1.bf16.msra.mxu0 %v548
      %568 = vmatprep.subr.bf16.mxu0 0
      %569 = vmatpush1.bf16.msra.mxu0 %v549
      %570 = vmatprep.subr.bf16.mxu0 0
      %571 = vmatpush1.bf16.msra.mxu0 %v550
      %572 = vmatprep.subr.bf16.mxu0 0
      %573 = vmatpush1.bf16.msra.mxu0 %v551
      %574 = vmatprep.subr.bf16.mxu0 0
      %575 = vmatpush1.bf16.msra.mxu0 %v552
      %576 = vmatprep.subr.bf16.mxu0 0
      %577 = vmatpush1.bf16.msra.mxu0 %v553
      %578 = vmatprep.subr.bf16.mxu0 0
      %579 = vmatpush1.bf16.msra.mxu0 0
      %580 = vmatprep.subr.bf16.mxu0 0
      %581 = vmatpush1.bf16.msra.mxu0 0
      %582 = vmatprep.subr.bf16.mxu0 0
      %583 = vmatpush1.bf16.msra.mxu0 0
      %584 = vmatprep.subr.bf16.mxu0 0
      %585 = vmatpush1.bf16.msra.mxu0 0
      %586 = vmatprep.subr.bf16.mxu0 0
      %587 = vmatpush1.bf16.msra.mxu0 0
      %588 = vmatprep.subr.bf16.mxu0 0
      %589 = vmatpush1.bf16.msra.mxu0 0
      %590 = vmatprep.subr.bf16.mxu0 0
      %591 = vmatpush1.bf16.msra.mxu0 0
      %592 = vmatprep.subr.bf16.mxu0 0
      %593 = vmatpush1.bf16.msra.mxu0 0
      %594 = vmatprep.mubr.bf16.mxu0 0
      %595 = vmatmul.mubr.bf16.gmra.mrb[0].mxu0 %v510
      %v596 = vpop.f32.mrb[0].mxu0
      %v597 = vadd.f32 0.0, %v596
      %v598 = vpop.f32.mrb[0].mxu0
      %v599 = vpop.f32.mrb[0].mxu0
      %v600 = vadd.f32 0.0, %v599
      %v601 = vpop.f32.mrb[0].mxu0
      %602 = vmatprep.mubr.bf16.mxu0 0
      %603 = vmatmul.mubr.bf16.gmra.mrb[0].mxu0 %v511
      %v604 = vpop.f32.mrb[0].mxu0
      %v605 = vadd.f32 0.0, %v604
      %v606 = vpop.f32.mrb[0].mxu0
      %v607 = vpop.f32.mrb[0].mxu0
      %v608 = vadd.f32 0.0, %v607
      %v609 = vpop.f32.mrb[0].mxu0
      %610 = vdwg.mxu0
      %v615 = vunpack.c.l.b16 %v462
      %v616 = vunpack.c.l.b16 %v463
      %v617 = vunpack.c.l.b16 %v464
      %v618 = vunpack.c.l.b16 %v465
      %v619 = vpack.c.b16 %v616, %v615
      %v620 = vpack.c.b16 %v618, %v617
      %v639 = vunpack.c.l.b16 %v466
      %v640 = vunpack.c.l.b16 %v467
      %v641 = vunpack.c.l.b16 %v468
      %v642 = vunpack.c.l.b16 %v469
      %v643 = vunpack.c.l.b16 %v470
      %v644 = vunpack.c.l.b16 %v471
      %v645 = vunpack.c.l.b16 %v472
      %v646 = vunpack.c.l.b16 %v473
      %v647 = vunpack.c.l.b16 %v474
      %v648 = vunpack.c.l.b16 %v475
      %v649 = vunpack.c.l.b16 %v476
      %v650 = vunpack.c.l.b16 %v477
      %v651 = vunpack.c.l.b16 %v478
      %v652 = vunpack.c.l.b16 %v479
      %v653 = vunpack.c.l.b16 %v480
      %v654 = vunpack.c.l.b16 %v481
      %v655 = vpack.c.b16 %v640, %v639
      %v656 = vpack.c.b16 %v642, %v641
      %v657 = vpack.c.b16 %v644, %v643
      %v658 = vpack.c.b16 %v646, %v645
      %v659 = vpack.c.b16 %v648, %v647
      %v660 = vpack.c.b16 %v650, %v649
      %v661 = vpack.c.b16 %v652, %v651
      %v662 = vpack.c.b16 %v654, %v653
      %671 = vmatprep.subr.bf16.mxu0 0
      %672 = vmatpush1.bf16.msra.mxu0 %v655
      %673 = vmatprep.subr.bf16.mxu0 0
      %674 = vmatpush1.bf16.msra.mxu0 %v656
      %675 = vmatprep.subr.bf16.mxu0 0
      %676 = vmatpush1.bf16.msra.mxu0 %v657
      %677 = vmatprep.subr.bf16.mxu0 0
      %678 = vmatpush1.bf16.msra.mxu0 %v658
      %679 = vmatprep.subr.bf16.mxu0 0
      %680 = vmatpush1.bf16.msra.mxu0 %v659
      %681 = vmatprep.subr.bf16.mxu0 0
      %682 = vmatpush1.bf16.msra.mxu0 %v660
      %683 = vmatprep.subr.bf16.mxu0 0
      %684 = vmatpush1.bf16.msra.mxu0 %v661
      %685 = vmatprep.subr.bf16.mxu0 0
      %686 = vmatpush1.bf16.msra.mxu0 %v662
      %687 = vmatprep.subr.bf16.mxu0 0
      %688 = vmatpush1.bf16.msra.mxu0 0
      %689 = vmatprep.subr.bf16.mxu0 0
      %690 = vmatpush1.bf16.msra.mxu0 0
      %691 = vmatprep.subr.bf16.mxu0 0
      %692 = vmatpush1.bf16.msra.mxu0 0
      %693 = vmatprep.subr.bf16.mxu0 0
      %694 = vmatpush1.bf16.msra.mxu0 0
      %695 = vmatprep.subr.bf16.mxu0 0
      %696 = vmatpush1.bf16.msra.mxu0 0
      %697 = vmatprep.subr.bf16.mxu0 0
      %698 = vmatpush1.bf16.msra.mxu0 0
      %699 = vmatprep.subr.bf16.mxu0 0
      %700 = vmatpush1.bf16.msra.mxu0 0
      %701 = vmatprep.subr.bf16.mxu0 0
      %702 = vmatpush1.bf16.msra.mxu0 0
      %703 = vmatprep.mubr.bf16.mxu0 0
      %704 = vmatmul.mubr.bf16.gmra.mrb[0].mxu0 %v619
      %v705 = vpop.f32.mrb[0].mxu0
      %v706 = vadd.f32 %v597, %v705
      %v707 = vpop.f32.mrb[0].mxu0
      %v708 = vpop.f32.mrb[0].mxu0
      %v709 = vadd.f32 %v600, %v708
      %v710 = vpop.f32.mrb[0].mxu0
      %711 = vmatprep.mubr.bf16.mxu0 0
      %712 = vmatmul.mubr.bf16.gmra.mrb[0].mxu0 %v620
      %v713 = vpop.f32.mrb[0].mxu0
      %v714 = vadd.f32 %v605, %v713
      %v715 = vpop.f32.mrb[0].mxu0
      %v716 = vpop.f32.mrb[0].mxu0
      %v717 = vadd.f32 %v608, %v716
      %v718 = vpop.f32.mrb[0].mxu0
      %719 = vdwg.mxu0
      %v720 = vld [vmem:[%s4] sm:$0x1]
      %v722 = vlaneseq
      %v723 = vshrl.u32 %v722, 7
      %v724 = vsub.s32 0, %v723
      %v725 = vrot.slane %v720, %v724
      %v727 = vadd.f32 %v706, %v725
      %v728 = vadd.f32 %v709, %v725
      %v729 = vadd.f32 %v714, %v725
      %v730 = vadd.f32 %v717, %v725
      %vm735 = vcmask 1040384
      %v736 = vrot.slane %v727, 7
      %v737 = vrot.slane %v728, 7
      %v738 = vsel %vm735, %v736, %v737
      %v739 = vrot.slane %v729, 7
      %v740 = vsel %vm735, %v737, %v739
      %v741 = vrot.slane %v730, 7
      %v742 = vsel %vm735, %v739, %v741
      %v747 = vsel %vm735, 0.0, %v736
      %vm748 = vcmask 1046528
      %v749 = vrot.slane %v727, 1
      %v750 = vrot.slane %v728, 1
      %v751 = vsel %vm748, %v749, %v750
      %v752 = vrot.slane %v729, 1
      %v753 = vsel %vm748, %v750, %v752
      %v754 = vrot.slane %v730, 1
      %v755 = vsel %vm748, %v752, %v754
      %v760 = vsel %vm748, %v754, 0.0
      %v761 = vpack.c.bf16 %v738, %v747
      %v762 = vpack.c.bf16 %v742, %v740
      %v763 = vld [vmem:[%s5] sm:$0xf]
      %v764 = vld [vmem:[%s5 + $0x4] sm:$0xf]
      %v765 = vld [vmem:[%s5 + $0x8] sm:$0xf]
      %v766 = vld [vmem:[%s5 + $0xc] sm:$0xf]
      %v767 = vld [vmem:[%s5 + $0x10] sm:$0xf]
      %v768 = vld [vmem:[%s5 + $0x14] sm:$0xf]
      %v769 = vld [vmem:[%s5 + $0x18] sm:$0xf]
      %v770 = vld [vmem:[%s5 + $0x1c] sm:$0xf]
      %v771 = vld [vmem:[%s5 + $0x20] sm:$0xf]
      %v772 = vld [vmem:[%s5 + $0x24] sm:$0xf]
      %v773 = vld [vmem:[%s5 + $0x28] sm:$0xf]
      %v774 = vld [vmem:[%s5 + $0x2c] sm:$0xf]
      %v775 = vld [vmem:[%s5 + $0x30] sm:$0xf]
      %v776 = vld [vmem:[%s5 + $0x34] sm:$0xf]
      %v777 = vld [vmem:[%s5 + $0x38] sm:$0xf]
      %v778 = vld [vmem:[%s5 + $0x3c] sm:$0xf]
      %v779 = vpack.c.bf16 %v728, %v727
      %v780 = vpack.c.bf16 %v730, %v729
      %s781 = scalar_lea.vmem %s5, 64
      %v782 = vld [vmem:[%s781] sm:$0xf]
      %v783 = vld [vmem:[%s781 + $0x4] sm:$0xf]
      %v784 = vld [vmem:[%s781 + $0x8] sm:$0xf]
      %v785 = vld [vmem:[%s781 + $0xc] sm:$0xf]
      %v786 = vld [vmem:[%s781 + $0x10] sm:$0xf]
      %v787 = vld [vmem:[%s781 + $0x14] sm:$0xf]
      %v788 = vld [vmem:[%s781 + $0x18] sm:$0xf]
      %v789 = vld [vmem:[%s781 + $0x1c] sm:$0xf]
      %v790 = vld [vmem:[%s781 + $0x20] sm:$0xf]
      %v791 = vld [vmem:[%s781 + $0x24] sm:$0xf]
      %v792 = vld [vmem:[%s781 + $0x28] sm:$0xf]
      %v793 = vld [vmem:[%s781 + $0x2c] sm:$0xf]
      %v794 = vld [vmem:[%s781 + $0x30] sm:$0xf]
      %v795 = vld [vmem:[%s781 + $0x34] sm:$0xf]
      %v796 = vld [vmem:[%s781 + $0x38] sm:$0xf]
      %v797 = vld [vmem:[%s781 + $0x3c] sm:$0xf]
      %v814 = vunpack.c.l.b16 %v782
      %v815 = vunpack.c.l.b16 %v783
      %v816 = vunpack.c.l.b16 %v784
      %v817 = vunpack.c.l.b16 %v785
      %v818 = vunpack.c.l.b16 %v786
      %v819 = vunpack.c.l.b16 %v787
      %v820 = vunpack.c.l.b16 %v788
      %v821 = vunpack.c.l.b16 %v789
      %v822 = vunpack.c.l.b16 %v790
      %v823 = vunpack.c.l.b16 %v791
      %v824 = vunpack.c.l.b16 %v792
      %v825 = vunpack.c.l.b16 %v793
      %v826 = vunpack.c.l.b16 %v794
      %v827 = vunpack.c.l.b16 %v795
      %v828 = vunpack.c.l.b16 %v796
      %v829 = vunpack.c.l.b16 %v797
      %v830 = vpack.c.b16 %v815, %v814
      %v831 = vpack.c.b16 %v817, %v816
      %v832 = vpack.c.b16 %v819, %v818
      %v833 = vpack.c.b16 %v821, %v820
      %v834 = vpack.c.b16 %v823, %v822
      %v835 = vpack.c.b16 %v825, %v824
      %v836 = vpack.c.b16 %v827, %v826
      %v837 = vpack.c.b16 %v829, %v828
      %846 = vmatprep.subr.bf16.mxu0 0
      %847 = vmatpush1.bf16.msra.mxu0 %v830
      %848 = vmatprep.subr.bf16.mxu0 0
      %849 = vmatpush1.bf16.msra.mxu0 %v831
      %850 = vmatprep.subr.bf16.mxu0 0
      %851 = vmatpush1.bf16.msra.mxu0 %v832
      %852 = vmatprep.subr.bf16.mxu0 0
      %853 = vmatpush1.bf16.msra.mxu0 %v833
      %854 = vmatprep.subr.bf16.mxu0 0
      %855 = vmatpush1.bf16.msra.mxu0 %v834
      %856 = vmatprep.subr.bf16.mxu0 0
      %857 = vmatpush1.bf16.msra.mxu0 %v835
      %858 = vmatprep.subr.bf16.mxu0 0
      %859 = vmatpush1.bf16.msra.mxu0 %v836
      %860 = vmatprep.subr.bf16.mxu0 0
      %861 = vmatpush1.bf16.msra.mxu0 %v837
      %862 = vmatprep.subr.bf16.mxu0 0
      %863 = vmatpush1.bf16.msra.mxu0 0
      %864 = vmatprep.subr.bf16.mxu0 0
      %865 = vmatpush1.bf16.msra.mxu0 0
      %866 = vmatprep.subr.bf16.mxu0 0
      %867 = vmatpush1.bf16.msra.mxu0 0
      %868 = vmatprep.subr.bf16.mxu0 0
      %869 = vmatpush1.bf16.msra.mxu0 0
      %870 = vmatprep.subr.bf16.mxu0 0
      %871 = vmatpush1.bf16.msra.mxu0 0
      %872 = vmatprep.subr.bf16.mxu0 0
      %873 = vmatpush1.bf16.msra.mxu0 0
      %874 = vmatprep.subr.bf16.mxu0 0
      %875 = vmatpush1.bf16.msra.mxu0 0
      %876 = vmatprep.subr.bf16.mxu0 0
      %877 = vmatpush1.bf16.msra.mxu0 0
      %878 = vmatprep.mubr.bf16.mxu0 0
      %879 = vmatmul.mubr.bf16.gmra.mrb[0].mxu0 %v779
      %v880 = vpop.f32.mrb[0].mxu0
      %v881 = vadd.f32 0.0, %v880
      %v882 = vpop.f32.mrb[0].mxu0
      %v883 = vpop.f32.mrb[0].mxu0
      %v884 = vadd.f32 0.0, %v883
      %v885 = vpop.f32.mrb[0].mxu0
      %886 = vmatprep.mubr.bf16.mxu0 0
      %887 = vmatmul.mubr.bf16.gmra.mrb[0].mxu0 %v780
      %v888 = vpop.f32.mrb[0].mxu0
      %v889 = vadd.f32 0.0, %v888
      %v890 = vpop.f32.mrb[0].mxu0
      %v891 = vpop.f32.mrb[0].mxu0
      %v892 = vadd.f32 0.0, %v891
      %v893 = vpop.f32.mrb[0].mxu0
      %894 = vdwg.mxu0
      %v911 = vunpack.c.l.b16 %v763
      %v912 = vunpack.c.l.b16 %v764
      %v913 = vunpack.c.l.b16 %v765
      %v914 = vunpack.c.l.b16 %v766
      %v915 = vunpack.c.l.b16 %v767
      %v916 = vunpack.c.l.b16 %v768
      %v917 = vunpack.c.l.b16 %v769
      %v918 = vunpack.c.l.b16 %v770
      %v919 = vunpack.c.l.b16 %v771
      %v920 = vunpack.c.l.b16 %v772
      %v921 = vunpack.c.l.b16 %v773
      %v922 = vunpack.c.l.b16 %v774
      %v923 = vunpack.c.l.b16 %v775
      %v924 = vunpack.c.l.b16 %v776
      %v925 = vunpack.c.l.b16 %v777
      %v926 = vunpack.c.l.b16 %v778
      %v927 = vpack.c.b16 %v912, %v911
      %v928 = vpack.c.b16 %v914, %v913
      %v929 = vpack.c.b16 %v916, %v915
      %v930 = vpack.c.b16 %v918, %v917
      %v931 = vpack.c.b16 %v920, %v919
      %v932 = vpack.c.b16 %v922, %v921
      %v933 = vpack.c.b16 %v924, %v923
      %v934 = vpack.c.b16 %v926, %v925
      %943 = vmatprep.subr.bf16.mxu0 0
      %944 = vmatpush1.bf16.msra.mxu0 %v927
      %945 = vmatprep.subr.bf16.mxu0 0
      %946 = vmatpush1.bf16.msra.mxu0 %v928
      %947 = vmatprep.subr.bf16.mxu0 0
      %948 = vmatpush1.bf16.msra.mxu0 %v929
      %949 = vmatprep.subr.bf16.mxu0 0
      %950 = vmatpush1.bf16.msra.mxu0 %v930
      %951 = vmatprep.subr.bf16.mxu0 0
      %952 = vmatpush1.bf16.msra.mxu0 %v931
      %953 = vmatprep.subr.bf16.mxu0 0
      %954 = vmatpush1.bf16.msra.mxu0 %v932
      %955 = vmatprep.subr.bf16.mxu0 0
      %956 = vmatpush1.bf16.msra.mxu0 %v933
      %957 = vmatprep.subr.bf16.mxu0 0
      %958 = vmatpush1.bf16.msra.mxu0 %v934
      %959 = vmatprep.subr.bf16.mxu0 0
      %960 = vmatpush1.bf16.msra.mxu0 0
      %961 = vmatprep.subr.bf16.mxu0 0
      %962 = vmatpush1.bf16.msra.mxu0 0
      %963 = vmatprep.subr.bf16.mxu0 0
      %964 = vmatpush1.bf16.msra.mxu0 0
      %965 = vmatprep.subr.bf16.mxu0 0
      %966 = vmatpush1.bf16.msra.mxu0 0
      %967 = vmatprep.subr.bf16.mxu0 0
      %968 = vmatpush1.bf16.msra.mxu0 0
      %969 = vmatprep.subr.bf16.mxu0 0
      %970 = vmatpush1.bf16.msra.mxu0 0
      %971 = vmatprep.subr.bf16.mxu0 0
      %972 = vmatpush1.bf16.msra.mxu0 0
      %973 = vmatprep.subr.bf16.mxu0 0
      %974 = vmatpush1.bf16.msra.mxu0 0
      %975 = vmatprep.mubr.bf16.mxu0 0
      %976 = vmatmul.mubr.bf16.gmra.mrb[0].mxu0 %v761
      %v977 = vpop.f32.mrb[0].mxu0
      %v978 = vadd.f32 %v881, %v977
      %v979 = vpop.f32.mrb[0].mxu0
      %v980 = vpop.f32.mrb[0].mxu0
      %v981 = vadd.f32 %v884, %v980
      %v982 = vpop.f32.mrb[0].mxu0
      %983 = vmatprep.mubr.bf16.mxu0 0
      %984 = vmatmul.mubr.bf16.gmra.mrb[0].mxu0 %v762
      %v985 = vpop.f32.mrb[0].mxu0
      %v986 = vadd.f32 %v889, %v985
      %v987 = vpop.f32.mrb[0].mxu0
      %v988 = vpop.f32.mrb[0].mxu0
      %v989 = vadd.f32 %v892, %v988
      %v990 = vpop.f32.mrb[0].mxu0
      %991 = vdwg.mxu0
      %v992 = vpack.c.bf16 %v753, %v751
      %v993 = vpack.c.bf16 %v760, %v755
      %s994 = scalar_lea.vmem %s5, 128
      %v995 = vld [vmem:[%s994] sm:$0xf]
      %v996 = vld [vmem:[%s994 + $0x4] sm:$0xf]
      %v997 = vld [vmem:[%s994 + $0x8] sm:$0xf]
      %v998 = vld [vmem:[%s994 + $0xc] sm:$0xf]
      %v999 = vld [vmem:[%s994 + $0x10] sm:$0xf]
      %v1000 = vld [vmem:[%s994 + $0x14] sm:$0xf]
      %v1001 = vld [vmem:[%s994 + $0x18] sm:$0xf]
      %v1002 = vld [vmem:[%s994 + $0x1c] sm:$0xf]
      %v1003 = vld [vmem:[%s994 + $0x20] sm:$0xf]
      %v1004 = vld [vmem:[%s994 + $0x24] sm:$0xf]
      %v1005 = vld [vmem:[%s994 + $0x28] sm:$0xf]
      %v1006 = vld [vmem:[%s994 + $0x2c] sm:$0xf]
      %v1007 = vld [vmem:[%s994 + $0x30] sm:$0xf]
      %v1008 = vld [vmem:[%s994 + $0x34] sm:$0xf]
      %v1009 = vld [vmem:[%s994 + $0x38] sm:$0xf]
      %v1010 = vld [vmem:[%s994 + $0x3c] sm:$0xf]
      %v1027 = vunpack.c.l.b16 %v995
      %v1028 = vunpack.c.l.b16 %v996
      %v1029 = vunpack.c.l.b16 %v997
      %v1030 = vunpack.c.l.b16 %v998
      %v1031 = vunpack.c.l.b16 %v999
      %v1032 = vunpack.c.l.b16 %v1000
      %v1033 = vunpack.c.l.b16 %v1001
      %v1034 = vunpack.c.l.b16 %v1002
      %v1035 = vunpack.c.l.b16 %v1003
      %v1036 = vunpack.c.l.b16 %v1004
      %v1037 = vunpack.c.l.b16 %v1005
      %v1038 = vunpack.c.l.b16 %v1006
      %v1039 = vunpack.c.l.b16 %v1007
      %v1040 = vunpack.c.l.b16 %v1008
      %v1041 = vunpack.c.l.b16 %v1009
      %v1042 = vunpack.c.l.b16 %v1010
      %v1043 = vpack.c.b16 %v1028, %v1027
      %v1044 = vpack.c.b16 %v1030, %v1029
      %v1045 = vpack.c.b16 %v1032, %v1031
      %v1046 = vpack.c.b16 %v1034, %v1033
      %v1047 = vpack.c.b16 %v1036, %v1035
      %v1048 = vpack.c.b16 %v1038, %v1037
      %v1049 = vpack.c.b16 %v1040, %v1039
      %v1050 = vpack.c.b16 %v1042, %v1041
      %1059 = vmatprep.subr.bf16.mxu0 0
      %1060 = vmatpush1.bf16.msra.mxu0 %v1043
      %1061 = vmatprep.subr.bf16.mxu0 0
      %1062 = vmatpush1.bf16.msra.mxu0 %v1044
      %1063 = vmatprep.subr.bf16.mxu0 0
      %1064 = vmatpush1.bf16.msra.mxu0 %v1045
      %1065 = vmatprep.subr.bf16.mxu0 0
      %1066 = vmatpush1.bf16.msra.mxu0 %v1046
      %1067 = vmatprep.subr.bf16.mxu0 0
      %1068 = vmatpush1.bf16.msra.mxu0 %v1047
      %1069 = vmatprep.subr.bf16.mxu0 0
      %1070 = vmatpush1.bf16.msra.mxu0 %v1048
      %1071 = vmatprep.subr.bf16.mxu0 0
      %1072 = vmatpush1.bf16.msra.mxu0 %v1049
      %1073 = vmatprep.subr.bf16.mxu0 0
      %1074 = vmatpush1.bf16.msra.mxu0 %v1050
      %1075 = vmatprep.subr.bf16.mxu0 0
      %1076 = vmatpush1.bf16.msra.mxu0 0
      %1077 = vmatprep.subr.bf16.mxu0 0
      %1078 = vmatpush1.bf16.msra.mxu0 0
      %1079 = vmatprep.subr.bf16.mxu0 0
      %1080 = vmatpush1.bf16.msra.mxu0 0
      %1081 = vmatprep.subr.bf16.mxu0 0
      %1082 = vmatpush1.bf16.msra.mxu0 0
      %1083 = vmatprep.subr.bf16.mxu0 0
      %1084 = vmatpush1.bf16.msra.mxu0 0
      %1085 = vmatprep.subr.bf16.mxu0 0
      %1086 = vmatpush1.bf16.msra.mxu0 0
      %1087 = vmatprep.subr.bf16.mxu0 0
      %1088 = vmatpush1.bf16.msra.mxu0 0
      %1089 = vmatprep.subr.bf16.mxu0 0
      %1090 = vmatpush1.bf16.msra.mxu0 0
      %1091 = vmatprep.mubr.bf16.mxu0 0
      %1092 = vmatmul.mubr.bf16.gmra.mrb[0].mxu0 %v992
      %v1093 = vpop.f32.mrb[0].mxu0
      %v1094 = vadd.f32 0.0, %v1093
      %v1095 = vpop.f32.mrb[0].mxu0
      %v1096 = vpop.f32.mrb[0].mxu0
      %v1097 = vadd.f32 0.0, %v1096
      %v1098 = vpop.f32.mrb[0].mxu0
      %1099 = vmatprep.mubr.bf16.mxu0 0
      %1100 = vmatmul.mubr.bf16.gmra.mrb[0].mxu0 %v993
      %v1101 = vpop.f32.mrb[0].mxu0
      %v1102 = vadd.f32 0.0, %v1101
      %v1103 = vpop.f32.mrb[0].mxu0
      %v1104 = vpop.f32.mrb[0].mxu0
      %v1105 = vadd.f32 0.0, %v1104
      %v1106 = vpop.f32.mrb[0].mxu0
      %1107 = vdwg.mxu0
      %v1108 = vadd.f32 %v978, %v1094
      %v1109 = vadd.f32 %v981, %v1097
      %v1110 = vadd.f32 %v986, %v1102
      %v1111 = vadd.f32 %v989, %v1105
      %v1112 = vld [vmem:[%s6] sm:$0x1]
      %v1114 = vlaneseq
      %v1115 = vshrl.u32 %v1114, 7
      %v1116 = vsub.s32 0, %v1115
      %v1117 = vrot.slane %v1112, %v1116
      %v1119 = vadd.f32 %v1108, %v1117
      %v1120 = vadd.f32 %v1109, %v1117
      %v1121 = vadd.f32 %v1110, %v1117
      %v1122 = vadd.f32 %v1111, %v1117
      %v1123 = vmax.f32 %v1119, 0.0
      %v1124 = vmax.f32 %v1120, 0.0
      %v1125 = vmax.f32 %v1121, 0.0
      %v1126 = vmax.f32 %v1122, 0.0
      %v1131 = vrot.slane %v1123, 7
      %v1132 = vrot.slane %v1124, 7
      %v1133 = vsel %vm735, %v1131, %v1132
      %v1134 = vrot.slane %v1125, 7
      %v1135 = vsel %vm735, %v1132, %v1134
      %v1136 = vrot.slane %v1126, 7
      %v1137 = vsel %vm735, %v1134, %v1136
      %v1142 = vsel %vm735, 0.0, %v1131
      %v1143 = vrot.slane %v1123, 1
      %v1144 = vrot.slane %v1124, 1
      %v1145 = vsel %vm748, %v1143, %v1144
      %v1146 = vrot.slane %v1125, 1
      %v1147 = vsel %vm748, %v1144, %v1146
      %v1148 = vrot.slane %v1126, 1
      %v1149 = vsel %vm748, %v1146, %v1148
      %v1154 = vsel %vm748, %v1148, 0.0
      %v1155 = vpack.c.bf16 %v1133, %v1142
      %v1156 = vpack.c.bf16 %v1137, %v1135
      %v1157 = vld [vmem:[%s7] sm:$0xf]
      %v1158 = vld [vmem:[%s7 + $0x4] sm:$0xf]
      %v1159 = vld [vmem:[%s7 + $0x8] sm:$0xf]
      %v1160 = vld [vmem:[%s7 + $0xc] sm:$0xf]
      %v1161 = vld [vmem:[%s7 + $0x10] sm:$0xf]
      %v1162 = vld [vmem:[%s7 + $0x14] sm:$0xf]
      %v1163 = vld [vmem:[%s7 + $0x18] sm:$0xf]
      %v1164 = vld [vmem:[%s7 + $0x1c] sm:$0xf]
      %v1165 = vld [vmem:[%s7 + $0x20] sm:$0xf]
      %v1166 = vld [vmem:[%s7 + $0x24] sm:$0xf]
      %v1167 = vld [vmem:[%s7 + $0x28] sm:$0xf]
      %v1168 = vld [vmem:[%s7 + $0x2c] sm:$0xf]
      %v1169 = vld [vmem:[%s7 + $0x30] sm:$0xf]
      %v1170 = vld [vmem:[%s7 + $0x34] sm:$0xf]
      %v1171 = vld [vmem:[%s7 + $0x38] sm:$0xf]
      %v1172 = vld [vmem:[%s7 + $0x3c] sm:$0xf]
      %v1173 = vpack.c.bf16 %v1124, %v1123
      %v1174 = vpack.c.bf16 %v1126, %v1125
      %s1175 = scalar_lea.vmem %s7, 64
      %v1176 = vld [vmem:[%s1175] sm:$0xf]
      %v1177 = vld [vmem:[%s1175 + $0x4] sm:$0xf]
      %v1178 = vld [vmem:[%s1175 + $0x8] sm:$0xf]
      %v1179 = vld [vmem:[%s1175 + $0xc] sm:$0xf]
      %v1180 = vld [vmem:[%s1175 + $0x10] sm:$0xf]
      %v1181 = vld [vmem:[%s1175 + $0x14] sm:$0xf]
      %v1182 = vld [vmem:[%s1175 + $0x18] sm:$0xf]
      %v1183 = vld [vmem:[%s1175 + $0x1c] sm:$0xf]
      %v1184 = vld [vmem:[%s1175 + $0x20] sm:$0xf]
      %v1185 = vld [vmem:[%s1175 + $0x24] sm:$0xf]
      %v1186 = vld [vmem:[%s1175 + $0x28] sm:$0xf]
      %v1187 = vld [vmem:[%s1175 + $0x2c] sm:$0xf]
      %v1188 = vld [vmem:[%s1175 + $0x30] sm:$0xf]
      %v1189 = vld [vmem:[%s1175 + $0x34] sm:$0xf]
      %v1190 = vld [vmem:[%s1175 + $0x38] sm:$0xf]
      %v1191 = vld [vmem:[%s1175 + $0x3c] sm:$0xf]
      %v1208 = vunpack.c.l.b16 %v1176
      %v1209 = vunpack.c.l.b16 %v1177
      %v1210 = vunpack.c.l.b16 %v1178
      %v1211 = vunpack.c.l.b16 %v1179
      %v1212 = vunpack.c.l.b16 %v1180
      %v1213 = vunpack.c.l.b16 %v1181
      %v1214 = vunpack.c.l.b16 %v1182
      %v1215 = vunpack.c.l.b16 %v1183
      %v1216 = vunpack.c.l.b16 %v1184
      %v1217 = vunpack.c.l.b16 %v1185
      %v1218 = vunpack.c.l.b16 %v1186
      %v1219 = vunpack.c.l.b16 %v1187
      %v1220 = vunpack.c.l.b16 %v1188
      %v1221 = vunpack.c.l.b16 %v1189
      %v1222 = vunpack.c.l.b16 %v1190
      %v1223 = vunpack.c.l.b16 %v1191
      %v1224 = vpack.c.b16 %v1209, %v1208
      %v1225 = vpack.c.b16 %v1211, %v1210
      %v1226 = vpack.c.b16 %v1213, %v1212
      %v1227 = vpack.c.b16 %v1215, %v1214
      %v1228 = vpack.c.b16 %v1217, %v1216
      %v1229 = vpack.c.b16 %v1219, %v1218
      %v1230 = vpack.c.b16 %v1221, %v1220
      %v1231 = vpack.c.b16 %v1223, %v1222
      %1240 = vmatprep.subr.bf16.mxu0 0
      %1241 = vmatpush1.bf16.msra.mxu0 %v1224
      %1242 = vmatprep.subr.bf16.mxu0 0
      %1243 = vmatpush1.bf16.msra.mxu0 %v1225
      %1244 = vmatprep.subr.bf16.mxu0 0
      %1245 = vmatpush1.bf16.msra.mxu0 %v1226
      %1246 = vmatprep.subr.bf16.mxu0 0
      %1247 = vmatpush1.bf16.msra.mxu0 %v1227
      %1248 = vmatprep.subr.bf16.mxu0 0
      %1249 = vmatpush1.bf16.msra.mxu0 %v1228
      %1250 = vmatprep.subr.bf16.mxu0 0
      %1251 = vmatpush1.bf16.msra.mxu0 %v1229
      %1252 = vmatprep.subr.bf16.mxu0 0
      %1253 = vmatpush1.bf16.msra.mxu0 %v1230
      %1254 = vmatprep.subr.bf16.mxu0 0
      %1255 = vmatpush1.bf16.msra.mxu0 %v1231
      %1256 = vmatprep.subr.bf16.mxu0 0
      %1257 = vmatpush1.bf16.msra.mxu0 0
      %1258 = vmatprep.subr.bf16.mxu0 0
      %1259 = vmatpush1.bf16.msra.mxu0 0
      %1260 = vmatprep.subr.bf16.mxu0 0
      %1261 = vmatpush1.bf16.msra.mxu0 0
      %1262 = vmatprep.subr.bf16.mxu0 0
      %1263 = vmatpush1.bf16.msra.mxu0 0
      %1264 = vmatprep.subr.bf16.mxu0 0
      %1265 = vmatpush1.bf16.msra.mxu0 0
      %1266 = vmatprep.subr.bf16.mxu0 0
      %1267 = vmatpush1.bf16.msra.mxu0 0
      %1268 = vmatprep.subr.bf16.mxu0 0
      %1269 = vmatpush1.bf16.msra.mxu0 0
      %1270 = vmatprep.subr.bf16.mxu0 0
      %1271 = vmatpush1.bf16.msra.mxu0 0
      %1272 = vmatprep.mubr.bf16.mxu0 0
      %1273 = vmatmul.mubr.bf16.gmra.mrb[0].mxu0 %v1173
      %v1274 = vpop.f32.mrb[0].mxu0
      %v1275 = vadd.f32 0.0, %v1274
      %v1276 = vpop.f32.mrb[0].mxu0
      %v1277 = vpop.f32.mrb[0].mxu0
      %v1278 = vadd.f32 0.0, %v1277
      %v1279 = vpop.f32.mrb[0].mxu0
      %1280 = vmatprep.mubr.bf16.mxu0 0
      %1281 = vmatmul.mubr.bf16.gmra.mrb[0].mxu0 %v1174
      %v1282 = vpop.f32.mrb[0].mxu0
      %v1283 = vadd.f32 0.0, %v1282
      %v1284 = vpop.f32.mrb[0].mxu0
      %v1285 = vpop.f32.mrb[0].mxu0
      %v1286 = vadd.f32 0.0, %v1285
      %v1287 = vpop.f32.mrb[0].mxu0
      %1288 = vdwg.mxu0
      %v1305 = vunpack.c.l.b16 %v1157
      %v1306 = vunpack.c.l.b16 %v1158
      %v1307 = vunpack.c.l.b16 %v1159
      %v1308 = vunpack.c.l.b16 %v1160
      %v1309 = vunpack.c.l.b16 %v1161
      %v1310 = vunpack.c.l.b16 %v1162
      %v1311 = vunpack.c.l.b16 %v1163
      %v1312 = vunpack.c.l.b16 %v1164
      %v1313 = vunpack.c.l.b16 %v1165
      %v1314 = vunpack.c.l.b16 %v1166
      %v1315 = vunpack.c.l.b16 %v1167
      %v1316 = vunpack.c.l.b16 %v1168
      %v1317 = vunpack.c.l.b16 %v1169
      %v1318 = vunpack.c.l.b16 %v1170
      %v1319 = vunpack.c.l.b16 %v1171
      %v1320 = vunpack.c.l.b16 %v1172
      %v1321 = vpack.c.b16 %v1306, %v1305
      %v1322 = vpack.c.b16 %v1308, %v1307
      %v1323 = vpack.c.b16 %v1310, %v1309
      %v1324 = vpack.c.b16 %v1312, %v1311
      %v1325 = vpack.c.b16 %v1314, %v1313
      %v1326 = vpack.c.b16 %v1316, %v1315
      %v1327 = vpack.c.b16 %v1318, %v1317
      %v1328 = vpack.c.b16 %v1320, %v1319
      %1337 = vmatprep.subr.bf16.mxu0 0
      %1338 = vmatpush1.bf16.msra.mxu0 %v1321
      %1339 = vmatprep.subr.bf16.mxu0 0
      %1340 = vmatpush1.bf16.msra.mxu0 %v1322
      %1341 = vmatprep.subr.bf16.mxu0 0
      %1342 = vmatpush1.bf16.msra.mxu0 %v1323
      %1343 = vmatprep.subr.bf16.mxu0 0
      %1344 = vmatpush1.bf16.msra.mxu0 %v1324
      %1345 = vmatprep.subr.bf16.mxu0 0
      %1346 = vmatpush1.bf16.msra.mxu0 %v1325
      %1347 = vmatprep.subr.bf16.mxu0 0
      %1348 = vmatpush1.bf16.msra.mxu0 %v1326
      %1349 = vmatprep.subr.bf16.mxu0 0
      %1350 = vmatpush1.bf16.msra.mxu0 %v1327
      %1351 = vmatprep.subr.bf16.mxu0 0
      %1352 = vmatpush1.bf16.msra.mxu0 %v1328
      %1353 = vmatprep.subr.bf16.mxu0 0
      %1354 = vmatpush1.bf16.msra.mxu0 0
      %1355 = vmatprep.subr.bf16.mxu0 0
      %1356 = vmatpush1.bf16.msra.mxu0 0
      %1357 = vmatprep.subr.bf16.mxu0 0
      %1358 = vmatpush1.bf16.msra.mxu0 0
      %1359 = vmatprep.subr.bf16.mxu0 0
      %1360 = vmatpush1.bf16.msra.mxu0 0
      %1361 = vmatprep.subr.bf16.mxu0 0
      %1362 = vmatpush1.bf16.msra.mxu0 0
      %1363 = vmatprep.subr.bf16.mxu0 0
      %1364 = vmatpush1.bf16.msra.mxu0 0
      %1365 = vmatprep.subr.bf16.mxu0 0
      %1366 = vmatpush1.bf16.msra.mxu0 0
      %1367 = vmatprep.subr.bf16.mxu0 0
      %1368 = vmatpush1.bf16.msra.mxu0 0
      %1369 = vmatprep.mubr.bf16.mxu0 0
      %1370 = vmatmul.mubr.bf16.gmra.mrb[0].mxu0 %v1155
      %v1371 = vpop.f32.mrb[0].mxu0
      %v1372 = vadd.f32 %v1275, %v1371
      %v1373 = vpop.f32.mrb[0].mxu0
      %v1374 = vpop.f32.mrb[0].mxu0
      %v1375 = vadd.f32 %v1278, %v1374
      %v1376 = vpop.f32.mrb[0].mxu0
      %1377 = vmatprep.mubr.bf16.mxu0 0
      %1378 = vmatmul.mubr.bf16.gmra.mrb[0].mxu0 %v1156
      %v1379 = vpop.f32.mrb[0].mxu0
      %v1380 = vadd.f32 %v1283, %v1379
      %v1381 = vpop.f32.mrb[0].mxu0
      %v1382 = vpop.f32.mrb[0].mxu0
      %v1383 = vadd.f32 %v1286, %v1382
      %v1384 = vpop.f32.mrb[0].mxu0
      %1385 = vdwg.mxu0
      %v1386 = vpack.c.bf16 %v1147, %v1145
      %v1387 = vpack.c.bf16 %v1154, %v1149
      %s1388 = scalar_lea.vmem %s7, 128
      %v1389 = vld [vmem:[%s1388] sm:$0xf]
      %v1390 = vld [vmem:[%s1388 + $0x4] sm:$0xf]
      %v1391 = vld [vmem:[%s1388 + $0x8] sm:$0xf]
      %v1392 = vld [vmem:[%s1388 + $0xc] sm:$0xf]
      %v1393 = vld [vmem:[%s1388 + $0x10] sm:$0xf]
      %v1394 = vld [vmem:[%s1388 + $0x14] sm:$0xf]
      %v1395 = vld [vmem:[%s1388 + $0x18] sm:$0xf]
      %v1396 = vld [vmem:[%s1388 + $0x1c] sm:$0xf]
      %v1397 = vld [vmem:[%s1388 + $0x20] sm:$0xf]
      %v1398 = vld [vmem:[%s1388 + $0x24] sm:$0xf]
      %v1399 = vld [vmem:[%s1388 + $0x28] sm:$0xf]
      %v1400 = vld [vmem:[%s1388 + $0x2c] sm:$0xf]
      %v1401 = vld [vmem:[%s1388 + $0x30] sm:$0xf]
      %v1402 = vld [vmem:[%s1388 + $0x34] sm:$0xf]
      %v1403 = vld [vmem:[%s1388 + $0x38] sm:$0xf]
      %v1404 = vld [vmem:[%s1388 + $0x3c] sm:$0xf]
      %v1421 = vunpack.c.l.b16 %v1389
      %v1422 = vunpack.c.l.b16 %v1390
      %v1423 = vunpack.c.l.b16 %v1391
      %v1424 = vunpack.c.l.b16 %v1392
      %v1425 = vunpack.c.l.b16 %v1393
      %v1426 = vunpack.c.l.b16 %v1394
      %v1427 = vunpack.c.l.b16 %v1395
      %v1428 = vunpack.c.l.b16 %v1396
      %v1429 = vunpack.c.l.b16 %v1397
      %v1430 = vunpack.c.l.b16 %v1398
      %v1431 = vunpack.c.l.b16 %v1399
      %v1432 = vunpack.c.l.b16 %v1400
      %v1433 = vunpack.c.l.b16 %v1401
      %v1434 = vunpack.c.l.b16 %v1402
      %v1435 = vunpack.c.l.b16 %v1403
      %v1436 = vunpack.c.l.b16 %v1404
      %v1437 = vpack.c.b16 %v1422, %v1421
      %v1438 = vpack.c.b16 %v1424, %v1423
      %v1439 = vpack.c.b16 %v1426, %v1425
      %v1440 = vpack.c.b16 %v1428, %v1427
      %v1441 = vpack.c.b16 %v1430, %v1429
      %v1442 = vpack.c.b16 %v1432, %v1431
      %v1443 = vpack.c.b16 %v1434, %v1433
      %v1444 = vpack.c.b16 %v1436, %v1435
      %1453 = vmatprep.subr.bf16.mxu0 0
      %1454 = vmatpush1.bf16.msra.mxu0 %v1437
      %1455 = vmatprep.subr.bf16.mxu0 0
      %1456 = vmatpush1.bf16.msra.mxu0 %v1438
      %1457 = vmatprep.subr.bf16.mxu0 0
      %1458 = vmatpush1.bf16.msra.mxu0 %v1439
      %1459 = vmatprep.subr.bf16.mxu0 0
      %1460 = vmatpush1.bf16.msra.mxu0 %v1440
      %1461 = vmatprep.subr.bf16.mxu0 0
      %1462 = vmatpush1.bf16.msra.mxu0 %v1441
      %1463 = vmatprep.subr.bf16.mxu0 0
      %1464 = vmatpush1.bf16.msra.mxu0 %v1442
      %1465 = vmatprep.subr.bf16.mxu0 0
      %1466 = vmatpush1.bf16.msra.mxu0 %v1443
      %1467 = vmatprep.subr.bf16.mxu0 0
      %1468 = vmatpush1.bf16.msra.mxu0 %v1444
      %1469 = vmatprep.subr.bf16.mxu0 0
      %1470 = vmatpush1.bf16.msra.mxu0 0
      %1471 = vmatprep.subr.bf16.mxu0 0
      %1472 = vmatpush1.bf16.msra.mxu0 0
      %1473 = vmatprep.subr.bf16.mxu0 0
      %1474 = vmatpush1.bf16.msra.mxu0 0
      %1475 = vmatprep.subr.bf16.mxu0 0
      %1476 = vmatpush1.bf16.msra.mxu0 0
      %1477 = vmatprep.subr.bf16.mxu0 0
      %1478 = vmatpush1.bf16.msra.mxu0 0
      %1479 = vmatprep.subr.bf16.mxu0 0
      %1480 = vmatpush1.bf16.msra.mxu0 0
      %1481 = vmatprep.subr.bf16.mxu0 0
      %1482 = vmatpush1.bf16.msra.mxu0 0
      %1483 = vmatprep.subr.bf16.mxu0 0
      %1484 = vmatpush1.bf16.msra.mxu0 0
      %1485 = vmatprep.mubr.bf16.mxu0 0
      %1486 = vmatmul.mubr.bf16.gmra.mrb[0].mxu0 %v1386
      %v1487 = vpop.f32.mrb[0].mxu0
      %v1488 = vadd.f32 0.0, %v1487
      %v1489 = vpop.f32.mrb[0].mxu0
      %v1490 = vpop.f32.mrb[0].mxu0
      %v1491 = vadd.f32 0.0, %v1490
      %v1492 = vpop.f32.mrb[0].mxu0
      %1493 = vmatprep.mubr.bf16.mxu0 0
      %1494 = vmatmul.mubr.bf16.gmra.mrb[0].mxu0 %v1387
      %v1495 = vpop.f32.mrb[0].mxu0
      %v1496 = vadd.f32 0.0, %v1495
      %v1497 = vpop.f32.mrb[0].mxu0
      %v1498 = vpop.f32.mrb[0].mxu0
      %v1499 = vadd.f32 0.0, %v1498
      %v1500 = vpop.f32.mrb[0].mxu0
      %1501 = vdwg.mxu0
      %v1502 = vadd.f32 %v1372, %v1488
      %v1503 = vadd.f32 %v1375, %v1491
      %v1504 = vadd.f32 %v1380, %v1496
      %v1505 = vadd.f32 %v1383, %v1499
      %v1506 = vld [vmem:[%s8] sm:$0x1]
      %v1508 = vlaneseq
      %v1509 = vshrl.u32 %v1508, 7
      %v1510 = vsub.s32 0, %v1509
      %v1511 = vrot.slane %v1506, %v1510
      %v1513 = vadd.f32 %v1502, %v1511
      %v1514 = vadd.f32 %v1503, %v1511
      %v1515 = vadd.f32 %v1504, %v1511
      %v1516 = vadd.f32 %v1505, %v1511
      %v1517 = vadd.f32 %v727, %v1513
      %v1518 = vadd.f32 %v728, %v1514
      %v1519 = vadd.f32 %v729, %v1515
      %v1520 = vadd.f32 %v730, %v1516
      %v1525 = vrot.slane %v1517, 7
      %v1526 = vrot.slane %v1518, 7
      %v1527 = vsel %vm735, %v1525, %v1526
      %v1528 = vrot.slane %v1519, 7
      %v1529 = vsel %vm735, %v1526, %v1528
      %v1530 = vrot.slane %v1520, 7
      %v1531 = vsel %vm735, %v1528, %v1530
      %v1536 = vsel %vm735, 0.0, %v1525
      %v1537 = vrot.slane %v1517, 1
      %v1538 = vrot.slane %v1518, 1
      %v1539 = vsel %vm748, %v1537, %v1538
      %v1540 = vrot.slane %v1519, 1
      %v1541 = vsel %vm748, %v1538, %v1540
      %v1542 = vrot.slane %v1520, 1
      %v1543 = vsel %vm748, %v1540, %v1542
      %v1548 = vsel %vm748, %v1542, 0.0
      %v1549 = vpack.c.bf16 %v1527, %v1536
      %v1550 = vpack.c.bf16 %v1531, %v1529
      %v1551 = vld [vmem:[%s9] sm:$0xf]
      %v1552 = vld [vmem:[%s9 + $0x4] sm:$0xf]
      %v1553 = vld [vmem:[%s9 + $0x8] sm:$0xf]
      %v1554 = vld [vmem:[%s9 + $0xc] sm:$0xf]
      %v1555 = vld [vmem:[%s9 + $0x10] sm:$0xf]
      %v1556 = vld [vmem:[%s9 + $0x14] sm:$0xf]
      %v1557 = vld [vmem:[%s9 + $0x18] sm:$0xf]
      %v1558 = vld [vmem:[%s9 + $0x1c] sm:$0xf]
      %v1559 = vld [vmem:[%s9 + $0x20] sm:$0xf]
      %v1560 = vld [vmem:[%s9 + $0x24] sm:$0xf]
      %v1561 = vld [vmem:[%s9 + $0x28] sm:$0xf]
      %v1562 = vld [vmem:[%s9 + $0x2c] sm:$0xf]
      %v1563 = vld [vmem:[%s9 + $0x30] sm:$0xf]
      %v1564 = vld [vmem:[%s9 + $0x34] sm:$0xf]
      %v1565 = vld [vmem:[%s9 + $0x38] sm:$0xf]
      %v1566 = vld [vmem:[%s9 + $0x3c] sm:$0xf]
      %v1567 = vpack.c.bf16 %v1518, %v1517
      %v1568 = vpack.c.bf16 %v1520, %v1519
      %s1569 = scalar_lea.vmem %s9, 64
      %v1570 = vld [vmem:[%s1569] sm:$0xf]
      %v1571 = vld [vmem:[%s1569 + $0x4] sm:$0xf]
      %v1572 = vld [vmem:[%s1569 + $0x8] sm:$0xf]
      %v1573 = vld [vmem:[%s1569 + $0xc] sm:$0xf]
      %v1574 = vld [vmem:[%s1569 + $0x10] sm:$0xf]
      %v1575 = vld [vmem:[%s1569 + $0x14] sm:$0xf]
      %v1576 = vld [vmem:[%s1569 + $0x18] sm:$0xf]
      %v1577 = vld [vmem:[%s1569 + $0x1c] sm:$0xf]
      %v1578 = vld [vmem:[%s1569 + $0x20] sm:$0xf]
      %v1579 = vld [vmem:[%s1569 + $0x24] sm:$0xf]
      %v1580 = vld [vmem:[%s1569 + $0x28] sm:$0xf]
      %v1581 = vld [vmem:[%s1569 + $0x2c] sm:$0xf]
      %v1582 = vld [vmem:[%s1569 + $0x30] sm:$0xf]
      %v1583 = vld [vmem:[%s1569 + $0x34] sm:$0xf]
      %v1584 = vld [vmem:[%s1569 + $0x38] sm:$0xf]
      %v1585 = vld [vmem:[%s1569 + $0x3c] sm:$0xf]
      %v1602 = vunpack.c.l.b16 %v1570
      %v1603 = vunpack.c.l.b16 %v1571
      %v1604 = vunpack.c.l.b16 %v1572
      %v1605 = vunpack.c.l.b16 %v1573
      %v1606 = vunpack.c.l.b16 %v1574
      %v1607 = vunpack.c.l.b16 %v1575
      %v1608 = vunpack.c.l.b16 %v1576
      %v1609 = vunpack.c.l.b16 %v1577
      %v1610 = vunpack.c.l.b16 %v1578
      %v1611 = vunpack.c.l.b16 %v1579
      %v1612 = vunpack.c.l.b16 %v1580
      %v1613 = vunpack.c.l.b16 %v1581
      %v1614 = vunpack.c.l.b16 %v1582
      %v1615 = vunpack.c.l.b16 %v1583
      %v1616 = vunpack.c.l.b16 %v1584
      %v1617 = vunpack.c.l.b16 %v1585
      %v1618 = vpack.c.b16 %v1603, %v1602
      %v1619 = vpack.c.b16 %v1605, %v1604
      %v1620 = vpack.c.b16 %v1607, %v1606
      %v1621 = vpack.c.b16 %v1609, %v1608
      %v1622 = vpack.c.b16 %v1611, %v1610
      %v1623 = vpack.c.b16 %v1613, %v1612
      %v1624 = vpack.c.b16 %v1615, %v1614
      %v1625 = vpack.c.b16 %v1617, %v1616
      %1634 = vmatprep.subr.bf16.mxu0 0
      %1635 = vmatpush1.bf16.msra.mxu0 %v1618
      %1636 = vmatprep.subr.bf16.mxu0 0
      %1637 = vmatpush1.bf16.msra.mxu0 %v1619
      %1638 = vmatprep.subr.bf16.mxu0 0
      %1639 = vmatpush1.bf16.msra.mxu0 %v1620
      %1640 = vmatprep.subr.bf16.mxu0 0
      %1641 = vmatpush1.bf16.msra.mxu0 %v1621
      %1642 = vmatprep.subr.bf16.mxu0 0
      %1643 = vmatpush1.bf16.msra.mxu0 %v1622
      %1644 = vmatprep.subr.bf16.mxu0 0
      %1645 = vmatpush1.bf16.msra.mxu0 %v1623
      %1646 = vmatprep.subr.bf16.mxu0 0
      %1647 = vmatpush1.bf16.msra.mxu0 %v1624
      %1648 = vmatprep.subr.bf16.mxu0 0
      %1649 = vmatpush1.bf16.msra.mxu0 %v1625
      %1650 = vmatprep.subr.bf16.mxu0 0
      %1651 = vmatpush1.bf16.msra.mxu0 0
      %1652 = vmatprep.subr.bf16.mxu0 0
      %1653 = vmatpush1.bf16.msra.mxu0 0
      %1654 = vmatprep.subr.bf16.mxu0 0
      %1655 = vmatpush1.bf16.msra.mxu0 0
      %1656 = vmatprep.subr.bf16.mxu0 0
      %1657 = vmatpush1.bf16.msra.mxu0 0
      %1658 = vmatprep.subr.bf16.mxu0 0
      %1659 = vmatpush1.bf16.msra.mxu0 0
      %1660 = vmatprep.subr.bf16.mxu0 0
      %1661 = vmatpush1.bf16.msra.mxu0 0
      %1662 = vmatprep.subr.bf16.mxu0 0
      %1663 = vmatpush1.bf16.msra.mxu0 0
      %1664 = vmatprep.subr.bf16.mxu0 0
      %1665 = vmatpush1.bf16.msra.mxu0 0
      %1666 = vmatprep.mubr.bf16.mxu0 0
      %1667 = vmatmul.mubr.bf16.gmra.mrb[0].mxu0 %v1567
      %v1668 = vpop.f32.mrb[0].mxu0
      %v1669 = vadd.f32 0.0, %v1668
      %v1670 = vpop.f32.mrb[0].mxu0
      %v1671 = vpop.f32.mrb[0].mxu0
      %v1672 = vadd.f32 0.0, %v1671
      %v1673 = vpop.f32.mrb[0].mxu0
      %1674 = vmatprep.mubr.bf16.mxu0 0
      %1675 = vmatmul.mubr.bf16.gmra.mrb[0].mxu0 %v1568
      %v1676 = vpop.f32.mrb[0].mxu0
      %v1677 = vadd.f32 0.0, %v1676
      %v1678 = vpop.f32.mrb[0].mxu0
      %v1679 = vpop.f32.mrb[0].mxu0
      %v1680 = vadd.f32 0.0, %v1679
      %v1681 = vpop.f32.mrb[0].mxu0
      %1682 = vdwg.mxu0
      %v1699 = vunpack.c.l.b16 %v1551
      %v1700 = vunpack.c.l.b16 %v1552
      %v1701 = vunpack.c.l.b16 %v1553
      %v1702 = vunpack.c.l.b16 %v1554
      %v1703 = vunpack.c.l.b16 %v1555
      %v1704 = vunpack.c.l.b16 %v1556
      %v1705 = vunpack.c.l.b16 %v1557
      %v1706 = vunpack.c.l.b16 %v1558
      %v1707 = vunpack.c.l.b16 %v1559
      %v1708 = vunpack.c.l.b16 %v1560
      %v1709 = vunpack.c.l.b16 %v1561
      %v1710 = vunpack.c.l.b16 %v1562
      %v1711 = vunpack.c.l.b16 %v1563
      %v1712 = vunpack.c.l.b16 %v1564
      %v1713 = vunpack.c.l.b16 %v1565
      %v1714 = vunpack.c.l.b16 %v1566
      %v1715 = vpack.c.b16 %v1700, %v1699
      %v1716 = vpack.c.b16 %v1702, %v1701
      %v1717 = vpack.c.b16 %v1704, %v1703
      %v1718 = vpack.c.b16 %v1706, %v1705
      %v1719 = vpack.c.b16 %v1708, %v1707
      %v1720 = vpack.c.b16 %v1710, %v1709
      %v1721 = vpack.c.b16 %v1712, %v1711
      %v1722 = vpack.c.b16 %v1714, %v1713
      %1731 = vmatprep.subr.bf16.mxu0 0
      %1732 = vmatpush1.bf16.msra.mxu0 %v1715
      %1733 = vmatprep.subr.bf16.mxu0 0
      %1734 = vmatpush1.bf16.msra.mxu0 %v1716
      %1735 = vmatprep.subr.bf16.mxu0 0
      %1736 = vmatpush1.bf16.msra.mxu0 %v1717
      %1737 = vmatprep.subr.bf16.mxu0 0
      %1738 = vmatpush1.bf16.msra.mxu0 %v1718
      %1739 = vmatprep.subr.bf16.mxu0 0
      %1740 = vmatpush1.bf16.msra.mxu0 %v1719
      %1741 = vmatprep.subr.bf16.mxu0 0
      %1742 = vmatpush1.bf16.msra.mxu0 %v1720
      %1743 = vmatprep.subr.bf16.mxu0 0
      %1744 = vmatpush1.bf16.msra.mxu0 %v1721
      %1745 = vmatprep.subr.bf16.mxu0 0
      %1746 = vmatpush1.bf16.msra.mxu0 %v1722
      %1747 = vmatprep.subr.bf16.mxu0 0
      %1748 = vmatpush1.bf16.msra.mxu0 0
      %1749 = vmatprep.subr.bf16.mxu0 0
      %1750 = vmatpush1.bf16.msra.mxu0 0
      %1751 = vmatprep.subr.bf16.mxu0 0
      %1752 = vmatpush1.bf16.msra.mxu0 0
      %1753 = vmatprep.subr.bf16.mxu0 0
      %1754 = vmatpush1.bf16.msra.mxu0 0
      %1755 = vmatprep.subr.bf16.mxu0 0
      %1756 = vmatpush1.bf16.msra.mxu0 0
      %1757 = vmatprep.subr.bf16.mxu0 0
      %1758 = vmatpush1.bf16.msra.mxu0 0
      %1759 = vmatprep.subr.bf16.mxu0 0
      %1760 = vmatpush1.bf16.msra.mxu0 0
      %1761 = vmatprep.subr.bf16.mxu0 0
      %1762 = vmatpush1.bf16.msra.mxu0 0
      %1763 = vmatprep.mubr.bf16.mxu0 0
      %1764 = vmatmul.mubr.bf16.gmra.mrb[0].mxu0 %v1549
      %v1765 = vpop.f32.mrb[0].mxu0
      %v1766 = vadd.f32 %v1669, %v1765
      %v1767 = vpop.f32.mrb[0].mxu0
      %v1768 = vpop.f32.mrb[0].mxu0
      %v1769 = vadd.f32 %v1672, %v1768
      %v1770 = vpop.f32.mrb[0].mxu0
      %1771 = vmatprep.mubr.bf16.mxu0 0
      %1772 = vmatmul.mubr.bf16.gmra.mrb[0].mxu0 %v1550
      %v1773 = vpop.f32.mrb[0].mxu0
      %v1774 = vadd.f32 %v1677, %v1773
      %v1775 = vpop.f32.mrb[0].mxu0
      %v1776 = vpop.f32.mrb[0].mxu0
      %v1777 = vadd.f32 %v1680, %v1776
      %v1778 = vpop.f32.mrb[0].mxu0
      %1779 = vdwg.mxu0
      %v1780 = vpack.c.bf16 %v1541, %v1539
      %v1781 = vpack.c.bf16 %v1548, %v1543
      %s1782 = scalar_lea.vmem %s9, 128
      %v1783 = vld [vmem:[%s1782] sm:$0xf]
      %v1784 = vld [vmem:[%s1782 + $0x4] sm:$0xf]
      %v1785 = vld [vmem:[%s1782 + $0x8] sm:$0xf]
      %v1786 = vld [vmem:[%s1782 + $0xc] sm:$0xf]
      %v1787 = vld [vmem:[%s1782 + $0x10] sm:$0xf]
      %v1788 = vld [vmem:[%s1782 + $0x14] sm:$0xf]
      %v1789 = vld [vmem:[%s1782 + $0x18] sm:$0xf]
      %v1790 = vld [vmem:[%s1782 + $0x1c] sm:$0xf]
      %v1791 = vld [vmem:[%s1782 + $0x20] sm:$0xf]
      %v1792 = vld [vmem:[%s1782 + $0x24] sm:$0xf]
      %v1793 = vld [vmem:[%s1782 + $0x28] sm:$0xf]
      %v1794 = vld [vmem:[%s1782 + $0x2c] sm:$0xf]
      %v1795 = vld [vmem:[%s1782 + $0x30] sm:$0xf]
      %v1796 = vld [vmem:[%s1782 + $0x34] sm:$0xf]
      %v1797 = vld [vmem:[%s1782 + $0x38] sm:$0xf]
      %v1798 = vld [vmem:[%s1782 + $0x3c] sm:$0xf]
      %v1815 = vunpack.c.l.b16 %v1783
      %v1816 = vunpack.c.l.b16 %v1784
      %v1817 = vunpack.c.l.b16 %v1785
      %v1818 = vunpack.c.l.b16 %v1786
      %v1819 = vunpack.c.l.b16 %v1787
      %v1820 = vunpack.c.l.b16 %v1788
      %v1821 = vunpack.c.l.b16 %v1789
      %v1822 = vunpack.c.l.b16 %v1790
      %v1823 = vunpack.c.l.b16 %v1791
      %v1824 = vunpack.c.l.b16 %v1792
      %v1825 = vunpack.c.l.b16 %v1793
      %v1826 = vunpack.c.l.b16 %v1794
      %v1827 = vunpack.c.l.b16 %v1795
      %v1828 = vunpack.c.l.b16 %v1796
      %v1829 = vunpack.c.l.b16 %v1797
      %v1830 = vunpack.c.l.b16 %v1798
      %v1831 = vpack.c.b16 %v1816, %v1815
      %v1832 = vpack.c.b16 %v1818, %v1817
      %v1833 = vpack.c.b16 %v1820, %v1819
      %v1834 = vpack.c.b16 %v1822, %v1821
      %v1835 = vpack.c.b16 %v1824, %v1823
      %v1836 = vpack.c.b16 %v1826, %v1825
      %v1837 = vpack.c.b16 %v1828, %v1827
      %v1838 = vpack.c.b16 %v1830, %v1829
      %1847 = vmatprep.subr.bf16.mxu0 0
      %1848 = vmatpush1.bf16.msra.mxu0 %v1831
      %1849 = vmatprep.subr.bf16.mxu0 0
      %1850 = vmatpush1.bf16.msra.mxu0 %v1832
      %1851 = vmatprep.subr.bf16.mxu0 0
      %1852 = vmatpush1.bf16.msra.mxu0 %v1833
      %1853 = vmatprep.subr.bf16.mxu0 0
      %1854 = vmatpush1.bf16.msra.mxu0 %v1834
      %1855 = vmatprep.subr.bf16.mxu0 0
      %1856 = vmatpush1.bf16.msra.mxu0 %v1835
      %1857 = vmatprep.subr.bf16.mxu0 0
      %1858 = vmatpush1.bf16.msra.mxu0 %v1836
      %1859 = vmatprep.subr.bf16.mxu0 0
      %1860 = vmatpush1.bf16.msra.mxu0 %v1837
      %1861 = vmatprep.subr.bf16.mxu0 0
      %1862 = vmatpush1.bf16.msra.mxu0 %v1838
      %1863 = vmatprep.subr.bf16.mxu0 0
      %1864 = vmatpush1.bf16.msra.mxu0 0
      %1865 = vmatprep.subr.bf16.mxu0 0
      %1866 = vmatpush1.bf16.msra.mxu0 0
      %1867 = vmatprep.subr.bf16.mxu0 0
      %1868 = vmatpush1.bf16.msra.mxu0 0
      %1869 = vmatprep.subr.bf16.mxu0 0
      %1870 = vmatpush1.bf16.msra.mxu0 0
      %1871 = vmatprep.subr.bf16.mxu0 0
      %1872 = vmatpush1.bf16.msra.mxu0 0
      %1873 = vmatprep.subr.bf16.mxu0 0
      %1874 = vmatpush1.bf16.msra.mxu0 0
      %1875 = vmatprep.subr.bf16.mxu0 0
      %1876 = vmatpush1.bf16.msra.mxu0 0
      %1877 = vmatprep.subr.bf16.mxu0 0
      %1878 = vmatpush1.bf16.msra.mxu0 0
      %1879 = vmatprep.mubr.bf16.mxu0 0
      %1880 = vmatmul.mubr.bf16.gmra.mrb[0].mxu0 %v1780
      %v1881 = vpop.f32.mrb[0].mxu0
      %v1882 = vadd.f32 0.0, %v1881
      %v1883 = vpop.f32.mrb[0].mxu0
      %v1884 = vpop.f32.mrb[0].mxu0
      %v1885 = vadd.f32 0.0, %v1884
      %v1886 = vpop.f32.mrb[0].mxu0
      %1887 = vmatprep.mubr.bf16.mxu0 0
      %1888 = vmatmul.mubr.bf16.gmra.mrb[0].mxu0 %v1781
      %v1889 = vpop.f32.mrb[0].mxu0
      %v1890 = vadd.f32 0.0, %v1889
      %v1891 = vpop.f32.mrb[0].mxu0
      %v1892 = vpop.f32.mrb[0].mxu0
      %v1893 = vadd.f32 0.0, %v1892
      %v1894 = vpop.f32.mrb[0].mxu0
      %1895 = vdwg.mxu0
      %v1896 = vadd.f32 %v1766, %v1882
      %v1897 = vadd.f32 %v1769, %v1885
      %v1898 = vadd.f32 %v1774, %v1890
      %v1899 = vadd.f32 %v1777, %v1893
      %v1900 = vld [vmem:[%s10] sm:$0x1]
      %v1902 = vlaneseq
      %v1903 = vshrl.u32 %v1902, 7
      %v1904 = vsub.s32 0, %v1903
      %v1905 = vrot.slane %v1900, %v1904
      %v1907 = vadd.f32 %v1896, %v1905
      %v1908 = vadd.f32 %v1897, %v1905
      %v1909 = vadd.f32 %v1898, %v1905
      %v1910 = vadd.f32 %v1899, %v1905
      %v1911 = vmax.f32 %v1907, 0.0
      %v1912 = vmax.f32 %v1908, 0.0
      %v1913 = vmax.f32 %v1909, 0.0
      %v1914 = vmax.f32 %v1910, 0.0
      %v1919 = vrot.slane %v1911, 7
      %v1920 = vrot.slane %v1912, 7
      %v1921 = vsel %vm735, %v1919, %v1920
      %v1922 = vrot.slane %v1913, 7
      %v1923 = vsel %vm735, %v1920, %v1922
      %v1924 = vrot.slane %v1914, 7
      %v1925 = vsel %vm735, %v1922, %v1924
      %v1930 = vsel %vm735, 0.0, %v1919
      %v1931 = vrot.slane %v1911, 1
      %v1932 = vrot.slane %v1912, 1
      %v1933 = vsel %vm748, %v1931, %v1932
      %v1934 = vrot.slane %v1913, 1
      %v1935 = vsel %vm748, %v1932, %v1934
      %v1936 = vrot.slane %v1914, 1
      %v1937 = vsel %vm748, %v1934, %v1936
      %v1942 = vsel %vm748, %v1936, 0.0
      %v1943 = vpack.c.bf16 %v1921, %v1930
      %v1944 = vpack.c.bf16 %v1925, %v1923
      %v1945 = vld [vmem:[%s11] sm:$0xf]
      %v1946 = vld [vmem:[%s11 + $0x4] sm:$0xf]
      %v1947 = vld [vmem:[%s11 + $0x8] sm:$0xf]
      %v1948 = vld [vmem:[%s11 + $0xc] sm:$0xf]
      %v1949 = vld [vmem:[%s11 + $0x10] sm:$0xf]
      %v1950 = vld [vmem:[%s11 + $0x14] sm:$0xf]
      %v1951 = vld [vmem:[%s11 + $0x18] sm:$0xf]
      %v1952 = vld [vmem:[%s11 + $0x1c] sm:$0xf]
      %v1953 = vld [vmem:[%s11 + $0x20] sm:$0xf]
      %v1954 = vld [vmem:[%s11 + $0x24] sm:$0xf]
      %v1955 = vld [vmem:[%s11 + $0x28] sm:$0xf]
      %v1956 = vld [vmem:[%s11 + $0x2c] sm:$0xf]
      %v1957 = vld [vmem:[%s11 + $0x30] sm:$0xf]
      %v1958 = vld [vmem:[%s11 + $0x34] sm:$0xf]
      %v1959 = vld [vmem:[%s11 + $0x38] sm:$0xf]
      %v1960 = vld [vmem:[%s11 + $0x3c] sm:$0xf]
      %v1961 = vpack.c.bf16 %v1912, %v1911
      %v1962 = vpack.c.bf16 %v1914, %v1913
      %s1963 = scalar_lea.vmem %s11, 64
      %v1964 = vld [vmem:[%s1963] sm:$0xf]
      %v1965 = vld [vmem:[%s1963 + $0x4] sm:$0xf]
      %v1966 = vld [vmem:[%s1963 + $0x8] sm:$0xf]
      %v1967 = vld [vmem:[%s1963 + $0xc] sm:$0xf]
      %v1968 = vld [vmem:[%s1963 + $0x10] sm:$0xf]
      %v1969 = vld [vmem:[%s1963 + $0x14] sm:$0xf]
      %v1970 = vld [vmem:[%s1963 + $0x18] sm:$0xf]
      %v1971 = vld [vmem:[%s1963 + $0x1c] sm:$0xf]
      %v1972 = vld [vmem:[%s1963 + $0x20] sm:$0xf]
      %v1973 = vld [vmem:[%s1963 + $0x24] sm:$0xf]
      %v1974 = vld [vmem:[%s1963 + $0x28] sm:$0xf]
      %v1975 = vld [vmem:[%s1963 + $0x2c] sm:$0xf]
      %v1976 = vld [vmem:[%s1963 + $0x30] sm:$0xf]
      %v1977 = vld [vmem:[%s1963 + $0x34] sm:$0xf]
      %v1978 = vld [vmem:[%s1963 + $0x38] sm:$0xf]
      %v1979 = vld [vmem:[%s1963 + $0x3c] sm:$0xf]
      %v1996 = vunpack.c.l.b16 %v1964
      %v1997 = vunpack.c.l.b16 %v1965
      %v1998 = vunpack.c.l.b16 %v1966
      %v1999 = vunpack.c.l.b16 %v1967
      %v2000 = vunpack.c.l.b16 %v1968
      %v2001 = vunpack.c.l.b16 %v1969
      %v2002 = vunpack.c.l.b16 %v1970
      %v2003 = vunpack.c.l.b16 %v1971
      %v2004 = vunpack.c.l.b16 %v1972
      %v2005 = vunpack.c.l.b16 %v1973
      %v2006 = vunpack.c.l.b16 %v1974
      %v2007 = vunpack.c.l.b16 %v1975
      %v2008 = vunpack.c.l.b16 %v1976
      %v2009 = vunpack.c.l.b16 %v1977
      %v2010 = vunpack.c.l.b16 %v1978
      %v2011 = vunpack.c.l.b16 %v1979
      %v2012 = vpack.c.b16 %v1997, %v1996
      %v2013 = vpack.c.b16 %v1999, %v1998
      %v2014 = vpack.c.b16 %v2001, %v2000
      %v2015 = vpack.c.b16 %v2003, %v2002
      %v2016 = vpack.c.b16 %v2005, %v2004
      %v2017 = vpack.c.b16 %v2007, %v2006
      %v2018 = vpack.c.b16 %v2009, %v2008
      %v2019 = vpack.c.b16 %v2011, %v2010
      %2028 = vmatprep.subr.bf16.mxu0 0
      %2029 = vmatpush1.bf16.msra.mxu0 %v2012
      %2030 = vmatprep.subr.bf16.mxu0 0
      %2031 = vmatpush1.bf16.msra.mxu0 %v2013
      %2032 = vmatprep.subr.bf16.mxu0 0
      %2033 = vmatpush1.bf16.msra.mxu0 %v2014
      %2034 = vmatprep.subr.bf16.mxu0 0
      %2035 = vmatpush1.bf16.msra.mxu0 %v2015
      %2036 = vmatprep.subr.bf16.mxu0 0
      %2037 = vmatpush1.bf16.msra.mxu0 %v2016
      %2038 = vmatprep.subr.bf16.mxu0 0
      %2039 = vmatpush1.bf16.msra.mxu0 %v2017
      %2040 = vmatprep.subr.bf16.mxu0 0
      %2041 = vmatpush1.bf16.msra.mxu0 %v2018
      %2042 = vmatprep.subr.bf16.mxu0 0
      %2043 = vmatpush1.bf16.msra.mxu0 %v2019
      %2044 = vmatprep.subr.bf16.mxu0 0
      %2045 = vmatpush1.bf16.msra.mxu0 0
      %2046 = vmatprep.subr.bf16.mxu0 0
      %2047 = vmatpush1.bf16.msra.mxu0 0
      %2048 = vmatprep.subr.bf16.mxu0 0
      %2049 = vmatpush1.bf16.msra.mxu0 0
      %2050 = vmatprep.subr.bf16.mxu0 0
      %2051 = vmatpush1.bf16.msra.mxu0 0
      %2052 = vmatprep.subr.bf16.mxu0 0
      %2053 = vmatpush1.bf16.msra.mxu0 0
      %2054 = vmatprep.subr.bf16.mxu0 0
      %2055 = vmatpush1.bf16.msra.mxu0 0
      %2056 = vmatprep.subr.bf16.mxu0 0
      %2057 = vmatpush1.bf16.msra.mxu0 0
      %2058 = vmatprep.subr.bf16.mxu0 0
      %2059 = vmatpush1.bf16.msra.mxu0 0
      %2060 = vmatprep.mubr.bf16.mxu0 0
      %2061 = vmatmul.mubr.bf16.gmra.mrb[0].mxu0 %v1961
      %v2062 = vpop.f32.mrb[0].mxu0
      %v2063 = vadd.f32 0.0, %v2062
      %v2064 = vpop.f32.mrb[0].mxu0
      %v2065 = vpop.f32.mrb[0].mxu0
      %v2066 = vadd.f32 0.0, %v2065
      %v2067 = vpop.f32.mrb[0].mxu0
      %2068 = vmatprep.mubr.bf16.mxu0 0
      %2069 = vmatmul.mubr.bf16.gmra.mrb[0].mxu0 %v1962
      %v2070 = vpop.f32.mrb[0].mxu0
      %v2071 = vadd.f32 0.0, %v2070
      %v2072 = vpop.f32.mrb[0].mxu0
      %v2073 = vpop.f32.mrb[0].mxu0
      %v2074 = vadd.f32 0.0, %v2073
      %v2075 = vpop.f32.mrb[0].mxu0
      %2076 = vdwg.mxu0
      %v2093 = vunpack.c.l.b16 %v1945
      %v2094 = vunpack.c.l.b16 %v1946
      %v2095 = vunpack.c.l.b16 %v1947
      %v2096 = vunpack.c.l.b16 %v1948
      %v2097 = vunpack.c.l.b16 %v1949
      %v2098 = vunpack.c.l.b16 %v1950
      %v2099 = vunpack.c.l.b16 %v1951
      %v2100 = vunpack.c.l.b16 %v1952
      %v2101 = vunpack.c.l.b16 %v1953
      %v2102 = vunpack.c.l.b16 %v1954
      %v2103 = vunpack.c.l.b16 %v1955
      %v2104 = vunpack.c.l.b16 %v1956
      %v2105 = vunpack.c.l.b16 %v1957
      %v2106 = vunpack.c.l.b16 %v1958
      %v2107 = vunpack.c.l.b16 %v1959
      %v2108 = vunpack.c.l.b16 %v1960
      %v2109 = vpack.c.b16 %v2094, %v2093
      %v2110 = vpack.c.b16 %v2096, %v2095
      %v2111 = vpack.c.b16 %v2098, %v2097
      %v2112 = vpack.c.b16 %v2100, %v2099
      %v2113 = vpack.c.b16 %v2102, %v2101
      %v2114 = vpack.c.b16 %v2104, %v2103
      %v2115 = vpack.c.b16 %v2106, %v2105
      %v2116 = vpack.c.b16 %v2108, %v2107
      %2125 = vmatprep.subr.bf16.mxu0 0
      %2126 = vmatpush1.bf16.msra.mxu0 %v2109
      %2127 = vmatprep.subr.bf16.mxu0 0
      %2128 = vmatpush1.bf16.msra.mxu0 %v2110
      %2129 = vmatprep.subr.bf16.mxu0 0
      %2130 = vmatpush1.bf16.msra.mxu0 %v2111
      %2131 = vmatprep.subr.bf16.mxu0 0
      %2132 = vmatpush1.bf16.msra.mxu0 %v2112
      %2133 = vmatprep.subr.bf16.mxu0 0
      %2134 = vmatpush1.bf16.msra.mxu0 %v2113
      %2135 = vmatprep.subr.bf16.mxu0 0
      %2136 = vmatpush1.bf16.msra.mxu0 %v2114
      %2137 = vmatprep.subr.bf16.mxu0 0
      %2138 = vmatpush1.bf16.msra.mxu0 %v2115
      %2139 = vmatprep.subr.bf16.mxu0 0
      %2140 = vmatpush1.bf16.msra.mxu0 %v2116
      %2141 = vmatprep.subr.bf16.mxu0 0
      %2142 = vmatpush1.bf16.msra.mxu0 0
      %2143 = vmatprep.subr.bf16.mxu0 0
      %2144 = vmatpush1.bf16.msra.mxu0 0
      %2145 = vmatprep.subr.bf16.mxu0 0
      %2146 = vmatpush1.bf16.msra.mxu0 0
      %2147 = vmatprep.subr.bf16.mxu0 0
      %2148 = vmatpush1.bf16.msra.mxu0 0
      %2149 = vmatprep.subr.bf16.mxu0 0
      %2150 = vmatpush1.bf16.msra.mxu0 0
      %2151 = vmatprep.subr.bf16.mxu0 0
      %2152 = vmatpush1.bf16.msra.mxu0 0
      %2153 = vmatprep.subr.bf16.mxu0 0
      %2154 = vmatpush1.bf16.msra.mxu0 0
      %2155 = vmatprep.subr.bf16.mxu0 0
      %2156 = vmatpush1.bf16.msra.mxu0 0
      %2157 = vmatprep.mubr.bf16.mxu0 0
      %2158 = vmatmul.mubr.bf16.gmra.mrb[0].mxu0 %v1943
      %v2159 = vpop.f32.mrb[0].mxu0
      %v2160 = vadd.f32 %v2063, %v2159
      %v2161 = vpop.f32.mrb[0].mxu0
      %v2162 = vpop.f32.mrb[0].mxu0
      %v2163 = vadd.f32 %v2066, %v2162
      %v2164 = vpop.f32.mrb[0].mxu0
      %2165 = vmatprep.mubr.bf16.mxu0 0
      %2166 = vmatmul.mubr.bf16.gmra.mrb[0].mxu0 %v1944
      %v2167 = vpop.f32.mrb[0].mxu0
      %v2168 = vadd.f32 %v2071, %v2167
      %v2169 = vpop.f32.mrb[0].mxu0
      %v2170 = vpop.f32.mrb[0].mxu0
      %v2171 = vadd.f32 %v2074, %v2170
      %v2172 = vpop.f32.mrb[0].mxu0
      %2173 = vdwg.mxu0
      %v2174 = vpack.c.bf16 %v1935, %v1933
      %v2175 = vpack.c.bf16 %v1942, %v1937
      %s2176 = scalar_lea.vmem %s11, 128
      %v2177 = vld [vmem:[%s2176] sm:$0xf]
      %v2178 = vld [vmem:[%s2176 + $0x4] sm:$0xf]
      %v2179 = vld [vmem:[%s2176 + $0x8] sm:$0xf]
      %v2180 = vld [vmem:[%s2176 + $0xc] sm:$0xf]
      %v2181 = vld [vmem:[%s2176 + $0x10] sm:$0xf]
      %v2182 = vld [vmem:[%s2176 + $0x14] sm:$0xf]
      %v2183 = vld [vmem:[%s2176 + $0x18] sm:$0xf]
      %v2184 = vld [vmem:[%s2176 + $0x1c] sm:$0xf]
      %v2185 = vld [vmem:[%s2176 + $0x20] sm:$0xf]
      %v2186 = vld [vmem:[%s2176 + $0x24] sm:$0xf]
      %v2187 = vld [vmem:[%s2176 + $0x28] sm:$0xf]
      %v2188 = vld [vmem:[%s2176 + $0x2c] sm:$0xf]
      %v2189 = vld [vmem:[%s2176 + $0x30] sm:$0xf]
      %v2190 = vld [vmem:[%s2176 + $0x34] sm:$0xf]
      %v2191 = vld [vmem:[%s2176 + $0x38] sm:$0xf]
      %v2192 = vld [vmem:[%s2176 + $0x3c] sm:$0xf]
      %v2209 = vunpack.c.l.b16 %v2177
      %v2210 = vunpack.c.l.b16 %v2178
      %v2211 = vunpack.c.l.b16 %v2179
      %v2212 = vunpack.c.l.b16 %v2180
      %v2213 = vunpack.c.l.b16 %v2181
      %v2214 = vunpack.c.l.b16 %v2182
      %v2215 = vunpack.c.l.b16 %v2183
      %v2216 = vunpack.c.l.b16 %v2184
      %v2217 = vunpack.c.l.b16 %v2185
      %v2218 = vunpack.c.l.b16 %v2186
      %v2219 = vunpack.c.l.b16 %v2187
      %v2220 = vunpack.c.l.b16 %v2188
      %v2221 = vunpack.c.l.b16 %v2189
      %v2222 = vunpack.c.l.b16 %v2190
      %v2223 = vunpack.c.l.b16 %v2191
      %v2224 = vunpack.c.l.b16 %v2192
      %v2225 = vpack.c.b16 %v2210, %v2209
      %v2226 = vpack.c.b16 %v2212, %v2211
      %v2227 = vpack.c.b16 %v2214, %v2213
      %v2228 = vpack.c.b16 %v2216, %v2215
      %v2229 = vpack.c.b16 %v2218, %v2217
      %v2230 = vpack.c.b16 %v2220, %v2219
      %v2231 = vpack.c.b16 %v2222, %v2221
      %v2232 = vpack.c.b16 %v2224, %v2223
      %2241 = vmatprep.subr.bf16.mxu0 0
      %2242 = vmatpush1.bf16.msra.mxu0 %v2225
      %2243 = vmatprep.subr.bf16.mxu0 0
      %2244 = vmatpush1.bf16.msra.mxu0 %v2226
      %2245 = vmatprep.subr.bf16.mxu0 0
      %2246 = vmatpush1.bf16.msra.mxu0 %v2227
      %2247 = vmatprep.subr.bf16.mxu0 0
      %2248 = vmatpush1.bf16.msra.mxu0 %v2228
      %2249 = vmatprep.subr.bf16.mxu0 0
      %2250 = vmatpush1.bf16.msra.mxu0 %v2229
      %2251 = vmatprep.subr.bf16.mxu0 0
      %2252 = vmatpush1.bf16.msra.mxu0 %v2230
      %2253 = vmatprep.subr.bf16.mxu0 0
      %2254 = vmatpush1.bf16.msra.mxu0 %v2231
      %2255 = vmatprep.subr.bf16.mxu0 0
      %2256 = vmatpush1.bf16.msra.mxu0 %v2232
      %2257 = vmatprep.subr.bf16.mxu0 0
      %2258 = vmatpush1.bf16.msra.mxu0 0
      %2259 = vmatprep.subr.bf16.mxu0 0
      %2260 = vmatpush1.bf16.msra.mxu0 0
      %2261 = vmatprep.subr.bf16.mxu0 0
      %2262 = vmatpush1.bf16.msra.mxu0 0
      %2263 = vmatprep.subr.bf16.mxu0 0
      %2264 = vmatpush1.bf16.msra.mxu0 0
      %2265 = vmatprep.subr.bf16.mxu0 0
      %2266 = vmatpush1.bf16.msra.mxu0 0
      %2267 = vmatprep.subr.bf16.mxu0 0
      %2268 = vmatpush1.bf16.msra.mxu0 0
      %2269 = vmatprep.subr.bf16.mxu0 0
      %2270 = vmatpush1.bf16.msra.mxu0 0
      %2271 = vmatprep.subr.bf16.mxu0 0
      %2272 = vmatpush1.bf16.msra.mxu0 0
      %2273 = vmatprep.mubr.bf16.mxu0 0
      %2274 = vmatmul.mubr.bf16.gmra.mrb[0].mxu0 %v2174
      %v2275 = vpop.f32.mrb[0].mxu0
      %v2276 = vadd.f32 0.0, %v2275
      %v2277 = vpop.f32.mrb[0].mxu0
      %v2278 = vpop.f32.mrb[0].mxu0
      %v2279 = vadd.f32 0.0, %v2278
      %v2280 = vpop.f32.mrb[0].mxu0
      %2281 = vmatprep.mubr.bf16.mxu0 0
      %2282 = vmatmul.mubr.bf16.gmra.mrb[0].mxu0 %v2175
      %v2283 = vpop.f32.mrb[0].mxu0
      %v2284 = vadd.f32 0.0, %v2283
      %v2285 = vpop.f32.mrb[0].mxu0
      %v2286 = vpop.f32.mrb[0].mxu0
      %v2287 = vadd.f32 0.0, %v2286
      %v2288 = vpop.f32.mrb[0].mxu0
      %2289 = vdwg.mxu0
      %v2290 = vadd.f32 %v2160, %v2276
      %v2291 = vadd.f32 %v2163, %v2279
      %v2292 = vadd.f32 %v2168, %v2284
      %v2293 = vadd.f32 %v2171, %v2287
      %v2294 = vld [vmem:[%s12] sm:$0x1]
      %v2296 = vlaneseq
      %v2297 = vshrl.u32 %v2296, 7
      %v2298 = vsub.s32 0, %v2297
      %v2299 = vrot.slane %v2294, %v2298
      %v2301 = vadd.f32 %v2290, %v2299
      %v2302 = vadd.f32 %v2291, %v2299
      %v2303 = vadd.f32 %v2292, %v2299
      %v2304 = vadd.f32 %v2293, %v2299
      %v2305 = vadd.f32 %v1517, %v2301
      %v2306 = vadd.f32 %v1518, %v2302
      %v2307 = vadd.f32 %v1519, %v2303
      %v2308 = vadd.f32 %v1520, %v2304
      %2309 = vst [vmem:[%s460] sm:$0xff] %v2305
      %2310 = vst [vmem:[%s460 + $0x8] sm:$0xff] %v2306
      %2311 = vst [vmem:[%s460 + $0x10] sm:$0xff] %v2307
      %2312 = vst [vmem:[%s460 + $0x18] sm:$0xff] %v2308
      %p2313 = scmp.lt.s32.totalorder %s24, 1
      %s2314 = scalar_select %p2313, %s24, 1
      %s2315 = smul.addr %s2314, 4
      %s2316 = smul.addr %s2315, 8
      %s2317 = scalar_lea.vmem %s13, %s2316
      // Predicated region
      $region73: #{up_forward.3} parent=71 // pred_check
        %p2318 = pneg %p325
      $region74: #{up_forward.3} parent=71 // pred_check_branch
        %2320 = sbr.rel (%p2318) target = $region76
      $region75: #{up_forward.3} parent=71 // pred_region
        _
      $region76: #{up_forward.3} parent=71 // pred_fallthru
        _
    $region72: #{up_forward.3} parent=5 // pred_fallthru
      _
    %p2321 = scmp.le.s32.totalorder 2, %s19
    // Predicated region
    $region77: #{up_forward.3} parent=5 // pred_check
      %p2322 = pneg %p2321
    $region78: #{up_forward.3} parent=5 // pred_check_branch
      %2324 = sbr.rel (%p2322) target = $region80
    $region79: #{up_forward.3} parent=5 // pred_region
      %s2325 = ssub.s32 %s19, 2
      // Predicated region
      $region81: #{up_forward.3} parent=79 // pred_check
        %p2326 = pneg %p331
      $region82: #{up_forward.3} parent=79 // pred_check_branch
        %2328 = sbr.rel (%p2326) target = $region84
      $region83: #{up_forward.3} parent=79 // pred_region
        %p2329 = scmp.lt.s32.totalorder %s25, 1
        %s2330 = scalar_select %p2329, %s25, 1
        %s2331 = smul.addr %s2330, 4
        %s2332 = smul.addr %s2331, 8
        %s2333 = scalar_lea.vmem %s13, %s2332
      $region84: #{up_forward.3} parent=79 // pred_fallthru
        _
    $region80: #{up_forward.3} parent=5 // pred_fallthru
      _
  $region6: #{up_forward.3} parent=0 // loop_footer
    %s23 = sadd.s32 1, %s19
  $region7: #{up_forward.3} parent=0 // loop_footer_branch
    %18 = sbr.rel target = $region3
  $region8: #{up_forward.3} parent=0 // loop_exit
    _

</llo_original>
